<compile_context>
chip_gen: v6e
topology: v6e:2x2x1
jax: 0.10.0
libtpu: 0.0.40
codegen_flags: <defaults>
</compile_context>

<pallas_src>
import functools
import math

import jax
import jax.numpy as jnp
from jax.experimental import pallas as pl
from jax.experimental.pallas import tpu as pltpu

LN_EPS = 1e-5


def transformer_block_kernel(
    x_ref,          # (block_b * S, E)
    ln1_w_ref,      # (1, E)
    ln1_b_ref,      # (1, E)
    wq_ref,         # (E, E)  pre-transposed so the kernel computes x @ W
    wk_ref,         # (E, E)
    wv_ref,         # (E, E)
    bq_ref,         # (1, E)
    bk_ref,         # (1, E)
    bv_ref,         # (1, E)
    wo_ref,         # (H, Dh, E)  per-head rows of the out-projection
    bo_ref,         # (1, E)
    ln2_w_ref,      # (1, E)
    ln2_b_ref,      # (1, E)
    w1_ref,         # (E, Hm)
    b1_ref,         # (1, Hm)
    w2_ref,         # (Hm, E)
    b2_ref,         # (1, E)
    out_ref,        # (block_b * S, E)
    *,
    seq_len: int,
    num_heads: int,
):
    embed_dim = ln1_w_ref.shape[1]
    head_dim = embed_dim // num_heads
    scale = 1.0 / math.sqrt(head_dim)

    rows = x_ref.shape[0]            # block_b * seq_len
    block_b = rows // seq_len
    cd = wq_ref.dtype                # matmul operand dtype (f32 or bf16)

    x = x_ref[...].astype(jnp.float32)           # (rows, E)

    def layer_norm(y, w_ref, b_ref):
        m = jnp.mean(y, axis=-1, keepdims=True)
        var = jnp.mean((y - m) ** 2, axis=-1, keepdims=True)
        return (y - m) * jax.lax.rsqrt(var + LN_EPS) * w_ref[0] + b_ref[0]

    # ---- LayerNorm 1 (f32) ----
    x2 = layer_norm(x, ln1_w_ref, ln1_b_ref).astype(cd)

    # ---- Multi-head self-attention ----
    # Full-width projections (MXU N = E) instead of per-head N = Dh projections.
    q = jnp.dot(x2, wq_ref[...], preferred_element_type=jnp.float32) + bq_ref[0]
    k = jnp.dot(x2, wk_ref[...], preferred_element_type=jnp.float32) + bk_ref[0]
    v = jnp.dot(x2, wv_ref[...], preferred_element_type=jnp.float32) + bv_ref[0]

    q = (q * scale).astype(cd).reshape(block_b, seq_len, embed_dim)
    k = k.astype(cd).reshape(block_b, seq_len, embed_dim)
    v = v.astype(cd).reshape(block_b, seq_len, embed_dim)

    # Static Python loop == fully unrolled head loop (num_heads is compile-time),
    # letting successive heads' MXU / EUP / XLU work interleave.
    attn = jnp.zeros((rows, embed_dim), jnp.float32)
    for h in range(num_heads):
        lo = h * head_dim
        hi = lo + head_dim
        q_h = q[:, :, lo:hi]                     # static lane slices
        k_h = k[:, :, lo:hi]
        v_h = v[:, :, lo:hi]

        # scores: contract on head_dim directly (no k.T materialization), batched
        # over the folded sequences of this block.
        s = jnp.einsum("bqd,bkd->bqk", q_h, k_h, preferred_element_type=jnp.float32)
        s = s - jnp.max(s, axis=-1, keepdims=True)
        p = jnp.exp(s)
        p = p * pl.reciprocal(jnp.sum(p, axis=-1, keepdims=True), approx=True)

        o = jnp.einsum("bqk,bkd->bqd", p.astype(cd), v_h,
                       preferred_element_type=jnp.float32)
        o = o.reshape(rows, head_dim).astype(cd)

        # concat(o_h) @ Wo  ==  sum_h  o_h @ Wo[h*Dh:(h+1)*Dh, :]
        attn = attn + jnp.dot(o, wo_ref[h], preferred_element_type=jnp.float32)

    attn = attn + bo_ref[0]
    # TODO(synk): attention dropout treated as identity (inference mode).
    x = x + attn                                   # residual 1

    # ---- LayerNorm 2 + MLP ----
    x3 = layer_norm(x, ln2_w_ref, ln2_b_ref).astype(cd)
    h1 = jnp.dot(x3, w1_ref[...], preferred_element_type=jnp.float32) + b1_ref[0]
    # exact-erf GELU matches PyTorch nn.GELU default numerics.
    # TODO(synk): tanh-approx GELU would route through the (idle) EUP slot instead of
    #             a long VPU polynomial, at a small numeric deviation.
    h1 = 0.5 * h1 * (1.0 + jax.lax.erf(h1 * (1.0 / math.sqrt(2.0))))
    h2 = jnp.dot(h1.astype(cd), w2_ref[...], preferred_element_type=jnp.float32) + b2_ref[0]

    out_ref[...] = (x + h2).astype(out_ref.dtype)  # residual 2


# -----------------------------------------------------------------------------
# Wrapper-side helpers
# -----------------------------------------------------------------------------
def prepare_params(params, num_heads, matmul_dtype=jnp.bfloat16):
    """One-time parameter preprocessing (hoisted out of the per-call path).

    Only casts matmul weights to the MXU operand dtype and reshapes Wo per head
    (a pure reshape, no transpose); call this once and reuse the result.
    """
    E = params["wq"].shape[0]
    Dh = E // num_heads
    cast = (lambda w: w.astype(matmul_dtype)) if matmul_dtype is not None else (lambda w: w)
    return {
        "ln1_w": params["ln1_w"], "ln1_b": params["ln1_b"],
        "ln2_w": params["ln2_w"], "ln2_b": params["ln2_b"],
        "wq": cast(params["wq"]), "wk": cast(params["wk"]), "wv": cast(params["wv"]),
        "bq": params["bq"], "bk": params["bk"], "bv": params["bv"],
        "wo": cast(params["wo"]).reshape(num_heads, Dh, E),
        "bo": params["bo"],
        "w1": cast(params["w1"]), "b1": params["b1"],
        "w2": cast(params["w2"]), "b2": params["b2"],
    }


def _pick_block_b(B, S, target_rows=512):
    """Largest divisor of B with block_b*S a multiple of 8, near ~512 rows/step.

    v5e/v6e are single-TC (the grid is a serial loop), so there is no benefit in
    forcing >= 2 grid steps; bigger M tiles feed the MXU better and amortize the
    ~0.35 us/step pipeline overhead.
    TODO(synk): when targeting v7x megacore, prefer >= 2 parallel grid steps.
    """
    cand = max(1, min(B, max(1, target_rows // max(S, 1))))
    divisors = [d for d in range(1, B + 1) if B % d == 0]
    ok = [d for d in divisors if (d * S) % 8 == 0]
    if ok:
        le = [d for d in ok if d <= cand]
        return max(le) if le else min(ok)
    # No divisor keeps the block (8, .)-aligned; a full-array block is the only
    # shape exempt from the (8,128) rule.
    return B


def _normalize_block_b(B, S, block_b):
    if block_b is None:
        return _pick_block_b(B, S)
    block_b = int(max(1, min(block_b, B)))
    while B % block_b:
        block_b -= 1
    if (block_b * S) % 8 != 0 and block_b != B:
        return _pick_block_b(B, S)
    return block_b


def _vmem_limit_bytes(weight_arrays, act_dtype, rows, S, E, hidden_dim, *, weight_bufs):
    f32 = 4
    block_b = rows // S
    w_bytes = sum(int(a.size) * a.dtype.itemsize for a in weight_arrays)
    act_bytes = rows * E * jnp.dtype(act_dtype).itemsize          # one in/out tile
    # f32 temporaries: x, x2, q, k, v, attn, x3, h2 (~8*E per row) + h1 (+ cast copy)
    inter = f32 * rows * (8 * E + 2 * hidden_dim)
    # attention scores: s and p are both live at (block_b, S, S) f32 (per head)
    inter += f32 * 2 * block_b * S * S
    need = weight_bufs * w_bytes + 4 * act_bytes + inter + (4 << 20)
    try:
        cap = int(pltpu.get_tpu_info().vmem_capacity_bytes) - (8 << 20)
    except Exception:                      # pragma: no cover - conservative fallback
        cap = 56 << 20                     # fits every current chip (v7x = 64 MiB/TC)
    return int(max(16 << 20, min(cap, max(32 << 20, need))))


def transformer_block(x, params, *, num_heads, block_b=None,
                      matmul_dtype=jnp.bfloat16, interpret=False):
    """Pallas TPU TransformerBlock forward.

    `params` may be raw (PyTorch-layout, wo is 2-D) or pre-prepared via
    prepare_params() — preparing once outside the jitted step avoids per-call
    weight cast/reshape HBM traffic.
    """
    B, S, E = x.shape
    assert E % num_heads == 0

    if params["wo"].ndim == 2:            # raw params -> prepare on the fly
        params = prepare_params(params, num_heads, matmul_dtype=matmul_dtype)
    p = params
    hidden_dim = p["w1"].shape[1]

    block_b = _normalize_block_b(B, S, block_b)
    rows = block_b * S
    grid = (B // block_b,)

    x2d = x.reshape(B * S, E)
    kernel = functools.partial(transformer_block_kernel,
                               seq_len=S, num_heads=num_heads)

    ordered = (p["ln1_w"], p["ln1_b"],
               p["wq"], p["wk"], p["wv"],
               p["bq"], p["bk"], p["bv"],
               p["wo"], p["bo"],
               p["ln2_w"], p["ln2_b"],
               p["w1"], p["b1"], p["w2"], p["b2"])

    def run(single_buffer_weights):
        wmode = pl.Buffered(1) if single_buffer_weights else None

        def const_spec(a):
            shape = a.shape
            zeros = (0,) * len(shape)
            if wmode is None:
                return pl.BlockSpec(shape, lambda i: zeros)
            # Constant index_map across the grid: double buffering would only
            # double resident weight VMEM with zero overlap benefit.
            return pl.BlockSpec(shape, lambda i: zeros, pipeline_mode=wmode)

        act_spec = pl.BlockSpec((rows, E), lambda i: (i, 0))
        vmem_limit = _vmem_limit_bytes(
            ordered, x.dtype, rows, S, E, hidden_dim,
            weight_bufs=1 if single_buffer_weights else 2)

        return pl.pallas_call(
            kernel,
            out_shape=jax.ShapeDtypeStruct((B * S, E), x.dtype),
            grid=grid,
            in_specs=[act_spec] + [const_spec(a) for a in ordered],
            out_specs=pl.BlockSpec((rows, E), lambda i: (i, 0)),
            compiler_params=pltpu.CompilerParams(
                dimension_semantics=("parallel",),
                vmem_limit_bytes=vmem_limit,
            ),
            interpret=interpret,
        )(x2d, *ordered)

    try:
        out = run(True)
    except Exception:
        # pipeline_mode=pl.Buffered(1) not accepted by this jax build for
        # pallas_call in_specs -> fall back to default double buffering.
        out = run(False)
    return out.reshape(B, S, E)


# -----------------------------------------------------------------------------
# Pure-JAX reference (mirrors the PyTorch forward; dropout = identity)
# -----------------------------------------------------------------------------
def reference_block(x, params, *, num_heads):
    E = x.shape[-1]
    Dh = E // num_heads
    B, S, _ = x.shape

    def ln(y, w, b):
        m = jnp.mean(y, axis=-1, keepdims=True)
        v = jnp.mean((y - m) ** 2, axis=-1, keepdims=True)
        return (y - m) / jnp.sqrt(v + LN_EPS) * w[0] + b[0]

    x2 = ln(x, params["ln1_w"], params["ln1_b"])
    q = x2 @ params["wq"] + params["bq"][0]
    k = x2 @ params["wk"] + params["bk"][0]
    v = x2 @ params["wv"] + params["bv"][0]
    q = q.reshape(B, S, num_heads, Dh).transpose(0, 2, 1, 3) / math.sqrt(Dh)
    k = k.reshape(B, S, num_heads, Dh).transpose(0, 2, 1, 3)
    v = v.reshape(B, S, num_heads, Dh).transpose(0, 2, 1, 3)
    s = jnp.einsum("bhqd,bhkd->bhqk", q, k)
    p = jax.nn.softmax(s, axis=-1)
    a = jnp.einsum("bhqk,bhkd->bhqd", p, v).transpose(0, 2, 1, 3).reshape(B, S, E)
    a = a @ params["wo"] + params["bo"][0]
    x = x + a
    x3 = ln(x, params["ln2_w"], params["ln2_b"])
    h = x3 @ params["w1"] + params["b1"][0]
    h = 0.5 * h * (1.0 + jax.lax.erf(h / math.sqrt(2.0)))
    h = h @ params["w2"] + params["b2"][0]
    return x + h


def init_params(key, embed_dim, num_heads, mlp_ratio=4.0, dtype=jnp.float32):
    hidden_dim = int(embed_dim * mlp_ratio)
    ks = jax.random.split(key, 12)
    s = 0.05
    n = lambda k, shape: s * jax.random.normal(k, shape, dtype)
    return {
        # LayerNorm params (PyTorch default init: weight=1, bias=0)
        "ln1_w": jnp.ones((1, embed_dim), dtype),
        "ln1_b": jnp.zeros((1, embed_dim), dtype),
        "ln2_w": jnp.ones((1, embed_dim), dtype),
        "ln2_b": jnp.zeros((1, embed_dim), dtype),
        # MultiheadAttention in-proj (pre-transposed so the kernel computes x @ W)
        # and out-proj.
        "wq": n(ks[0], (embed_dim, embed_dim)),
        "wk": n(ks[1], (embed_dim, embed_dim)),
        "wv": n(ks[2], (embed_dim, embed_dim)),
        "bq": n(ks[3], (1, embed_dim)),
        "bk": n(ks[4], (1, embed_dim)),
        "bv": n(ks[5], (1, embed_dim)),
        "wo": n(ks[6], (embed_dim, embed_dim)),
        "bo": n(ks[7], (1, embed_dim)),
        # MLP (pre-transposed)
        "w1": n(ks[8], (embed_dim, hidden_dim)),
        "b1": n(ks[9], (1, hidden_dim)),
        "w2": n(ks[10], (hidden_dim, embed_dim)),
        "b2": n(ks[11], (1, embed_dim)),
    }


if __name__ == "__main__":
    B, S, E, H = 2, 8, 32, 4  # batch, seq, embed_dim, num_heads

    key = jax.random.PRNGKey(0)
    kx, kx2, kp = jax.random.split(key, 3)
    x = jax.random.normal(kx, (B, S, E), jnp.float32)
    params = init_params(kp, E, H, mlp_ratio=4.0)
    ref = reference_block(x, params, num_heads=H)

    # One-time parameter preparation (hoisted out of the per-call path).
    prep_f32 = prepare_params(params, H, matmul_dtype=None)
    prep_bf16 = prepare_params(params, H)        # default: bf16 matmul operands

    # f32 path (only deviation from exact math is the approx softmax reciprocal)
    out = jax.block_until_ready(transformer_block(x, prep_f32, num_heads=H))
    assert out.shape == (B, S, E)
    assert jnp.allclose(out, ref, atol=2e-3, rtol=2e-3), "f32 mismatch vs reference"

    # batch-folded multi-step grid: B=4 with block_b=2 -> 2 grid steps of 16 rows
    xb = jax.random.normal(kx2, (4, S, E), jnp.float32)
    refb = reference_block(xb, params, num_heads=H)
    outb = jax.block_until_ready(
        transformer_block(xb, prep_f32, num_heads=H, block_b=2))
    assert jnp.allclose(outb, refb, atol=2e-3, rtol=2e-3), "block_b=2 mismatch"

    # default heuristic folds the whole (small) batch into a single grid step
    outb2 = jax.block_until_ready(transformer_block(xb, prep_f32, num_heads=H))
    assert jnp.allclose(outb2, refb, atol=2e-3, rtol=2e-3), "auto block_b mismatch"

    # default bf16 matmul operands (MXU-peak dtype on v6e/v7x), relaxed tolerance
    outh = jax.block_until_ready(transformer_block(x, prep_bf16, num_heads=H))
    assert jnp.allclose(outh, ref, atol=2e-2, rtol=2e-2), "bf16 mismatch vs reference"

    print("KERNEL_OK")
</pallas_src>

<mosaic_0001>
module attributes {stable_mosaic.version = 11 : i64} {
  func.func @transformer_block_kernel(%arg0: i32, %arg1: memref<16x32xf32, #tpu.memory_space<vmem>>, %arg2: memref<1x32xf32, #tpu.memory_space<vmem>>, %arg3: memref<1x32xf32, #tpu.memory_space<vmem>>, %arg4: memref<32x32xf32, #tpu.memory_space<vmem>>, %arg5: memref<32x32xf32, #tpu.memory_space<vmem>>, %arg6: memref<32x32xf32, #tpu.memory_space<vmem>>, %arg7: memref<1x32xf32, #tpu.memory_space<vmem>>, %arg8: memref<1x32xf32, #tpu.memory_space<vmem>>, %arg9: memref<1x32xf32, #tpu.memory_space<vmem>>, %arg10: memref<4x8x32xf32, #tpu.memory_space<vmem>>, %arg11: memref<1x32xf32, #tpu.memory_space<vmem>>, %arg12: memref<1x32xf32, #tpu.memory_space<vmem>>, %arg13: memref<1x32xf32, #tpu.memory_space<vmem>>, %arg14: memref<32x128xf32, #tpu.memory_space<vmem>>, %arg15: memref<1x128xf32, #tpu.memory_space<vmem>>, %arg16: memref<128x32xf32, #tpu.memory_space<vmem>>, %arg17: memref<1x32xf32, #tpu.memory_space<vmem>>, %arg18: memref<16x32xf32, #tpu.memory_space<vmem>>) attributes {dimension_semantics = [#tpu.dimension_semantics<parallel>], iteration_bounds = array<i64: 1>, scalar_prefetch = 0 : i64, scratch_operands = 0 : i64, tpu.core_type = #tpu.core_type<tc>, window_params = [{transform_indices = @transform_0, window_bounds = array<i64: 16, 32>}, {pipeline_mode = #tpu.pipeline_mode<synchronous>, transform_indices = @transform_1, window_bounds = array<i64: 1, 32>}, {pipeline_mode = #tpu.pipeline_mode<synchronous>, transform_indices = @transform_2, window_bounds = array<i64: 1, 32>}, {pipeline_mode = #tpu.pipeline_mode<synchronous>, transform_indices = @transform_3, window_bounds = array<i64: 32, 32>}, {pipeline_mode = #tpu.pipeline_mode<synchronous>, transform_indices = @transform_4, window_bounds = array<i64: 32, 32>}, {pipeline_mode = #tpu.pipeline_mode<synchronous>, transform_indices = @transform_5, window_bounds = array<i64: 32, 32>}, {pipeline_mode = #tpu.pipeline_mode<synchronous>, transform_indices = @transform_6, window_bounds = array<i64: 1, 32>}, {pipeline_mode = #tpu.pipeline_mode<synchronous>, transform_indices = @transform_7, window_bounds = array<i64: 1, 32>}, {pipeline_mode = #tpu.pipeline_mode<synchronous>, transform_indices = @transform_8, window_bounds = array<i64: 1, 32>}, {pipeline_mode = #tpu.pipeline_mode<synchronous>, transform_indices = @transform_9, window_bounds = array<i64: 4, 8, 32>}, {pipeline_mode = #tpu.pipeline_mode<synchronous>, transform_indices = @transform_10, window_bounds = array<i64: 1, 32>}, {pipeline_mode = #tpu.pipeline_mode<synchronous>, transform_indices = @transform_11, window_bounds = array<i64: 1, 32>}, {pipeline_mode = #tpu.pipeline_mode<synchronous>, transform_indices = @transform_12, window_bounds = array<i64: 1, 32>}, {pipeline_mode = #tpu.pipeline_mode<synchronous>, transform_indices = @transform_13, window_bounds = array<i64: 32, 128>}, {pipeline_mode = #tpu.pipeline_mode<synchronous>, transform_indices = @transform_14, window_bounds = array<i64: 1, 128>}, {pipeline_mode = #tpu.pipeline_mode<synchronous>, transform_indices = @transform_15, window_bounds = array<i64: 128, 32>}, {pipeline_mode = #tpu.pipeline_mode<synchronous>, transform_indices = @transform_16, window_bounds = array<i64: 1, 32>}, {transform_indices = @transform_17, window_bounds = array<i64: 16, 32>}]} {
    %c0 = arith.constant 0 : index
    %c0_0 = arith.constant 0 : index
    %0 = vector.load %arg1[%c0, %c0_0] : memref<16x32xf32, #tpu.memory_space<vmem>>, vector<16x32xf32>
    %cst = arith.constant dense<0.000000e+00> : vector<16xf32>
    %1 = vector.multi_reduction <add>, %0, %cst [1] : vector<16x32xf32> to vector<16xf32>
    %2 = vector.shape_cast %1 : vector<16xf32> to vector<16x1xf32>
    %cst_1 = arith.constant 3.200000e+01 : f32
    %3 = vector.broadcast %cst_1 : f32 to vector<16x1xf32>
    %4 = arith.divf %2, %3 : vector<16x1xf32>
    %5 = vector.broadcast %4 : vector<16x1xf32> to vector<16x32xf32>
    %6 = arith.subf %0, %5 : vector<16x32xf32>
    %7 = arith.mulf %6, %6 : vector<16x32xf32>
    %cst_2 = arith.constant dense<0.000000e+00> : vector<16xf32>
    %8 = vector.multi_reduction <add>, %7, %cst_2 [1] : vector<16x32xf32> to vector<16xf32>
    %9 = vector.shape_cast %8 : vector<16xf32> to vector<16x1xf32>
    %cst_3 = arith.constant 3.200000e+01 : f32
    %10 = vector.broadcast %cst_3 : f32 to vector<16x1xf32>
    %11 = arith.divf %9, %10 : vector<16x1xf32>
    %12 = vector.broadcast %4 : vector<16x1xf32> to vector<16x32xf32>
    %13 = arith.subf %0, %12 : vector<16x32xf32>
    %cst_4 = arith.constant 9.99999974E-6 : f32
    %14 = vector.broadcast %cst_4 : f32 to vector<16x1xf32>
    %15 = arith.addf %11, %14 : vector<16x1xf32>
    %16 = math.rsqrt %15 : vector<16x1xf32>
    %17 = vector.broadcast %16 : vector<16x1xf32> to vector<16x32xf32>
    %18 = arith.mulf %13, %17 : vector<16x32xf32>
    %c0_5 = arith.constant 0 : index
    %c0_6 = arith.constant 0 : index
    %19 = vector.load %arg2[%c0_5, %c0_6] : memref<1x32xf32, #tpu.memory_space<vmem>>, vector<1x32xf32>
    %20 = vector.shape_cast %19 : vector<1x32xf32> to vector<32xf32>
    %21 = vector.shape_cast %20 : vector<32xf32> to vector<1x32xf32>
    %22 = vector.broadcast %21 : vector<1x32xf32> to vector<16x32xf32>
    %23 = arith.mulf %18, %22 : vector<16x32xf32>
    %c0_7 = arith.constant 0 : index
    %c0_8 = arith.constant 0 : index
    %24 = vector.load %arg3[%c0_7, %c0_8] : memref<1x32xf32, #tpu.memory_space<vmem>>, vector<1x32xf32>
    %25 = vector.shape_cast %24 : vector<1x32xf32> to vector<32xf32>
    %26 = vector.shape_cast %25 : vector<32xf32> to vector<1x32xf32>
    %27 = vector.broadcast %26 : vector<1x32xf32> to vector<16x32xf32>
    %28 = arith.addf %23, %27 : vector<16x32xf32>
    %c0_9 = arith.constant 0 : index
    %c0_10 = arith.constant 0 : index
    %29 = vector.load %arg4[%c0_9, %c0_10] : memref<32x32xf32, #tpu.memory_space<vmem>>, vector<32x32xf32>
    %cst_11 = arith.constant dense<0.000000e+00> : vector<16x32xf32>
    %30 = tpu.matmul %28, %29, %cst_11 {dimension_numbers = #tpu.dot_dimension_numbers<[1], [0], [0], [1], [0, 0, 1, 1], [], []>} : vector<16x32xf32>, vector<32x32xf32>, vector<16x32xf32> -> vector<16x32xf32>
    %c0_12 = arith.constant 0 : index
    %c0_13 = arith.constant 0 : index
    %31 = vector.load %arg7[%c0_12, %c0_13] : memref<1x32xf32, #tpu.memory_space<vmem>>, vector<1x32xf32>
    %32 = vector.shape_cast %31 : vector<1x32xf32> to vector<32xf32>
    %33 = vector.shape_cast %32 : vector<32xf32> to vector<1x32xf32>
    %34 = vector.broadcast %33 : vector<1x32xf32> to vector<16x32xf32>
    %35 = arith.addf %30, %34 : vector<16x32xf32>
    %c0_14 = arith.constant 0 : index
    %c0_15 = arith.constant 0 : index
    %36 = vector.load %arg5[%c0_14, %c0_15] : memref<32x32xf32, #tpu.memory_space<vmem>>, vector<32x32xf32>
    %cst_16 = arith.constant dense<0.000000e+00> : vector<16x32xf32>
    %37 = tpu.matmul %28, %36, %cst_16 {dimension_numbers = #tpu.dot_dimension_numbers<[1], [0], [0], [1], [0, 0, 1, 1], [], []>} : vector<16x32xf32>, vector<32x32xf32>, vector<16x32xf32> -> vector<16x32xf32>
    %c0_17 = arith.constant 0 : index
    %c0_18 = arith.constant 0 : index
    %38 = vector.load %arg8[%c0_17, %c0_18] : memref<1x32xf32, #tpu.memory_space<vmem>>, vector<1x32xf32>
    %39 = vector.shape_cast %38 : vector<1x32xf32> to vector<32xf32>
    %40 = vector.shape_cast %39 : vector<32xf32> to vector<1x32xf32>
    %41 = vector.broadcast %40 : vector<1x32xf32> to vector<16x32xf32>
    %42 = arith.addf %37, %41 : vector<16x32xf32>
    %c0_19 = arith.constant 0 : index
    %c0_20 = arith.constant 0 : index
    %43 = vector.load %arg6[%c0_19, %c0_20] : memref<32x32xf32, #tpu.memory_space<vmem>>, vector<32x32xf32>
    %cst_21 = arith.constant dense<0.000000e+00> : vector<16x32xf32>
    %44 = tpu.matmul %28, %43, %cst_21 {dimension_numbers = #tpu.dot_dimension_numbers<[1], [0], [0], [1], [0, 0, 1, 1], [], []>} : vector<16x32xf32>, vector<32x32xf32>, vector<16x32xf32> -> vector<16x32xf32>
    %c0_22 = arith.constant 0 : index
    %c0_23 = arith.constant 0 : index
    %45 = vector.load %arg9[%c0_22, %c0_23] : memref<1x32xf32, #tpu.memory_space<vmem>>, vector<1x32xf32>
    %46 = vector.shape_cast %45 : vector<1x32xf32> to vector<32xf32>
    %47 = vector.shape_cast %46 : vector<32xf32> to vector<1x32xf32>
    %48 = vector.broadcast %47 : vector<1x32xf32> to vector<16x32xf32>
    %49 = arith.addf %44, %48 : vector<16x32xf32>
    %cst_24 = arith.constant 0.353553385 : f32
    %50 = vector.broadcast %cst_24 : f32 to vector<16x32xf32>
    %51 = arith.mulf %35, %50 : vector<16x32xf32>
    %52 = vector.shape_cast %51 : vector<16x32xf32> to vector<2x8x32xf32>
    %53 = vector.shape_cast %42 : vector<16x32xf32> to vector<2x8x32xf32>
    %54 = vector.shape_cast %49 : vector<16x32xf32> to vector<2x8x32xf32>
    %cst_25 = arith.constant 0.000000e+00 : f32
    %55 = vector.broadcast %cst_25 : f32 to vector<16x32xf32>
    %56 = vector.extract_strided_slice %52 {offsets = [0, 0, 0], sizes = [2, 8, 8], strides = [1, 1, 1]} : vector<2x8x32xf32> to vector<2x8x8xf32>
    %57 = vector.extract_strided_slice %53 {offsets = [0, 0, 0], sizes = [2, 8, 8], strides = [1, 1, 1]} : vector<2x8x32xf32> to vector<2x8x8xf32>
    %58 = vector.extract_strided_slice %54 {offsets = [0, 0, 0], sizes = [2, 8, 8], strides = [1, 1, 1]} : vector<2x8x32xf32> to vector<2x8x8xf32>
    "tpu.trace_start"() <{level = 10 : i32, message = "bqd,bkd->bqk"}> : () -> ()
    %cst_26 = arith.constant dense<0.000000e+00> : vector<2x8x8xf32>
    %59 = tpu.matmul %56, %57, %cst_26 {dimension_numbers = #tpu.dot_dimension_numbers<[2], [2], [1], [1], [0, 0, 0, 1, 1, 1], [0], [0]>} : vector<2x8x8xf32>, vector<2x8x8xf32>, vector<2x8x8xf32> -> vector<2x8x8xf32>
    "tpu.trace_stop"() : () -> ()
    %cst_27 = arith.constant dense<0xFF800000> : vector<2x8xf32>
    %60 = vector.multi_reduction <maximumf>, %59, %cst_27 [2] : vector<2x8x8xf32> to vector<2x8xf32>
    %61 = vector.shape_cast %60 : vector<2x8xf32> to vector<2x8x1xf32>
    %62 = vector.broadcast %61 : vector<2x8x1xf32> to vector<2x8x8xf32>
    %63 = arith.subf %59, %62 : vector<2x8x8xf32>
    %64 = math.exp %63 : vector<2x8x8xf32>
    %cst_28 = arith.constant dense<0.000000e+00> : vector<2x8xf32>
    %65 = vector.multi_reduction <add>, %64, %cst_28 [2] : vector<2x8x8xf32> to vector<2x8xf32>
    %66 = vector.shape_cast %65 : vector<2x8xf32> to vector<2x8x1xf32>
    %67 = tpu.reciprocal %66 {approx = true} : vector<2x8x1xf32> -> vector<2x8x1xf32>
    %68 = vector.broadcast %67 : vector<2x8x1xf32> to vector<2x8x8xf32>
    %69 = arith.mulf %64, %68 : vector<2x8x8xf32>
    "tpu.trace_start"() <{level = 10 : i32, message = "bqk,bkd->bqd"}> : () -> ()
    %cst_29 = arith.constant dense<0.000000e+00> : vector<2x8x8xf32>
    %70 = tpu.matmul %69, %58, %cst_29 {dimension_numbers = #tpu.dot_dimension_numbers<[2], [1], [1], [2], [0, 0, 0, 1, 1, 2], [0], [0]>} : vector<2x8x8xf32>, vector<2x8x8xf32>, vector<2x8x8xf32> -> vector<2x8x8xf32>
    "tpu.trace_stop"() : () -> ()
    %71 = vector.shape_cast %70 : vector<2x8x8xf32> to vector<16x8xf32>
    %c0_30 = arith.constant 0 : index
    %c0_31 = arith.constant 0 : index
    %c0_32 = arith.constant 0 : index
    %72 = vector.load %arg10[%c0_30, %c0_31, %c0_32] : memref<4x8x32xf32, #tpu.memory_space<vmem>>, vector<1x8x32xf32>
    %73 = vector.shape_cast %72 : vector<1x8x32xf32> to vector<8x32xf32>
    %cst_33 = arith.constant dense<0.000000e+00> : vector<16x32xf32>
    %74 = tpu.matmul %71, %73, %cst_33 {dimension_numbers = #tpu.dot_dimension_numbers<[1], [0], [0], [1], [0, 0, 1, 1], [], []>} : vector<16x8xf32>, vector<8x32xf32>, vector<16x32xf32> -> vector<16x32xf32>
    %75 = arith.addf %55, %74 : vector<16x32xf32>
    %76 = vector.extract_strided_slice %52 {offsets = [0, 0, 8], sizes = [2, 8, 8], strides = [1, 1, 1]} : vector<2x8x32xf32> to vector<2x8x8xf32>
    %77 = vector.extract_strided_slice %53 {offsets = [0, 0, 8], sizes = [2, 8, 8], strides = [1, 1, 1]} : vector<2x8x32xf32> to vector<2x8x8xf32>
    %78 = vector.extract_strided_slice %54 {offsets = [0, 0, 8], sizes = [2, 8, 8], strides = [1, 1, 1]} : vector<2x8x32xf32> to vector<2x8x8xf32>
    "tpu.trace_start"() <{level = 10 : i32, message = "bqd,bkd->bqk"}> : () -> ()
    %cst_34 = arith.constant dense<0.000000e+00> : vector<2x8x8xf32>
    %79 = tpu.matmul %76, %77, %cst_34 {dimension_numbers = #tpu.dot_dimension_numbers<[2], [2], [1], [1], [0, 0, 0, 1, 1, 1], [0], [0]>} : vector<2x8x8xf32>, vector<2x8x8xf32>, vector<2x8x8xf32> -> vector<2x8x8xf32>
    "tpu.trace_stop"() : () -> ()
    %cst_35 = arith.constant dense<0xFF800000> : vector<2x8xf32>
    %80 = vector.multi_reduction <maximumf>, %79, %cst_35 [2] : vector<2x8x8xf32> to vector<2x8xf32>
    %81 = vector.shape_cast %80 : vector<2x8xf32> to vector<2x8x1xf32>
    %82 = vector.broadcast %81 : vector<2x8x1xf32> to vector<2x8x8xf32>
    %83 = arith.subf %79, %82 : vector<2x8x8xf32>
    %84 = math.exp %83 : vector<2x8x8xf32>
    %cst_36 = arith.constant dense<0.000000e+00> : vector<2x8xf32>
    %85 = vector.multi_reduction <add>, %84, %cst_36 [2] : vector<2x8x8xf32> to vector<2x8xf32>
    %86 = vector.shape_cast %85 : vector<2x8xf32> to vector<2x8x1xf32>
    %87 = tpu.reciprocal %86 {approx = true} : vector<2x8x1xf32> -> vector<2x8x1xf32>
    %88 = vector.broadcast %87 : vector<2x8x1xf32> to vector<2x8x8xf32>
    %89 = arith.mulf %84, %88 : vector<2x8x8xf32>
    "tpu.trace_start"() <{level = 10 : i32, message = "bqk,bkd->bqd"}> : () -> ()
    %cst_37 = arith.constant dense<0.000000e+00> : vector<2x8x8xf32>
    %90 = tpu.matmul %89, %78, %cst_37 {dimension_numbers = #tpu.dot_dimension_numbers<[2], [1], [1], [2], [0, 0, 0, 1, 1, 2], [0], [0]>} : vector<2x8x8xf32>, vector<2x8x8xf32>, vector<2x8x8xf32> -> vector<2x8x8xf32>
    "tpu.trace_stop"() : () -> ()
    %91 = vector.shape_cast %90 : vector<2x8x8xf32> to vector<16x8xf32>
    %c1 = arith.constant 1 : index
    %c0_38 = arith.constant 0 : index
    %c0_39 = arith.constant 0 : index
    %92 = vector.load %arg10[%c1, %c0_38, %c0_39] : memref<4x8x32xf32, #tpu.memory_space<vmem>>, vector<1x8x32xf32>
    %93 = vector.shape_cast %92 : vector<1x8x32xf32> to vector<8x32xf32>
    %cst_40 = arith.constant dense<0.000000e+00> : vector<16x32xf32>
    %94 = tpu.matmul %91, %93, %cst_40 {dimension_numbers = #tpu.dot_dimension_numbers<[1], [0], [0], [1], [0, 0, 1, 1], [], []>} : vector<16x8xf32>, vector<8x32xf32>, vector<16x32xf32> -> vector<16x32xf32>
    %95 = arith.addf %75, %94 : vector<16x32xf32>
    %96 = vector.extract_strided_slice %52 {offsets = [0, 0, 16], sizes = [2, 8, 8], strides = [1, 1, 1]} : vector<2x8x32xf32> to vector<2x8x8xf32>
    %97 = vector.extract_strided_slice %53 {offsets = [0, 0, 16], sizes = [2, 8, 8], strides = [1, 1, 1]} : vector<2x8x32xf32> to vector<2x8x8xf32>
    %98 = vector.extract_strided_slice %54 {offsets = [0, 0, 16], sizes = [2, 8, 8], strides = [1, 1, 1]} : vector<2x8x32xf32> to vector<2x8x8xf32>
    "tpu.trace_start"() <{level = 10 : i32, message = "bqd,bkd->bqk"}> : () -> ()
    %cst_41 = arith.constant dense<0.000000e+00> : vector<2x8x8xf32>
    %99 = tpu.matmul %96, %97, %cst_41 {dimension_numbers = #tpu.dot_dimension_numbers<[2], [2], [1], [1], [0, 0, 0, 1, 1, 1], [0], [0]>} : vector<2x8x8xf32>, vector<2x8x8xf32>, vector<2x8x8xf32> -> vector<2x8x8xf32>
    "tpu.trace_stop"() : () -> ()
    %cst_42 = arith.constant dense<0xFF800000> : vector<2x8xf32>
    %100 = vector.multi_reduction <maximumf>, %99, %cst_42 [2] : vector<2x8x8xf32> to vector<2x8xf32>
    %101 = vector.shape_cast %100 : vector<2x8xf32> to vector<2x8x1xf32>
    %102 = vector.broadcast %101 : vector<2x8x1xf32> to vector<2x8x8xf32>
    %103 = arith.subf %99, %102 : vector<2x8x8xf32>
    %104 = math.exp %103 : vector<2x8x8xf32>
    %cst_43 = arith.constant dense<0.000000e+00> : vector<2x8xf32>
    %105 = vector.multi_reduction <add>, %104, %cst_43 [2] : vector<2x8x8xf32> to vector<2x8xf32>
    %106 = vector.shape_cast %105 : vector<2x8xf32> to vector<2x8x1xf32>
    %107 = tpu.reciprocal %106 {approx = true} : vector<2x8x1xf32> -> vector<2x8x1xf32>
    %108 = vector.broadcast %107 : vector<2x8x1xf32> to vector<2x8x8xf32>
    %109 = arith.mulf %104, %108 : vector<2x8x8xf32>
    "tpu.trace_start"() <{level = 10 : i32, message = "bqk,bkd->bqd"}> : () -> ()
    %cst_44 = arith.constant dense<0.000000e+00> : vector<2x8x8xf32>
    %110 = tpu.matmul %109, %98, %cst_44 {dimension_numbers = #tpu.dot_dimension_numbers<[2], [1], [1], [2], [0, 0, 0, 1, 1, 2], [0], [0]>} : vector<2x8x8xf32>, vector<2x8x8xf32>, vector<2x8x8xf32> -> vector<2x8x8xf32>
    "tpu.trace_stop"() : () -> ()
    %111 = vector.shape_cast %110 : vector<2x8x8xf32> to vector<16x8xf32>
    %c2 = arith.constant 2 : index
    %c0_45 = arith.constant 0 : index
    %c0_46 = arith.constant 0 : index
    %112 = vector.load %arg10[%c2, %c0_45, %c0_46] : memref<4x8x32xf32, #tpu.memory_space<vmem>>, vector<1x8x32xf32>
    %113 = vector.shape_cast %112 : vector<1x8x32xf32> to vector<8x32xf32>
    %cst_47 = arith.constant dense<0.000000e+00> : vector<16x32xf32>
    %114 = tpu.matmul %111, %113, %cst_47 {dimension_numbers = #tpu.dot_dimension_numbers<[1], [0], [0], [1], [0, 0, 1, 1], [], []>} : vector<16x8xf32>, vector<8x32xf32>, vector<16x32xf32> -> vector<16x32xf32>
    %115 = arith.addf %95, %114 : vector<16x32xf32>
    %116 = vector.extract_strided_slice %52 {offsets = [0, 0, 24], sizes = [2, 8, 8], strides = [1, 1, 1]} : vector<2x8x32xf32> to vector<2x8x8xf32>
    %117 = vector.extract_strided_slice %53 {offsets = [0, 0, 24], sizes = [2, 8, 8], strides = [1, 1, 1]} : vector<2x8x32xf32> to vector<2x8x8xf32>
    %118 = vector.extract_strided_slice %54 {offsets = [0, 0, 24], sizes = [2, 8, 8], strides = [1, 1, 1]} : vector<2x8x32xf32> to vector<2x8x8xf32>
    "tpu.trace_start"() <{level = 10 : i32, message = "bqd,bkd->bqk"}> : () -> ()
    %cst_48 = arith.constant dense<0.000000e+00> : vector<2x8x8xf32>
    %119 = tpu.matmul %116, %117, %cst_48 {dimension_numbers = #tpu.dot_dimension_numbers<[2], [2], [1], [1], [0, 0, 0, 1, 1, 1], [0], [0]>} : vector<2x8x8xf32>, vector<2x8x8xf32>, vector<2x8x8xf32> -> vector<2x8x8xf32>
    "tpu.trace_stop"() : () -> ()
    %cst_49 = arith.constant dense<0xFF800000> : vector<2x8xf32>
    %120 = vector.multi_reduction <maximumf>, %119, %cst_49 [2] : vector<2x8x8xf32> to vector<2x8xf32>
    %121 = vector.shape_cast %120 : vector<2x8xf32> to vector<2x8x1xf32>
    %122 = vector.broadcast %121 : vector<2x8x1xf32> to vector<2x8x8xf32>
    %123 = arith.subf %119, %122 : vector<2x8x8xf32>
    %124 = math.exp %123 : vector<2x8x8xf32>
    %cst_50 = arith.constant dense<0.000000e+00> : vector<2x8xf32>
    %125 = vector.multi_reduction <add>, %124, %cst_50 [2] : vector<2x8x8xf32> to vector<2x8xf32>
    %126 = vector.shape_cast %125 : vector<2x8xf32> to vector<2x8x1xf32>
    %127 = tpu.reciprocal %126 {approx = true} : vector<2x8x1xf32> -> vector<2x8x1xf32>
    %128 = vector.broadcast %127 : vector<2x8x1xf32> to vector<2x8x8xf32>
    %129 = arith.mulf %124, %128 : vector<2x8x8xf32>
    "tpu.trace_start"() <{level = 10 : i32, message = "bqk,bkd->bqd"}> : () -> ()
    %cst_51 = arith.constant dense<0.000000e+00> : vector<2x8x8xf32>
    %130 = tpu.matmul %129, %118, %cst_51 {dimension_numbers = #tpu.dot_dimension_numbers<[2], [1], [1], [2], [0, 0, 0, 1, 1, 2], [0], [0]>} : vector<2x8x8xf32>, vector<2x8x8xf32>, vector<2x8x8xf32> -> vector<2x8x8xf32>
    "tpu.trace_stop"() : () -> ()
    %131 = vector.shape_cast %130 : vector<2x8x8xf32> to vector<16x8xf32>
    %c3 = arith.constant 3 : index
    %c0_52 = arith.constant 0 : index
    %c0_53 = arith.constant 0 : index
    %132 = vector.load %arg10[%c3, %c0_52, %c0_53] : memref<4x8x32xf32, #tpu.memory_space<vmem>>, vector<1x8x32xf32>
    %133 = vector.shape_cast %132 : vector<1x8x32xf32> to vector<8x32xf32>
    %cst_54 = arith.constant dense<0.000000e+00> : vector<16x32xf32>
    %134 = tpu.matmul %131, %133, %cst_54 {dimension_numbers = #tpu.dot_dimension_numbers<[1], [0], [0], [1], [0, 0, 1, 1], [], []>} : vector<16x8xf32>, vector<8x32xf32>, vector<16x32xf32> -> vector<16x32xf32>
    %135 = arith.addf %115, %134 : vector<16x32xf32>
    %c0_55 = arith.constant 0 : index
    %c0_56 = arith.constant 0 : index
    %136 = vector.load %arg11[%c0_55, %c0_56] : memref<1x32xf32, #tpu.memory_space<vmem>>, vector<1x32xf32>
    %137 = vector.shape_cast %136 : vector<1x32xf32> to vector<32xf32>
    %138 = vector.shape_cast %137 : vector<32xf32> to vector<1x32xf32>
    %139 = vector.broadcast %138 : vector<1x32xf32> to vector<16x32xf32>
    %140 = arith.addf %135, %139 : vector<16x32xf32>
    %141 = arith.addf %0, %140 : vector<16x32xf32>
    %cst_57 = arith.constant dense<0.000000e+00> : vector<16xf32>
    %142 = vector.multi_reduction <add>, %141, %cst_57 [1] : vector<16x32xf32> to vector<16xf32>
    %143 = vector.shape_cast %142 : vector<16xf32> to vector<16x1xf32>
    %cst_58 = arith.constant 3.200000e+01 : f32
    %144 = vector.broadcast %cst_58 : f32 to vector<16x1xf32>
    %145 = arith.divf %143, %144 : vector<16x1xf32>
    %146 = vector.broadcast %145 : vector<16x1xf32> to vector<16x32xf32>
    %147 = arith.subf %141, %146 : vector<16x32xf32>
    %148 = arith.mulf %147, %147 : vector<16x32xf32>
    %cst_59 = arith.constant dense<0.000000e+00> : vector<16xf32>
    %149 = vector.multi_reduction <add>, %148, %cst_59 [1] : vector<16x32xf32> to vector<16xf32>
    %150 = vector.shape_cast %149 : vector<16xf32> to vector<16x1xf32>
    %cst_60 = arith.constant 3.200000e+01 : f32
    %151 = vector.broadcast %cst_60 : f32 to vector<16x1xf32>
    %152 = arith.divf %150, %151 : vector<16x1xf32>
    %153 = vector.broadcast %145 : vector<16x1xf32> to vector<16x32xf32>
    %154 = arith.subf %141, %153 : vector<16x32xf32>
    %cst_61 = arith.constant 9.99999974E-6 : f32
    %155 = vector.broadcast %cst_61 : f32 to vector<16x1xf32>
    %156 = arith.addf %152, %155 : vector<16x1xf32>
    %157 = math.rsqrt %156 : vector<16x1xf32>
    %158 = vector.broadcast %157 : vector<16x1xf32> to vector<16x32xf32>
    %159 = arith.mulf %154, %158 : vector<16x32xf32>
    %c0_62 = arith.constant 0 : index
    %c0_63 = arith.constant 0 : index
    %160 = vector.load %arg12[%c0_62, %c0_63] : memref<1x32xf32, #tpu.memory_space<vmem>>, vector<1x32xf32>
    %161 = vector.shape_cast %160 : vector<1x32xf32> to vector<32xf32>
    %162 = vector.shape_cast %161 : vector<32xf32> to vector<1x32xf32>
    %163 = vector.broadcast %162 : vector<1x32xf32> to vector<16x32xf32>
    %164 = arith.mulf %159, %163 : vector<16x32xf32>
    %c0_64 = arith.constant 0 : index
    %c0_65 = arith.constant 0 : index
    %165 = vector.load %arg13[%c0_64, %c0_65] : memref<1x32xf32, #tpu.memory_space<vmem>>, vector<1x32xf32>
    %166 = vector.shape_cast %165 : vector<1x32xf32> to vector<32xf32>
    %167 = vector.shape_cast %166 : vector<32xf32> to vector<1x32xf32>
    %168 = vector.broadcast %167 : vector<1x32xf32> to vector<16x32xf32>
    %169 = arith.addf %164, %168 : vector<16x32xf32>
    %c0_66 = arith.constant 0 : index
    %c0_67 = arith.constant 0 : index
    %170 = vector.load %arg14[%c0_66, %c0_67] : memref<32x128xf32, #tpu.memory_space<vmem>>, vector<32x128xf32>
    %cst_68 = arith.constant dense<0.000000e+00> : vector<16x128xf32>
    %171 = tpu.matmul %169, %170, %cst_68 {dimension_numbers = #tpu.dot_dimension_numbers<[1], [0], [0], [1], [0, 0, 1, 1], [], []>} : vector<16x32xf32>, vector<32x128xf32>, vector<16x128xf32> -> vector<16x128xf32>
    %c0_69 = arith.constant 0 : index
    %c0_70 = arith.constant 0 : index
    %172 = vector.load %arg15[%c0_69, %c0_70] : memref<1x128xf32, #tpu.memory_space<vmem>>, vector<1x128xf32>
    %173 = vector.shape_cast %172 : vector<1x128xf32> to vector<128xf32>
    %174 = vector.shape_cast %173 : vector<128xf32> to vector<1x128xf32>
    %175 = vector.broadcast %174 : vector<1x128xf32> to vector<16x128xf32>
    %176 = arith.addf %171, %175 : vector<16x128xf32>
    %cst_71 = arith.constant 5.000000e-01 : f32
    %177 = vector.broadcast %cst_71 : f32 to vector<16x128xf32>
    %178 = arith.mulf %177, %176 : vector<16x128xf32>
    %cst_72 = arith.constant 0.707106769 : f32
    %179 = vector.broadcast %cst_72 : f32 to vector<16x128xf32>
    %180 = arith.mulf %176, %179 : vector<16x128xf32>
    %181 = math.erf %180 : vector<16x128xf32>
    %cst_73 = arith.constant 1.000000e+00 : f32
    %182 = vector.broadcast %cst_73 : f32 to vector<16x128xf32>
    %183 = arith.addf %182, %181 : vector<16x128xf32>
    %184 = arith.mulf %178, %183 : vector<16x128xf32>
    %c0_74 = arith.constant 0 : index
    %c0_75 = arith.constant 0 : index
    %185 = vector.load %arg16[%c0_74, %c0_75] : memref<128x32xf32, #tpu.memory_space<vmem>>, vector<128x32xf32>
    %cst_76 = arith.constant dense<0.000000e+00> : vector<16x32xf32>
    %186 = tpu.matmul %184, %185, %cst_76 {dimension_numbers = #tpu.dot_dimension_numbers<[1], [0], [0], [1], [0, 0, 1, 1], [], []>} : vector<16x128xf32>, vector<128x32xf32>, vector<16x32xf32> -> vector<16x32xf32>
    %c0_77 = arith.constant 0 : index
    %c0_78 = arith.constant 0 : index
    %187 = vector.load %arg17[%c0_77, %c0_78] : memref<1x32xf32, #tpu.memory_space<vmem>>, vector<1x32xf32>
    %188 = vector.shape_cast %187 : vector<1x32xf32> to vector<32xf32>
    %189 = vector.shape_cast %188 : vector<32xf32> to vector<1x32xf32>
    %190 = vector.broadcast %189 : vector<1x32xf32> to vector<16x32xf32>
    %191 = arith.addf %186, %190 : vector<16x32xf32>
    %192 = arith.addf %141, %191 : vector<16x32xf32>
    %c0_79 = arith.constant 0 : index
    %c0_80 = arith.constant 0 : index
    %193 = vector.load %arg18[%c0_79, %c0_80] : memref<16x32xf32, #tpu.memory_space<vmem>>, vector<16x32xf32>
    tpu.vector_store %arg18[%c0_79, %c0_80], %192 {strides = array<i32>} : memref<16x32xf32, #tpu.memory_space<vmem>>, vector<16x32xf32>,
    return
  }
  func.func @transform_0(%arg0: i32) -> (i32, i32) {
    %c0_i32 = arith.constant 0 : i32
    %c0_i32_0 = arith.constant 0 : i32
    return %arg0, %c0_i32 : i32, i32
  }
  func.func @transform_1(%arg0: i32) -> (i32, i32) {
    %c0_i32 = arith.constant 0 : i32
    %c0_i32_0 = arith.constant 0 : i32
    %c0_i32_1 = arith.constant 0 : i32
    return %c0_i32, %c0_i32_0 : i32, i32
  }
  func.func @transform_2(%arg0: i32) -> (i32, i32) {
    %c0_i32 = arith.constant 0 : i32
    %c0_i32_0 = arith.constant 0 : i32
    %c0_i32_1 = arith.constant 0 : i32
    return %c0_i32, %c0_i32_0 : i32, i32
  }
  func.func @transform_3(%arg0: i32) -> (i32, i32) {
    %c0_i32 = arith.constant 0 : i32
    %c0_i32_0 = arith.constant 0 : i32
    %c0_i32_1 = arith.constant 0 : i32
    return %c0_i32, %c0_i32_0 : i32, i32
  }
  func.func @transform_4(%arg0: i32) -> (i32, i32) {
    %c0_i32 = arith.constant 0 : i32
    %c0_i32_0 = arith.constant 0 : i32
    %c0_i32_1 = arith.constant 0 : i32
    return %c0_i32, %c0_i32_0 : i32, i32
  }
  func.func @transform_5(%arg0: i32) -> (i32, i32) {
    %c0_i32 = arith.constant 0 : i32
    %c0_i32_0 = arith.constant 0 : i32
    %c0_i32_1 = arith.constant 0 : i32
    return %c0_i32, %c0_i32_0 : i32, i32
  }
  func.func @transform_6(%arg0: i32) -> (i32, i32) {
    %c0_i32 = arith.constant 0 : i32
    %c0_i32_0 = arith.constant 0 : i32
    %c0_i32_1 = arith.constant 0 : i32
    return %c0_i32, %c0_i32_0 : i32, i32
  }
  func.func @transform_7(%arg0: i32) -> (i32, i32) {
    %c0_i32 = arith.constant 0 : i32
    %c0_i32_0 = arith.constant 0 : i32
    %c0_i32_1 = arith.constant 0 : i32
    return %c0_i32, %c0_i32_0 : i32, i32
  }
  func.func @transform_8(%arg0: i32) -> (i32, i32) {
    %c0_i32 = arith.constant 0 : i32
    %c0_i32_0 = arith.constant 0 : i32
    %c0_i32_1 = arith.constant 0 : i32
    return %c0_i32, %c0_i32_0 : i32, i32
  }
  func.func @transform_9(%arg0: i32) -> (i32, i32, i32) {
    %c0_i32 = arith.constant 0 : i32
    %c0_i32_0 = arith.constant 0 : i32
    %c0_i32_1 = arith.constant 0 : i32
    %c0_i32_2 = arith.constant 0 : i32
    return %c0_i32, %c0_i32_0, %c0_i32_1 : i32, i32, i32
  }
  func.func @transform_10(%arg0: i32) -> (i32, i32) {
    %c0_i32 = arith.constant 0 : i32
    %c0_i32_0 = arith.constant 0 : i32
    %c0_i32_1 = arith.constant 0 : i32
    return %c0_i32, %c0_i32_0 : i32, i32
  }
  func.func @transform_11(%arg0: i32) -> (i32, i32) {
    %c0_i32 = arith.constant 0 : i32
    %c0_i32_0 = arith.constant 0 : i32
    %c0_i32_1 = arith.constant 0 : i32
    return %c0_i32, %c0_i32_0 : i32, i32
  }
  func.func @transform_12(%arg0: i32) -> (i32, i32) {
    %c0_i32 = arith.constant 0 : i32
    %c0_i32_0 = arith.constant 0 : i32
    %c0_i32_1 = arith.constant 0 : i32
    return %c0_i32, %c0_i32_0 : i32, i32
  }
  func.func @transform_13(%arg0: i32) -> (i32, i32) {
    %c0_i32 = arith.constant 0 : i32
    %c0_i32_0 = arith.constant 0 : i32
    %c0_i32_1 = arith.constant 0 : i32
    return %c0_i32, %c0_i32_0 : i32, i32
  }
  func.func @transform_14(%arg0: i32) -> (i32, i32) {
    %c0_i32 = arith.constant 0 : i32
    %c0_i32_0 = arith.constant 0 : i32
    %c0_i32_1 = arith.constant 0 : i32
    return %c0_i32, %c0_i32_0 : i32, i32
  }
  func.func @transform_15(%arg0: i32) -> (i32, i32) {
    %c0_i32 = arith.constant 0 : i32
    %c0_i32_0 = arith.constant 0 : i32
    %c0_i32_1 = arith.constant 0 : i32
    return %c0_i32, %c0_i32_0 : i32, i32
  }
  func.func @transform_16(%arg0: i32) -> (i32, i32) {
    %c0_i32 = arith.constant 0 : i32
    %c0_i32_0 = arith.constant 0 : i32
    %c0_i32_1 = arith.constant 0 : i32
    return %c0_i32, %c0_i32_0 : i32, i32
  }
  func.func @transform_17(%arg0: i32) -> (i32, i32) {
    %c0_i32 = arith.constant 0 : i32
    %c0_i32_0 = arith.constant 0 : i32
    return %arg0, %c0_i32 : i32, i32
  }
}

module attributes {stable_mosaic.version = 11 : i64} {
  func.func @transformer_block_kernel(%arg0: i32, %arg1: memref<16x32xf32, #tpu.memory_space<vmem>>, %arg2: memref<1x32xf32, #tpu.memory_space<vmem>>, %arg3: memref<1x32xf32, #tpu.memory_space<vmem>>, %arg4: memref<32x32xf32, #tpu.memory_space<vmem>>, %arg5: memref<32x32xf32, #tpu.memory_space<vmem>>, %arg6: memref<32x32xf32, #tpu.memory_space<vmem>>, %arg7: memref<1x32xf32, #tpu.memory_space<vmem>>, %arg8: memref<1x32xf32, #tpu.memory_space<vmem>>, %arg9: memref<1x32xf32, #tpu.memory_space<vmem>>, %arg10: memref<4x8x32xf32, #tpu.memory_space<vmem>>, %arg11: memref<1x32xf32, #tpu.memory_space<vmem>>, %arg12: memref<1x32xf32, #tpu.memory_space<vmem>>, %arg13: memref<1x32xf32, #tpu.memory_space<vmem>>, %arg14: memref<32x128xf32, #tpu.memory_space<vmem>>, %arg15: memref<1x128xf32, #tpu.memory_space<vmem>>, %arg16: memref<128x32xf32, #tpu.memory_space<vmem>>, %arg17: memref<1x32xf32, #tpu.memory_space<vmem>>, %arg18: memref<16x32xf32, #tpu.memory_space<vmem>>) attributes {dimension_semantics = [#tpu.dimension_semantics<parallel>], iteration_bounds = array<i64: 1>, scalar_prefetch = 0 : i64, scratch_operands = 0 : i64, tpu.core_type = #tpu.core_type<tc>, window_params = [{transform_indices = @transform_0, window_bounds = array<i64: 16, 32>}, {pipeline_mode = #tpu.pipeline_mode<synchronous>, transform_indices = @transform_1, window_bounds = array<i64: 1, 32>}, {pipeline_mode = #tpu.pipeline_mode<synchronous>, transform_indices = @transform_2, window_bounds = array<i64: 1, 32>}, {pipeline_mode = #tpu.pipeline_mode<synchronous>, transform_indices = @transform_3, window_bounds = array<i64: 32, 32>}, {pipeline_mode = #tpu.pipeline_mode<synchronous>, transform_indices = @transform_4, window_bounds = array<i64: 32, 32>}, {pipeline_mode = #tpu.pipeline_mode<synchronous>, transform_indices = @transform_5, window_bounds = array<i64: 32, 32>}, {pipeline_mode = #tpu.pipeline_mode<synchronous>, transform_indices = @transform_6, window_bounds = array<i64: 1, 32>}, {pipeline_mode = #tpu.pipeline_mode<synchronous>, transform_indices = @transform_7, window_bounds = array<i64: 1, 32>}, {pipeline_mode = #tpu.pipeline_mode<synchronous>, transform_indices = @transform_8, window_bounds = array<i64: 1, 32>}, {pipeline_mode = #tpu.pipeline_mode<synchronous>, transform_indices = @transform_9, window_bounds = array<i64: 4, 8, 32>}, {pipeline_mode = #tpu.pipeline_mode<synchronous>, transform_indices = @transform_10, window_bounds = array<i64: 1, 32>}, {pipeline_mode = #tpu.pipeline_mode<synchronous>, transform_indices = @transform_11, window_bounds = array<i64: 1, 32>}, {pipeline_mode = #tpu.pipeline_mode<synchronous>, transform_indices = @transform_12, window_bounds = array<i64: 1, 32>}, {pipeline_mode = #tpu.pipeline_mode<synchronous>, transform_indices = @transform_13, window_bounds = array<i64: 32, 128>}, {pipeline_mode = #tpu.pipeline_mode<synchronous>, transform_indices = @transform_14, window_bounds = array<i64: 1, 128>}, {pipeline_mode = #tpu.pipeline_mode<synchronous>, transform_indices = @transform_15, window_bounds = array<i64: 128, 32>}, {pipeline_mode = #tpu.pipeline_mode<synchronous>, transform_indices = @transform_16, window_bounds = array<i64: 1, 32>}, {transform_indices = @transform_17, window_bounds = array<i64: 16, 32>}]} {
    %c0 = arith.constant 0 : index
    %c0_0 = arith.constant 0 : index
    %0 = vector.load %arg1[%c0, %c0_0] : memref<16x32xf32, #tpu.memory_space<vmem>>, vector<16x32xf32>
    %cst = arith.constant dense<0.000000e+00> : vector<16xf32>
    %1 = vector.multi_reduction <add>, %0, %cst [1] : vector<16x32xf32> to vector<16xf32>
    %2 = vector.shape_cast %1 : vector<16xf32> to vector<16x1xf32>
    %cst_1 = arith.constant 3.200000e+01 : f32
    %3 = vector.broadcast %cst_1 : f32 to vector<16x1xf32>
    %4 = arith.divf %2, %3 : vector<16x1xf32>
    %5 = vector.broadcast %4 : vector<16x1xf32> to vector<16x32xf32>
    %6 = arith.subf %0, %5 : vector<16x32xf32>
    %7 = arith.mulf %6, %6 : vector<16x32xf32>
    %cst_2 = arith.constant dense<0.000000e+00> : vector<16xf32>
    %8 = vector.multi_reduction <add>, %7, %cst_2 [1] : vector<16x32xf32> to vector<16xf32>
    %9 = vector.shape_cast %8 : vector<16xf32> to vector<16x1xf32>
    %cst_3 = arith.constant 3.200000e+01 : f32
    %10 = vector.broadcast %cst_3 : f32 to vector<16x1xf32>
    %11 = arith.divf %9, %10 : vector<16x1xf32>
    %12 = vector.broadcast %4 : vector<16x1xf32> to vector<16x32xf32>
    %13 = arith.subf %0, %12 : vector<16x32xf32>
    %cst_4 = arith.constant 9.99999974E-6 : f32
    %14 = vector.broadcast %cst_4 : f32 to vector<16x1xf32>
    %15 = arith.addf %11, %14 : vector<16x1xf32>
    %16 = math.rsqrt %15 : vector<16x1xf32>
    %17 = vector.broadcast %16 : vector<16x1xf32> to vector<16x32xf32>
    %18 = arith.mulf %13, %17 : vector<16x32xf32>
    %c0_5 = arith.constant 0 : index
    %c0_6 = arith.constant 0 : index
    %19 = vector.load %arg2[%c0_5, %c0_6] : memref<1x32xf32, #tpu.memory_space<vmem>>, vector<1x32xf32>
    %20 = vector.shape_cast %19 : vector<1x32xf32> to vector<32xf32>
    %21 = vector.shape_cast %20 : vector<32xf32> to vector<1x32xf32>
    %22 = vector.broadcast %21 : vector<1x32xf32> to vector<16x32xf32>
    %23 = arith.mulf %18, %22 : vector<16x32xf32>
    %c0_7 = arith.constant 0 : index
    %c0_8 = arith.constant 0 : index
    %24 = vector.load %arg3[%c0_7, %c0_8] : memref<1x32xf32, #tpu.memory_space<vmem>>, vector<1x32xf32>
    %25 = vector.shape_cast %24 : vector<1x32xf32> to vector<32xf32>
    %26 = vector.shape_cast %25 : vector<32xf32> to vector<1x32xf32>
    %27 = vector.broadcast %26 : vector<1x32xf32> to vector<16x32xf32>
    %28 = arith.addf %23, %27 : vector<16x32xf32>
    %c0_9 = arith.constant 0 : index
    %c0_10 = arith.constant 0 : index
    %29 = vector.load %arg4[%c0_9, %c0_10] : memref<32x32xf32, #tpu.memory_space<vmem>>, vector<32x32xf32>
    %cst_11 = arith.constant dense<0.000000e+00> : vector<16x32xf32>
    %30 = tpu.matmul %28, %29, %cst_11 {dimension_numbers = #tpu.dot_dimension_numbers<[1], [0], [0], [1], [0, 0, 1, 1], [], []>} : vector<16x32xf32>, vector<32x32xf32>, vector<16x32xf32> -> vector<16x32xf32>
    %c0_12 = arith.constant 0 : index
    %c0_13 = arith.constant 0 : index
    %31 = vector.load %arg7[%c0_12, %c0_13] : memref<1x32xf32, #tpu.memory_space<vmem>>, vector<1x32xf32>
    %32 = vector.shape_cast %31 : vector<1x32xf32> to vector<32xf32>
    %33 = vector.shape_cast %32 : vector<32xf32> to vector<1x32xf32>
    %34 = vector.broadcast %33 : vector<1x32xf32> to vector<16x32xf32>
    %35 = arith.addf %30, %34 : vector<16x32xf32>
    %c0_14 = arith.constant 0 : index
    %c0_15 = arith.constant 0 : index
    %36 = vector.load %arg5[%c0_14, %c0_15] : memref<32x32xf32, #tpu.memory_space<vmem>>, vector<32x32xf32>
    %cst_16 = arith.constant dense<0.000000e+00> : vector<16x32xf32>
    %37 = tpu.matmul %28, %36, %cst_16 {dimension_numbers = #tpu.dot_dimension_numbers<[1], [0], [0], [1], [0, 0, 1, 1], [], []>} : vector<16x32xf32>, vector<32x32xf32>, vector<16x32xf32> -> vector<16x32xf32>
    %c0_17 = arith.constant 0 : index
    %c0_18 = arith.constant 0 : index
    %38 = vector.load %arg8[%c0_17, %c0_18] : memref<1x32xf32, #tpu.memory_space<vmem>>, vector<1x32xf32>
    %39 = vector.shape_cast %38 : vector<1x32xf32> to vector<32xf32>
    %40 = vector.shape_cast %39 : vector<32xf32> to vector<1x32xf32>
    %41 = vector.broadcast %40 : vector<1x32xf32> to vector<16x32xf32>
    %42 = arith.addf %37, %41 : vector<16x32xf32>
    %c0_19 = arith.constant 0 : index
    %c0_20 = arith.constant 0 : index
    %43 = vector.load %arg6[%c0_19, %c0_20] : memref<32x32xf32, #tpu.memory_space<vmem>>, vector<32x32xf32>
    %cst_21 = arith.constant dense<0.000000e+00> : vector<16x32xf32>
    %44 = tpu.matmul %28, %43, %cst_21 {dimension_numbers = #tpu.dot_dimension_numbers<[1], [0], [0], [1], [0, 0, 1, 1], [], []>} : vector<16x32xf32>, vector<32x32xf32>, vector<16x32xf32> -> vector<16x32xf32>
    %c0_22 = arith.constant 0 : index
    %c0_23 = arith.constant 0 : index
    %45 = vector.load %arg9[%c0_22, %c0_23] : memref<1x32xf32, #tpu.memory_space<vmem>>, vector<1x32xf32>
    %46 = vector.shape_cast %45 : vector<1x32xf32> to vector<32xf32>
    %47 = vector.shape_cast %46 : vector<32xf32> to vector<1x32xf32>
    %48 = vector.broadcast %47 : vector<1x32xf32> to vector<16x32xf32>
    %49 = arith.addf %44, %48 : vector<16x32xf32>
    %cst_24 = arith.constant 0.353553385 : f32
    %50 = vector.broadcast %cst_24 : f32 to vector<16x32xf32>
    %51 = arith.mulf %35, %50 : vector<16x32xf32>
    %52 = vector.shape_cast %51 : vector<16x32xf32> to vector<2x8x32xf32>
    %53 = vector.shape_cast %42 : vector<16x32xf32> to vector<2x8x32xf32>
    %54 = vector.shape_cast %49 : vector<16x32xf32> to vector<2x8x32xf32>
    %cst_25 = arith.constant 0.000000e+00 : f32
    %55 = vector.broadcast %cst_25 : f32 to vector<16x32xf32>
    %56 = vector.extract_strided_slice %52 {offsets = [0, 0, 0], sizes = [2, 8, 8], strides = [1, 1, 1]} : vector<2x8x32xf32> to vector<2x8x8xf32>
    %57 = vector.extract_strided_slice %53 {offsets = [0, 0, 0], sizes = [2, 8, 8], strides = [1, 1, 1]} : vector<2x8x32xf32> to vector<2x8x8xf32>
    %58 = vector.extract_strided_slice %54 {offsets = [0, 0, 0], sizes = [2, 8, 8], strides = [1, 1, 1]} : vector<2x8x32xf32> to vector<2x8x8xf32>
    "tpu.trace_start"() <{level = 10 : i32, message = "bqd,bkd->bqk"}> : () -> ()
    %cst_26 = arith.constant dense<0.000000e+00> : vector<2x8x8xf32>
    %59 = tpu.matmul %56, %57, %cst_26 {dimension_numbers = #tpu.dot_dimension_numbers<[2], [2], [1], [1], [0, 0, 0, 1, 1, 1], [0], [0]>} : vector<2x8x8xf32>, vector<2x8x8xf32>, vector<2x8x8xf32> -> vector<2x8x8xf32>
    "tpu.trace_stop"() : () -> ()
    %cst_27 = arith.constant dense<0xFF800000> : vector<2x8xf32>
    %60 = vector.multi_reduction <maximumf>, %59, %cst_27 [2] : vector<2x8x8xf32> to vector<2x8xf32>
    %61 = vector.shape_cast %60 : vector<2x8xf32> to vector<2x8x1xf32>
    %62 = vector.broadcast %61 : vector<2x8x1xf32> to vector<2x8x8xf32>
    %63 = arith.subf %59, %62 : vector<2x8x8xf32>
    %64 = math.exp %63 : vector<2x8x8xf32>
    %cst_28 = arith.constant dense<0.000000e+00> : vector<2x8xf32>
    %65 = vector.multi_reduction <add>, %64, %cst_28 [2] : vector<2x8x8xf32> to vector<2x8xf32>
    %66 = vector.shape_cast %65 : vector<2x8xf32> to vector<2x8x1xf32>
    %67 = tpu.reciprocal %66 {approx = true} : vector<2x8x1xf32> -> vector<2x8x1xf32>
    %68 = vector.broadcast %67 : vector<2x8x1xf32> to vector<2x8x8xf32>
    %69 = arith.mulf %64, %68 : vector<2x8x8xf32>
    "tpu.trace_start"() <{level = 10 : i32, message = "bqk,bkd->bqd"}> : () -> ()
    %cst_29 = arith.constant dense<0.000000e+00> : vector<2x8x8xf32>
    %70 = tpu.matmul %69, %58, %cst_29 {dimension_numbers = #tpu.dot_dimension_numbers<[2], [1], [1], [2], [0, 0, 0, 1, 1, 2], [0], [0]>} : vector<2x8x8xf32>, vector<2x8x8xf32>, vector<2x8x8xf32> -> vector<2x8x8xf32>
    "tpu.trace_stop"() : () -> ()
    %71 = vector.shape_cast %70 : vector<2x8x8xf32> to vector<16x8xf32>
    %c0_30 = arith.constant 0 : index
    %c0_31 = arith.constant 0 : index
    %c0_32 = arith.constant 0 : index
    %72 = vector.load %arg10[%c0_30, %c0_31, %c0_32] : memref<4x8x32xf32, #tpu.memory_space<vmem>>, vector<1x8x32xf32>
    %73 = vector.shape_cast %72 : vector<1x8x32xf32> to vector<8x32xf32>
    %cst_33 = arith.constant dense<0.000000e+00> : vector<16x32xf32>
    %74 = tpu.matmul %71, %73, %cst_33 {dimension_numbers = #tpu.dot_dimension_numbers<[1], [0], [0], [1], [0, 0, 1, 1], [], []>} : vector<16x8xf32>, vector<8x32xf32>, vector<16x32xf32> -> vector<16x32xf32>
    %75 = arith.addf %55, %74 : vector<16x32xf32>
    %76 = vector.extract_strided_slice %52 {offsets = [0, 0, 8], sizes = [2, 8, 8], strides = [1, 1, 1]} : vector<2x8x32xf32> to vector<2x8x8xf32>
    %77 = vector.extract_strided_slice %53 {offsets = [0, 0, 8], sizes = [2, 8, 8], strides = [1, 1, 1]} : vector<2x8x32xf32> to vector<2x8x8xf32>
    %78 = vector.extract_strided_slice %54 {offsets = [0, 0, 8], sizes = [2, 8, 8], strides = [1, 1, 1]} : vector<2x8x32xf32> to vector<2x8x8xf32>
    "tpu.trace_start"() <{level = 10 : i32, message = "bqd,bkd->bqk"}> : () -> ()
    %cst_34 = arith.constant dense<0.000000e+00> : vector<2x8x8xf32>
    %79 = tpu.matmul %76, %77, %cst_34 {dimension_numbers = #tpu.dot_dimension_numbers<[2], [2], [1], [1], [0, 0, 0, 1, 1, 1], [0], [0]>} : vector<2x8x8xf32>, vector<2x8x8xf32>, vector<2x8x8xf32> -> vector<2x8x8xf32>
    "tpu.trace_stop"() : () -> ()
    %cst_35 = arith.constant dense<0xFF800000> : vector<2x8xf32>
    %80 = vector.multi_reduction <maximumf>, %79, %cst_35 [2] : vector<2x8x8xf32> to vector<2x8xf32>
    %81 = vector.shape_cast %80 : vector<2x8xf32> to vector<2x8x1xf32>
    %82 = vector.broadcast %81 : vector<2x8x1xf32> to vector<2x8x8xf32>
    %83 = arith.subf %79, %82 : vector<2x8x8xf32>
    %84 = math.exp %83 : vector<2x8x8xf32>
    %cst_36 = arith.constant dense<0.000000e+00> : vector<2x8xf32>
    %85 = vector.multi_reduction <add>, %84, %cst_36 [2] : vector<2x8x8xf32> to vector<2x8xf32>
    %86 = vector.shape_cast %85 : vector<2x8xf32> to vector<2x8x1xf32>
    %87 = tpu.reciprocal %86 {approx = true} : vector<2x8x1xf32> -> vector<2x8x1xf32>
    %88 = vector.broadcast %87 : vector<2x8x1xf32> to vector<2x8x8xf32>
    %89 = arith.mulf %84, %88 : vector<2x8x8xf32>
    "tpu.trace_start"() <{level = 10 : i32, message = "bqk,bkd->bqd"}> : () -> ()
    %cst_37 = arith.constant dense<0.000000e+00> : vector<2x8x8xf32>
    %90 = tpu.matmul %89, %78, %cst_37 {dimension_numbers = #tpu.dot_dimension_numbers<[2], [1], [1], [2], [0, 0, 0, 1, 1, 2], [0], [0]>} : vector<2x8x8xf32>, vector<2x8x8xf32>, vector<2x8x8xf32> -> vector<2x8x8xf32>
    "tpu.trace_stop"() : () -> ()
    %91 = vector.shape_cast %90 : vector<2x8x8xf32> to vector<16x8xf32>
    %c1 = arith.constant 1 : index
    %c0_38 = arith.constant 0 : index
    %c0_39 = arith.constant 0 : index
    %92 = vector.load %arg10[%c1, %c0_38, %c0_39] : memref<4x8x32xf32, #tpu.memory_space<vmem>>, vector<1x8x32xf32>
    %93 = vector.shape_cast %92 : vector<1x8x32xf32> to vector<8x32xf32>
    %cst_40 = arith.constant dense<0.000000e+00> : vector<16x32xf32>
    %94 = tpu.matmul %91, %93, %cst_40 {dimension_numbers = #tpu.dot_dimension_numbers<[1], [0], [0], [1], [0, 0, 1, 1], [], []>} : vector<16x8xf32>, vector<8x32xf32>, vector<16x32xf32> -> vector<16x32xf32>
    %95 = arith.addf %75, %94 : vector<16x32xf32>
    %96 = vector.extract_strided_slice %52 {offsets = [0, 0, 16], sizes = [2, 8, 8], strides = [1, 1, 1]} : vector<2x8x32xf32> to vector<2x8x8xf32>
    %97 = vector.extract_strided_slice %53 {offsets = [0, 0, 16], sizes = [2, 8, 8], strides = [1, 1, 1]} : vector<2x8x32xf32> to vector<2x8x8xf32>
    %98 = vector.extract_strided_slice %54 {offsets = [0, 0, 16], sizes = [2, 8, 8], strides = [1, 1, 1]} : vector<2x8x32xf32> to vector<2x8x8xf32>
    "tpu.trace_start"() <{level = 10 : i32, message = "bqd,bkd->bqk"}> : () -> ()
    %cst_41 = arith.constant dense<0.000000e+00> : vector<2x8x8xf32>
    %99 = tpu.matmul %96, %97, %cst_41 {dimension_numbers = #tpu.dot_dimension_numbers<[2], [2], [1], [1], [0, 0, 0, 1, 1, 1], [0], [0]>} : vector<2x8x8xf32>, vector<2x8x8xf32>, vector<2x8x8xf32> -> vector<2x8x8xf32>
    "tpu.trace_stop"() : () -> ()
    %cst_42 = arith.constant dense<0xFF800000> : vector<2x8xf32>
    %100 = vector.multi_reduction <maximumf>, %99, %cst_42 [2] : vector<2x8x8xf32> to vector<2x8xf32>
    %101 = vector.shape_cast %100 : vector<2x8xf32> to vector<2x8x1xf32>
    %102 = vector.broadcast %101 : vector<2x8x1xf32> to vector<2x8x8xf32>
    %103 = arith.subf %99, %102 : vector<2x8x8xf32>
    %104 = math.exp %103 : vector<2x8x8xf32>
    %cst_43 = arith.constant dense<0.000000e+00> : vector<2x8xf32>
    %105 = vector.multi_reduction <add>, %104, %cst_43 [2] : vector<2x8x8xf32> to vector<2x8xf32>
    %106 = vector.shape_cast %105 : vector<2x8xf32> to vector<2x8x1xf32>
    %107 = tpu.reciprocal %106 {approx = true} : vector<2x8x1xf32> -> vector<2x8x1xf32>
    %108 = vector.broadcast %107 : vector<2x8x1xf32> to vector<2x8x8xf32>
    %109 = arith.mulf %104, %108 : vector<2x8x8xf32>
    "tpu.trace_start"() <{level = 10 : i32, message = "bqk,bkd->bqd"}> : () -> ()
    %cst_44 = arith.constant dense<0.000000e+00> : vector<2x8x8xf32>
    %110 = tpu.matmul %109, %98, %cst_44 {dimension_numbers = #tpu.dot_dimension_numbers<[2], [1], [1], [2], [0, 0, 0, 1, 1, 2], [0], [0]>} : vector<2x8x8xf32>, vector<2x8x8xf32>, vector<2x8x8xf32> -> vector<2x8x8xf32>
    "tpu.trace_stop"() : () -> ()
    %111 = vector.shape_cast %110 : vector<2x8x8xf32> to vector<16x8xf32>
    %c2 = arith.constant 2 : index
    %c0_45 = arith.constant 0 : index
    %c0_46 = arith.constant 0 : index
    %112 = vector.load %arg10[%c2, %c0_45, %c0_46] : memref<4x8x32xf32, #tpu.memory_space<vmem>>, vector<1x8x32xf32>
    %113 = vector.shape_cast %112 : vector<1x8x32xf32> to vector<8x32xf32>
    %cst_47 = arith.constant dense<0.000000e+00> : vector<16x32xf32>
    %114 = tpu.matmul %111, %113, %cst_47 {dimension_numbers = #tpu.dot_dimension_numbers<[1], [0], [0], [1], [0, 0, 1, 1], [], []>} : vector<16x8xf32>, vector<8x32xf32>, vector<16x32xf32> -> vector<16x32xf32>
    %115 = arith.addf %95, %114 : vector<16x32xf32>
    %116 = vector.extract_strided_slice %52 {offsets = [0, 0, 24], sizes = [2, 8, 8], strides = [1, 1, 1]} : vector<2x8x32xf32> to vector<2x8x8xf32>
    %117 = vector.extract_strided_slice %53 {offsets = [0, 0, 24], sizes = [2, 8, 8], strides = [1, 1, 1]} : vector<2x8x32xf32> to vector<2x8x8xf32>
    %118 = vector.extract_strided_slice %54 {offsets = [0, 0, 24], sizes = [2, 8, 8], strides = [1, 1, 1]} : vector<2x8x32xf32> to vector<2x8x8xf32>
    "tpu.trace_start"() <{level = 10 : i32, message = "bqd,bkd->bqk"}> : () -> ()
    %cst_48 = arith.constant dense<0.000000e+00> : vector<2x8x8xf32>
    %119 = tpu.matmul %116, %117, %cst_48 {dimension_numbers = #tpu.dot_dimension_numbers<[2], [2], [1], [1], [0, 0, 0, 1, 1, 1], [0], [0]>} : vector<2x8x8xf32>, vector<2x8x8xf32>, vector<2x8x8xf32> -> vector<2x8x8xf32>
    "tpu.trace_stop"() : () -> ()
    %cst_49 = arith.constant dense<0xFF800000> : vector<2x8xf32>
    %120 = vector.multi_reduction <maximumf>, %119, %cst_49 [2] : vector<2x8x8xf32> to vector<2x8xf32>
    %121 = vector.shape_cast %120 : vector<2x8xf32> to vector<2x8x1xf32>
    %122 = vector.broadcast %121 : vector<2x8x1xf32> to vector<2x8x8xf32>
    %123 = arith.subf %119, %122 : vector<2x8x8xf32>
    %124 = math.exp %123 : vector<2x8x8xf32>
    %cst_50 = arith.constant dense<0.000000e+00> : vector<2x8xf32>
    %125 = vector.multi_reduction <add>, %124, %cst_50 [2] : vector<2x8x8xf32> to vector<2x8xf32>
    %126 = vector.shape_cast %125 : vector<2x8xf32> to vector<2x8x1xf32>
    %127 = tpu.reciprocal %126 {approx = true} : vector<2x8x1xf32> -> vector<2x8x1xf32>
    %128 = vector.broadcast %127 : vector<2x8x1xf32> to vector<2x8x8xf32>
    %129 = arith.mulf %124, %128 : vector<2x8x8xf32>
    "tpu.trace_start"() <{level = 10 : i32, message = "bqk,bkd->bqd"}> : () -> ()
    %cst_51 = arith.constant dense<0.000000e+00> : vector<2x8x8xf32>
    %130 = tpu.matmul %129, %118, %cst_51 {dimension_numbers = #tpu.dot_dimension_numbers<[2], [1], [1], [2], [0, 0, 0, 1, 1, 2], [0], [0]>} : vector<2x8x8xf32>, vector<2x8x8xf32>, vector<2x8x8xf32> -> vector<2x8x8xf32>
    "tpu.trace_stop"() : () -> ()
    %131 = vector.shape_cast %130 : vector<2x8x8xf32> to vector<16x8xf32>
    %c3 = arith.constant 3 : index
    %c0_52 = arith.constant 0 : index
    %c0_53 = arith.constant 0 : index
    %132 = vector.load %arg10[%c3, %c0_52, %c0_53] : memref<4x8x32xf32, #tpu.memory_space<vmem>>, vector<1x8x32xf32>
    %133 = vector.shape_cast %132 : vector<1x8x32xf32> to vector<8x32xf32>
    %cst_54 = arith.constant dense<0.000000e+00> : vector<16x32xf32>
    %134 = tpu.matmul %131, %133, %cst_54 {dimension_numbers = #tpu.dot_dimension_numbers<[1], [0], [0], [1], [0, 0, 1, 1], [], []>} : vector<16x8xf32>, vector<8x32xf32>, vector<16x32xf32> -> vector<16x32xf32>
    %135 = arith.addf %115, %134 : vector<16x32xf32>
    %c0_55 = arith.constant 0 : index
    %c0_56 = arith.constant 0 : index
    %136 = vector.load %arg11[%c0_55, %c0_56] : memref<1x32xf32, #tpu.memory_space<vmem>>, vector<1x32xf32>
    %137 = vector.shape_cast %136 : vector<1x32xf32> to vector<32xf32>
    %138 = vector.shape_cast %137 : vector<32xf32> to vector<1x32xf32>
    %139 = vector.broadcast %138 : vector<1x32xf32> to vector<16x32xf32>
    %140 = arith.addf %135, %139 : vector<16x32xf32>
    %141 = arith.addf %0, %140 : vector<16x32xf32>
    %cst_57 = arith.constant dense<0.000000e+00> : vector<16xf32>
    %142 = vector.multi_reduction <add>, %141, %cst_57 [1] : vector<16x32xf32> to vector<16xf32>
    %143 = vector.shape_cast %142 : vector<16xf32> to vector<16x1xf32>
    %cst_58 = arith.constant 3.200000e+01 : f32
    %144 = vector.broadcast %cst_58 : f32 to vector<16x1xf32>
    %145 = arith.divf %143, %144 : vector<16x1xf32>
    %146 = vector.broadcast %145 : vector<16x1xf32> to vector<16x32xf32>
    %147 = arith.subf %141, %146 : vector<16x32xf32>
    %148 = arith.mulf %147, %147 : vector<16x32xf32>
    %cst_59 = arith.constant dense<0.000000e+00> : vector<16xf32>
    %149 = vector.multi_reduction <add>, %148, %cst_59 [1] : vector<16x32xf32> to vector<16xf32>
    %150 = vector.shape_cast %149 : vector<16xf32> to vector<16x1xf32>
    %cst_60 = arith.constant 3.200000e+01 : f32
    %151 = vector.broadcast %cst_60 : f32 to vector<16x1xf32>
    %152 = arith.divf %150, %151 : vector<16x1xf32>
    %153 = vector.broadcast %145 : vector<16x1xf32> to vector<16x32xf32>
    %154 = arith.subf %141, %153 : vector<16x32xf32>
    %cst_61 = arith.constant 9.99999974E-6 : f32
    %155 = vector.broadcast %cst_61 : f32 to vector<16x1xf32>
    %156 = arith.addf %152, %155 : vector<16x1xf32>
    %157 = math.rsqrt %156 : vector<16x1xf32>
    %158 = vector.broadcast %157 : vector<16x1xf32> to vector<16x32xf32>
    %159 = arith.mulf %154, %158 : vector<16x32xf32>
    %c0_62 = arith.constant 0 : index
    %c0_63 = arith.constant 0 : index
    %160 = vector.load %arg12[%c0_62, %c0_63] : memref<1x32xf32, #tpu.memory_space<vmem>>, vector<1x32xf32>
    %161 = vector.shape_cast %160 : vector<1x32xf32> to vector<32xf32>
    %162 = vector.shape_cast %161 : vector<32xf32> to vector<1x32xf32>
    %163 = vector.broadcast %162 : vector<1x32xf32> to vector<16x32xf32>
    %164 = arith.mulf %159, %163 : vector<16x32xf32>
    %c0_64 = arith.constant 0 : index
    %c0_65 = arith.constant 0 : index
    %165 = vector.load %arg13[%c0_64, %c0_65] : memref<1x32xf32, #tpu.memory_space<vmem>>, vector<1x32xf32>
    %166 = vector.shape_cast %165 : vector<1x32xf32> to vector<32xf32>
    %167 = vector.shape_cast %166 : vector<32xf32> to vector<1x32xf32>
    %168 = vector.broadcast %167 : vector<1x32xf32> to vector<16x32xf32>
    %169 = arith.addf %164, %168 : vector<16x32xf32>
    %c0_66 = arith.constant 0 : index
    %c0_67 = arith.constant 0 : index
    %170 = vector.load %arg14[%c0_66, %c0_67] : memref<32x128xf32, #tpu.memory_space<vmem>>, vector<32x128xf32>
    %cst_68 = arith.constant dense<0.000000e+00> : vector<16x128xf32>
    %171 = tpu.matmul %169, %170, %cst_68 {dimension_numbers = #tpu.dot_dimension_numbers<[1], [0], [0], [1], [0, 0, 1, 1], [], []>} : vector<16x32xf32>, vector<32x128xf32>, vector<16x128xf32> -> vector<16x128xf32>
    %c0_69 = arith.constant 0 : index
    %c0_70 = arith.constant 0 : index
    %172 = vector.load %arg15[%c0_69, %c0_70] : memref<1x128xf32, #tpu.memory_space<vmem>>, vector<1x128xf32>
    %173 = vector.shape_cast %172 : vector<1x128xf32> to vector<128xf32>
    %174 = vector.shape_cast %173 : vector<128xf32> to vector<1x128xf32>
    %175 = vector.broadcast %174 : vector<1x128xf32> to vector<16x128xf32>
    %176 = arith.addf %171, %175 : vector<16x128xf32>
    %cst_71 = arith.constant 5.000000e-01 : f32
    %177 = vector.broadcast %cst_71 : f32 to vector<16x128xf32>
    %178 = arith.mulf %177, %176 : vector<16x128xf32>
    %cst_72 = arith.constant 0.707106769 : f32
    %179 = vector.broadcast %cst_72 : f32 to vector<16x128xf32>
    %180 = arith.mulf %176, %179 : vector<16x128xf32>
    %181 = math.erf %180 : vector<16x128xf32>
    %cst_73 = arith.constant 1.000000e+00 : f32
    %182 = vector.broadcast %cst_73 : f32 to vector<16x128xf32>
    %183 = arith.addf %182, %181 : vector<16x128xf32>
    %184 = arith.mulf %178, %183 : vector<16x128xf32>
    %c0_74 = arith.constant 0 : index
    %c0_75 = arith.constant 0 : index
    %185 = vector.load %arg16[%c0_74, %c0_75] : memref<128x32xf32, #tpu.memory_space<vmem>>, vector<128x32xf32>
    %cst_76 = arith.constant dense<0.000000e+00> : vector<16x32xf32>
    %186 = tpu.matmul %184, %185, %cst_76 {dimension_numbers = #tpu.dot_dimension_numbers<[1], [0], [0], [1], [0, 0, 1, 1], [], []>} : vector<16x128xf32>, vector<128x32xf32>, vector<16x32xf32> -> vector<16x32xf32>
    %c0_77 = arith.constant 0 : index
    %c0_78 = arith.constant 0 : index
    %187 = vector.load %arg17[%c0_77, %c0_78] : memref<1x32xf32, #tpu.memory_space<vmem>>, vector<1x32xf32>
    %188 = vector.shape_cast %187 : vector<1x32xf32> to vector<32xf32>
    %189 = vector.shape_cast %188 : vector<32xf32> to vector<1x32xf32>
    %190 = vector.broadcast %189 : vector<1x32xf32> to vector<16x32xf32>
    %191 = arith.addf %186, %190 : vector<16x32xf32>
    %192 = arith.addf %141, %191 : vector<16x32xf32>
    %c0_79 = arith.constant 0 : index
    %c0_80 = arith.constant 0 : index
    %193 = vector.load %arg18[%c0_79, %c0_80] : memref<16x32xf32, #tpu.memory_space<vmem>>, vector<16x32xf32>
    tpu.vector_store %arg18[%c0_79, %c0_80], %192 {strides = array<i32>} : memref<16x32xf32, #tpu.memory_space<vmem>>, vector<16x32xf32>,
    return
  }
  func.func @transform_0(%arg0: i32) -> (i32, i32) {
    %c0_i32 = arith.constant 0 : i32
    %c0_i32_0 = arith.constant 0 : i32
    return %arg0, %c0_i32 : i32, i32
  }
  func.func @transform_1(%arg0: i32) -> (i32, i32) {
    %c0_i32 = arith.constant 0 : i32
    %c0_i32_0 = arith.constant 0 : i32
    %c0_i32_1 = arith.constant 0 : i32
    return %c0_i32, %c0_i32_0 : i32, i32
  }
  func.func @transform_2(%arg0: i32) -> (i32, i32) {
    %c0_i32 = arith.constant 0 : i32
    %c0_i32_0 = arith.constant 0 : i32
    %c0_i32_1 = arith.constant 0 : i32
    return %c0_i32, %c0_i32_0 : i32, i32
  }
  func.func @transform_3(%arg0: i32) -> (i32, i32) {
    %c0_i32 = arith.constant 0 : i32
    %c0_i32_0 = arith.constant 0 : i32
    %c0_i32_1 = arith.constant 0 : i32
    return %c0_i32, %c0_i32_0 : i32, i32
  }
  func.func @transform_4(%arg0: i32) -> (i32, i32) {
    %c0_i32 = arith.constant 0 : i32
    %c0_i32_0 = arith.constant 0 : i32
    %c0_i32_1 = arith.constant 0 : i32
    return %c0_i32, %c0_i32_0 : i32, i32
  }
  func.func @transform_5(%arg0: i32) -> (i32, i32) {
    %c0_i32 = arith.constant 0 : i32
    %c0_i32_0 = arith.constant 0 : i32
    %c0_i32_1 = arith.constant 0 : i32
    return %c0_i32, %c0_i32_0 : i32, i32
  }
  func.func @transform_6(%arg0: i32) -> (i32, i32) {
    %c0_i32 = arith.constant 0 : i32
    %c0_i32_0 = arith.constant 0 : i32
    %c0_i32_1 = arith.constant 0 : i32
    return %c0_i32, %c0_i32_0 : i32, i32
  }
  func.func @transform_7(%arg0: i32) -> (i32, i32) {
    %c0_i32 = arith.constant 0 : i32
    %c0_i32_0 = arith.constant 0 : i32
    %c0_i32_1 = arith.constant 0 : i32
    return %c0_i32, %c0_i32_0 : i32, i32
  }
  func.func @transform_8(%arg0: i32) -> (i32, i32) {
    %c0_i32 = arith.constant 0 : i32
    %c0_i32_0 = arith.constant 0 : i32
    %c0_i32_1 = arith.constant 0 : i32
    return %c0_i32, %c0_i32_0 : i32, i32
  }
  func.func @transform_9(%arg0: i32) -> (i32, i32, i32) {
    %c0_i32 = arith.constant 0 : i32
    %c0_i32_0 = arith.constant 0 : i32
    %c0_i32_1 = arith.constant 0 : i32
    %c0_i32_2 = arith.constant 0 : i32
    return %c0_i32, %c0_i32_0, %c0_i32_1 : i32, i32, i32
  }
  func.func @transform_10(%arg0: i32) -> (i32, i32) {
    %c0_i32 = arith.constant 0 : i32
    %c0_i32_0 = arith.constant 0 : i32
    %c0_i32_1 = arith.constant 0 : i32
    return %c0_i32, %c0_i32_0 : i32, i32
  }
  func.func @transform_11(%arg0: i32) -> (i32, i32) {
    %c0_i32 = arith.constant 0 : i32
    %c0_i32_0 = arith.constant 0 : i32
    %c0_i32_1 = arith.constant 0 : i32
    return %c0_i32, %c0_i32_0 : i32, i32
  }
  func.func @transform_12(%arg0: i32) -> (i32, i32) {
    %c0_i32 = arith.constant 0 : i32
    %c0_i32_0 = arith.constant 0 : i32
    %c0_i32_1 = arith.constant 0 : i32
    return %c0_i32, %c0_i32_0 : i32, i32
  }
  func.func @transform_13(%arg0: i32) -> (i32, i32) {
    %c0_i32 = arith.constant 0 : i32
    %c0_i32_0 = arith.constant 0 : i32
    %c0_i32_1 = arith.constant 0 : i32
    return %c0_i32, %c0_i32_0 : i32, i32
  }
  func.func @transform_14(%arg0: i32) -> (i32, i32) {
    %c0_i32 = arith.constant 0 : i32
    %c0_i32_0 = arith.constant 0 : i32
    %c0_i32_1 = arith.constant 0 : i32
    return %c0_i32, %c0_i32_0 : i32, i32
  }
  func.func @transform_15(%arg0: i32) -> (i32, i32) {
    %c0_i32 = arith.constant 0 : i32
    %c0_i32_0 = arith.constant 0 : i32
    %c0_i32_1 = arith.constant 0 : i32
    return %c0_i32, %c0_i32_0 : i32, i32
  }
  func.func @transform_16(%arg0: i32) -> (i32, i32) {
    %c0_i32 = arith.constant 0 : i32
    %c0_i32_0 = arith.constant 0 : i32
    %c0_i32_1 = arith.constant 0 : i32
    return %c0_i32, %c0_i32_0 : i32, i32
  }
  func.func @transform_17(%arg0: i32) -> (i32, i32) {
    %c0_i32 = arith.constant 0 : i32
    %c0_i32_0 = arith.constant 0 : i32
    return %arg0, %c0_i32 : i32, i32
  }
}

</mosaic_0001>

<llo_original>
// kernel: tpu_custom_call.1
$region0: #{tpu_custom_call.1}
  #allocation0 [shape = 'u32[]', space=smem, size = 0x4, offset = 0x4, fixed_abs, tag = 'smem constant byte address 0x4 - core index']
  #allocation1 [shape = 'u32[144,128]{1,0:T(1,128)}', space=vmem, size = 0x12000, scoped, tag = 'internal scratch']
  %s0 = inlined_call_operand.hbm [shape: f32[16,32], index: 0, kind: input, shape index: {}]
  %s1 = inlined_call_operand.vmem [shape: f32[1,32], index: 1, kind: input, shape index: {}]
  %s2 = inlined_call_operand.vmem [shape: f32[1,32], index: 2, kind: input, shape index: {}]
  %s3 = inlined_call_operand.vmem [shape: f32[32,32], index: 3, kind: input, shape index: {}]
  %s4 = inlined_call_operand.vmem [shape: f32[32,32], index: 4, kind: input, shape index: {}]
  %s5 = inlined_call_operand.vmem [shape: f32[32,32], index: 5, kind: input, shape index: {}]
  %s6 = inlined_call_operand.vmem [shape: f32[1,32], index: 6, kind: input, shape index: {}]
  %s7 = inlined_call_operand.vmem [shape: f32[1,32], index: 7, kind: input, shape index: {}]
  %s8 = inlined_call_operand.vmem [shape: f32[1,32], index: 8, kind: input, shape index: {}]
  %s9 = inlined_call_operand.vmem [shape: f32[4,8,32], index: 9, kind: input, shape index: {}]
  %s10 = inlined_call_operand.vmem [shape: f32[1,32], index: 10, kind: input, shape index: {}]
  %s11 = inlined_call_operand.vmem [shape: f32[1,32], index: 11, kind: input, shape index: {}]
  %s12 = inlined_call_operand.vmem [shape: f32[1,32], index: 12, kind: input, shape index: {}]
  %s13 = inlined_call_operand.vmem [shape: f32[32,128], index: 13, kind: input, shape index: {}]
  %s14 = inlined_call_operand.vmem [shape: f32[1,128], index: 14, kind: input, shape index: {}]
  %s15 = inlined_call_operand.vmem [shape: f32[128,32], index: 15, kind: input, shape index: {}]
  %s16 = inlined_call_operand.vmem [shape: f32[1,32], index: 16, kind: input, shape index: {}]
  %s17 = inlined_call_operand.hbm [shape: f32[16,32], index: 17, kind: output, shape index: {}]
  %s18 = sld [smem:[#allocation0]]
  $region82: #{tpu_custom_call.1} parent=0
    _
  %s20 = ssub.s32 1, %s18
  %s21 = scalar_select 0, %s20, %s18
  $region1: #{tpu_custom_call.1} parent=0
    #allocation2 [shape = 'u8[8192]{0}', space=vmem, size = 0x2000, scoped, tag = 'input window, operand 0, single buffered']
    #allocation3 [shape = 's32[1]{0}', space=sflag, size = 0x4, scoped, tag = 'scoped memory for tpu_custom_call.1']
    #allocation4 [shape = 's32[1]{0}', space=sflag, size = 0x4, scoped, tag = 'scoped memory for tpu_custom_call.1']
    #allocation5 [shape = 'u8[8192]{0}', space=vmem, size = 0x2000, scoped, tag = 'output window, operand 0, single buffered']
    %22 = vsyncpa [#allocation3], 0
    %23 = vsyncpa [#allocation4], 0
    // Predicated region
    $region2: #{tpu_custom_call.1} parent=1 // pred_check
      _
    $region3: #{tpu_custom_call.1} parent=1 // pred_check_branch
      %25 = sbr.rel (0) target = $region5
    $region4: #{tpu_custom_call.1} parent=1 // pred_region
      %s27 = ssub.s32 256, 256
      %28 = vsyncadd [#allocation3], %s27
      %s29 = sshll.u32 [#allocation2], 4
      %s30 = int_to_ptr.vmem [resolvable:$true] %s29
      %35 = dma.hbm_to_vmem [thread:$0]  %s0, 256, %s30, [#allocation3], 128, 128, 8
    $region5: #{tpu_custom_call.1} parent=1 // pred_fallthru
      _
    // Predicated region
    $region6: #{tpu_custom_call.1} parent=1 // pred_check
      _
    $region7: #{tpu_custom_call.1} parent=1 // pred_check_branch
      %37 = sbr.rel (0) target = $region9
    $region8: #{tpu_custom_call.1} parent=1 // pred_region
      _
    $region9: #{tpu_custom_call.1} parent=1 // pred_fallthru
      _
    // Predicated region
    $region10: #{tpu_custom_call.1} parent=1 // pred_check
      _
    $region11: #{tpu_custom_call.1} parent=1 // pred_check_branch
      %39 = sbr.rel (0) target = $region13
    $region12: #{tpu_custom_call.1} parent=1 // pred_region
      _
    $region13: #{tpu_custom_call.1} parent=1 // pred_fallthru
      _
    // Predicated region
    $region14: #{tpu_custom_call.1} parent=1 // pred_check
      _
    $region15: #{tpu_custom_call.1} parent=1 // pred_check_branch
      %41 = sbr.rel (0) target = $region17
    $region16: #{tpu_custom_call.1} parent=1 // pred_region
      _
    $region17: #{tpu_custom_call.1} parent=1 // pred_fallthru
      _
    // Predicated region
    $region18: #{tpu_custom_call.1} parent=1 // pred_check
      _
    $region19: #{tpu_custom_call.1} parent=1 // pred_check_branch
      %43 = sbr.rel (0) target = $region21
    $region20: #{tpu_custom_call.1} parent=1 // pred_region
      _
    $region21: #{tpu_custom_call.1} parent=1 // pred_fallthru
      _
    // Predicated region
    $region22: #{tpu_custom_call.1} parent=1 // pred_check
      _
    $region23: #{tpu_custom_call.1} parent=1 // pred_check_branch
      %45 = sbr.rel (0) target = $region25
    $region24: #{tpu_custom_call.1} parent=1 // pred_region
      _
    $region25: #{tpu_custom_call.1} parent=1 // pred_fallthru
      _
    // Predicated region
    $region26: #{tpu_custom_call.1} parent=1 // pred_check
      _
    $region27: #{tpu_custom_call.1} parent=1 // pred_check_branch
      %47 = sbr.rel (0) target = $region29
    $region28: #{tpu_custom_call.1} parent=1 // pred_region
      _
    $region29: #{tpu_custom_call.1} parent=1 // pred_fallthru
      _
    // Predicated region
    $region30: #{tpu_custom_call.1} parent=1 // pred_check
      _
    $region31: #{tpu_custom_call.1} parent=1 // pred_check_branch
      %49 = sbr.rel (0) target = $region33
    $region32: #{tpu_custom_call.1} parent=1 // pred_region
      _
    $region33: #{tpu_custom_call.1} parent=1 // pred_fallthru
      _
    // Predicated region
    $region34: #{tpu_custom_call.1} parent=1 // pred_check
      _
    $region35: #{tpu_custom_call.1} parent=1 // pred_check_branch
      %51 = sbr.rel (0) target = $region37
    $region36: #{tpu_custom_call.1} parent=1 // pred_region
      _
    $region37: #{tpu_custom_call.1} parent=1 // pred_fallthru
      _
    // Predicated region
    $region38: #{tpu_custom_call.1} parent=1 // pred_check
      _
    $region39: #{tpu_custom_call.1} parent=1 // pred_check_branch
      %53 = sbr.rel (0) target = $region41
    $region40: #{tpu_custom_call.1} parent=1 // pred_region
      _
    $region41: #{tpu_custom_call.1} parent=1 // pred_fallthru
      _
    // Predicated region
    $region42: #{tpu_custom_call.1} parent=1 // pred_check
      _
    $region43: #{tpu_custom_call.1} parent=1 // pred_check_branch
      %55 = sbr.rel (0) target = $region45
    $region44: #{tpu_custom_call.1} parent=1 // pred_region
      _
    $region45: #{tpu_custom_call.1} parent=1 // pred_fallthru
      _
    // Predicated region
    $region46: #{tpu_custom_call.1} parent=1 // pred_check
      _
    $region47: #{tpu_custom_call.1} parent=1 // pred_check_branch
      %57 = sbr.rel (0) target = $region49
    $region48: #{tpu_custom_call.1} parent=1 // pred_region
      _
    $region49: #{tpu_custom_call.1} parent=1 // pred_fallthru
      _
    // Predicated region
    $region50: #{tpu_custom_call.1} parent=1 // pred_check
      _
    $region51: #{tpu_custom_call.1} parent=1 // pred_check_branch
      %59 = sbr.rel (0) target = $region53
    $region52: #{tpu_custom_call.1} parent=1 // pred_region
      _
    $region53: #{tpu_custom_call.1} parent=1 // pred_fallthru
      _
    // Predicated region
    $region54: #{tpu_custom_call.1} parent=1 // pred_check
      _
    $region55: #{tpu_custom_call.1} parent=1 // pred_check_branch
      %61 = sbr.rel (0) target = $region57
    $region56: #{tpu_custom_call.1} parent=1 // pred_region
      _
    $region57: #{tpu_custom_call.1} parent=1 // pred_fallthru
      _
    // Predicated region
    $region58: #{tpu_custom_call.1} parent=1 // pred_check
      _
    $region59: #{tpu_custom_call.1} parent=1 // pred_check_branch
      %63 = sbr.rel (0) target = $region61
    $region60: #{tpu_custom_call.1} parent=1 // pred_region
      _
    $region61: #{tpu_custom_call.1} parent=1 // pred_fallthru
      _
    // Predicated region
    $region62: #{tpu_custom_call.1} parent=1 // pred_check
      _
    $region63: #{tpu_custom_call.1} parent=1 // pred_check_branch
      %65 = sbr.rel (0) target = $region65
    $region64: #{tpu_custom_call.1} parent=1 // pred_region
      _
    $region65: #{tpu_custom_call.1} parent=1 // pred_fallthru
      _
    // Predicated region
    $region66: #{tpu_custom_call.1} parent=1 // pred_check
      _
    $region67: #{tpu_custom_call.1} parent=1 // pred_check_branch
      %67 = sbr.rel (0) target = $region69
    $region68: #{tpu_custom_call.1} parent=1 // pred_region
      _
    $region69: #{tpu_custom_call.1} parent=1 // pred_fallthru
      _
    // Predicated region
    $region70: #{tpu_custom_call.1} parent=1 // pred_check
      _
    $region71: #{tpu_custom_call.1} parent=1 // pred_check_branch
      %69 = sbr.rel (0) target = $region73
    $region72: #{tpu_custom_call.1} parent=1 // pred_region
      %70 = dma.done [#allocation3], 256
    $region73: #{tpu_custom_call.1} parent=1 // pred_fallthru
      _
    %v71 = vld [vmem:[#allocation2] sm:$0xff]
    %v72 = vld [vmem:[#allocation2 + $0x8] sm:$0xff]
    %vm73 = vcmask 261120
    %v74 = vsel %vm73, %v71, 0.0
    %75 = vadd.xlane.f32.xlu0 %v74
    %v76 = vpop.xlane.xlu0 %75
    %v77 = vsel %vm73, %v72, 0.0
    %78 = vadd.xlane.f32.xlu0 %v77
    %v79 = vpop.xlane.xlu0 %78
    %v80 = vrcp.pop 32.0
    %v81 = vmul.f32 %v76, %v80
    %v82 = vmul.f32 %v79, %v80
    %v83 = vsub.f32 %v71, %v81
    %v84 = vsub.f32 %v72, %v82
    %v85 = vmul.f32 %v83, %v83
    %v86 = vmul.f32 %v84, %v84
    %v87 = vsel %vm73, %v85, 0.0
    %88 = vadd.xlane.f32.xlu0 %v87
    %v89 = vpop.xlane.xlu0 %88
    %v90 = vsel %vm73, %v86, 0.0
    %91 = vadd.xlane.f32.xlu0 %v90
    %v92 = vpop.xlane.xlu0 %91
    %v93 = vmul.f32 %v89, %v80
    %v94 = vmul.f32 %v92, %v80
    %v95 = vadd.f32 %v93, 1e-05
    %v96 = vadd.f32 %v94, 1e-05
    %v97 = vrsqrt.pop %v95
    %v98 = vrsqrt.pop %v96
    %v99 = vmul.f32 %v83, %v97
    %v100 = vmul.f32 %v84, %v98
    %v101 = vld [vmem:[%s1] sm:$0x1]
    %v103 = vlaneseq
    %v104 = vshrl.u32 %v103, 7
    %v105 = vsub.s32 0, %v104
    %v106 = vrot.slane %v101, %v105
    %v108 = vmul.f32 %v99, %v106
    %v109 = vmul.f32 %v100, %v106
    %v110 = vld [vmem:[%s2] sm:$0x1]
    %v112 = vlaneseq
    %v113 = vshrl.u32 %v112, 7
    %v114 = vsub.s32 0, %v113
    %v115 = vrot.slane %v110, %v114
    %v117 = vadd.f32 %v108, %v115
    %v118 = vadd.f32 %v109, %v115
    %v119 = vld [vmem:[%s3] sm:$0xff]
    %v120 = vld [vmem:[%s3 + $0x8] sm:$0xff]
    %v121 = vld [vmem:[%s3 + $0x10] sm:$0xff]
    %v122 = vld [vmem:[%s3 + $0x18] sm:$0xff]
    %v123 = vld [vmem:[%s6] sm:$0x1]
    %v125 = vlaneseq
    %v126 = vshrl.u32 %v125, 7
    %v127 = vsub.s32 0, %v126
    %v128 = vrot.slane %v123, %v127
    %v131 = vsel %vm73, %v117, 0
    %v134 = vsel %vm73, %v118, 0
    %136 = vmatprep.subr.mxu0 0.0
    %137 = vmatpush1.msra.mxu0 0.0
    %138 = vmatprep.subr.mxu0 0.0
    %139 = vmatpush1.msra.mxu0 0.0
    %140 = vmatprep.subr.mxu0 0.0
    %141 = vmatpush1.msra.mxu0 0.0
    %142 = vmatprep.subr.mxu0 0.0
    %143 = vmatpush1.msra.mxu0 0.0
    %144 = vmatprep.subr.mxu0 0.0
    %145 = vmatpush1.msra.mxu0 0.0
    %146 = vmatprep.subr.mxu0 0.0
    %147 = vmatpush1.msra.mxu0 0.0
    %148 = vmatprep.subr.mxu0 0.0
    %149 = vmatpush1.msra.mxu0 0.0
    %150 = vmatprep.subr.mxu0 0.0
    %151 = vmatpush1.msra.mxu0 0.0
    %152 = vmatprep.subr.mxu0 0.0
    %153 = vmatpush1.msra.mxu0 0.0
    %154 = vmatprep.subr.mxu0 0.0
    %155 = vmatpush1.msra.mxu0 0.0
    %156 = vmatprep.subr.mxu0 0.0
    %157 = vmatpush1.msra.mxu0 0.0
    %158 = vmatprep.subr.mxu0 0.0
    %159 = vmatpush1.msra.mxu0 0.0
    %160 = vmatprep.subr.mxu0 0.0
    %161 = vmatpush1.msra.mxu0 %v122
    %162 = vmatprep.subr.mxu0 0.0
    %163 = vmatpush1.msra.mxu0 %v121
    %164 = vmatprep.subr.mxu0 0.0
    %165 = vmatpush1.msra.mxu0 %v120
    %166 = vmatprep.subr.mxu0 0.0
    %167 = vmatpush1.msra.mxu0 %v119
    %168 = vmatprep.subr.mxu0 0.0
    %169 = vmatpush2.msra.mxu0 0.0
    %170 = vmatprep.subr.mxu0 0.0
    %171 = vmatpush2.msra.mxu0 0.0
    %172 = vmatprep.subr.mxu0 0.0
    %173 = vmatpush2.msra.mxu0 0.0
    %174 = vmatprep.subr.mxu0 0.0
    %175 = vmatpush2.msra.mxu0 0.0
    %176 = vmatprep.subr.mxu0 0.0
    %177 = vmatpush2.msra.mxu0 0.0
    %178 = vmatprep.subr.mxu0 0.0
    %179 = vmatpush2.msra.mxu0 0.0
    %180 = vmatprep.subr.mxu0 0.0
    %181 = vmatpush2.msra.mxu0 0.0
    %182 = vmatprep.subr.mxu0 0.0
    %183 = vmatpush2.msra.mxu0 0.0
    %184 = vmatprep.subr.mxu0 0.0
    %185 = vmatpush2.msra.mxu0 0.0
    %186 = vmatprep.subr.mxu0 0.0
    %187 = vmatpush2.msra.mxu0 0.0
    %188 = vmatprep.subr.mxu0 0.0
    %189 = vmatpush2.msra.mxu0 0.0
    %190 = vmatprep.subr.mxu0 0.0
    %191 = vmatpush2.msra.mxu0 0.0
    %192 = vmatprep.subr.mxu0 0.0
    %193 = vmatpush2.msra.mxu0 0.0
    %194 = vmatprep.subr.mxu0 0.0
    %195 = vmatpush2.msra.mxu0 0.0
    %196 = vmatprep.subr.mxu0 0.0
    %197 = vmatpush2.msra.mxu0 0.0
    %198 = vmatprep.subr.mxu0 0.0
    %199 = vmatpush2.msra.mxu0 0.0
    %200 = vmatprep.mubr.f32.mxu0 0.0
    %201 = vmatmul.mubr.f32.gmra.mxu0 %v131
    %v202 = vpop.f32.mrf.mxu0
    %v203 = vadd.f32 %v128, %v202
    %v204 = vpop.f32.mrf.mxu0
    %205 = vmatprep.mubr.f32.mxu0 0.0
    %206 = vmatmul.mubr.f32.gmra.mxu0 %v134
    %v207 = vpop.f32.mrf.mxu0
    %v208 = vadd.f32 %v128, %v207
    %v209 = vpop.f32.mrf.mxu0
    %210 = vdwg.mxu0
    %v211 = vld [vmem:[%s4] sm:$0xff]
    %v212 = vld [vmem:[%s4 + $0x8] sm:$0xff]
    %v213 = vld [vmem:[%s4 + $0x10] sm:$0xff]
    %v214 = vld [vmem:[%s4 + $0x18] sm:$0xff]
    %v215 = vld [vmem:[%s7] sm:$0x1]
    %v217 = vlaneseq
    %v218 = vshrl.u32 %v217, 7
    %v219 = vsub.s32 0, %v218
    %v220 = vrot.slane %v215, %v219
    %222 = vmatprep.subr.mxu0 0.0
    %223 = vmatpush1.msra.mxu0 0.0
    %224 = vmatprep.subr.mxu0 0.0
    %225 = vmatpush1.msra.mxu0 0.0
    %226 = vmatprep.subr.mxu0 0.0
    %227 = vmatpush1.msra.mxu0 0.0
    %228 = vmatprep.subr.mxu0 0.0
    %229 = vmatpush1.msra.mxu0 0.0
    %230 = vmatprep.subr.mxu0 0.0
    %231 = vmatpush1.msra.mxu0 0.0
    %232 = vmatprep.subr.mxu0 0.0
    %233 = vmatpush1.msra.mxu0 0.0
    %234 = vmatprep.subr.mxu0 0.0
    %235 = vmatpush1.msra.mxu0 0.0
    %236 = vmatprep.subr.mxu0 0.0
    %237 = vmatpush1.msra.mxu0 0.0
    %238 = vmatprep.subr.mxu0 0.0
    %239 = vmatpush1.msra.mxu0 0.0
    %240 = vmatprep.subr.mxu0 0.0
    %241 = vmatpush1.msra.mxu0 0.0
    %242 = vmatprep.subr.mxu0 0.0
    %243 = vmatpush1.msra.mxu0 0.0
    %244 = vmatprep.subr.mxu0 0.0
    %245 = vmatpush1.msra.mxu0 0.0
    %246 = vmatprep.subr.mxu0 0.0
    %247 = vmatpush1.msra.mxu0 %v214
    %248 = vmatprep.subr.mxu0 0.0
    %249 = vmatpush1.msra.mxu0 %v213
    %250 = vmatprep.subr.mxu0 0.0
    %251 = vmatpush1.msra.mxu0 %v212
    %252 = vmatprep.subr.mxu0 0.0
    %253 = vmatpush1.msra.mxu0 %v211
    %254 = vmatprep.subr.mxu0 0.0
    %255 = vmatpush2.msra.mxu0 0.0
    %256 = vmatprep.subr.mxu0 0.0
    %257 = vmatpush2.msra.mxu0 0.0
    %258 = vmatprep.subr.mxu0 0.0
    %259 = vmatpush2.msra.mxu0 0.0
    %260 = vmatprep.subr.mxu0 0.0
    %261 = vmatpush2.msra.mxu0 0.0
    %262 = vmatprep.subr.mxu0 0.0
    %263 = vmatpush2.msra.mxu0 0.0
    %264 = vmatprep.subr.mxu0 0.0
    %265 = vmatpush2.msra.mxu0 0.0
    %266 = vmatprep.subr.mxu0 0.0
    %267 = vmatpush2.msra.mxu0 0.0
    %268 = vmatprep.subr.mxu0 0.0
    %269 = vmatpush2.msra.mxu0 0.0
    %270 = vmatprep.subr.mxu0 0.0
    %271 = vmatpush2.msra.mxu0 0.0
    %272 = vmatprep.subr.mxu0 0.0
    %273 = vmatpush2.msra.mxu0 0.0
    %274 = vmatprep.subr.mxu0 0.0
    %275 = vmatpush2.msra.mxu0 0.0
    %276 = vmatprep.subr.mxu0 0.0
    %277 = vmatpush2.msra.mxu0 0.0
    %278 = vmatprep.subr.mxu0 0.0
    %279 = vmatpush2.msra.mxu0 0.0
    %280 = vmatprep.subr.mxu0 0.0
    %281 = vmatpush2.msra.mxu0 0.0
    %282 = vmatprep.subr.mxu0 0.0
    %283 = vmatpush2.msra.mxu0 0.0
    %284 = vmatprep.subr.mxu0 0.0
    %285 = vmatpush2.msra.mxu0 0.0
    %286 = vmatprep.mubr.f32.mxu0 0.0
    %287 = vmatmul.mubr.f32.gmra.mxu0 %v131
    %v288 = vpop.f32.mrf.mxu0
    %v289 = vadd.f32 %v220, %v288
    %v290 = vpop.f32.mrf.mxu0
    %291 = vmatprep.mubr.f32.mxu0 0.0
    %292 = vmatmul.mubr.f32.gmra.mxu0 %v134
    %v293 = vpop.f32.mrf.mxu0
    %v294 = vadd.f32 %v220, %v293
    %v295 = vpop.f32.mrf.mxu0
    %296 = vdwg.mxu0
    %v297 = vld [vmem:[%s5] sm:$0xff]
    %v298 = vld [vmem:[%s5 + $0x8] sm:$0xff]
    %v299 = vld [vmem:[%s5 + $0x10] sm:$0xff]
    %v300 = vld [vmem:[%s5 + $0x18] sm:$0xff]
    %v301 = vld [vmem:[%s8] sm:$0x1]
    %v303 = vlaneseq
    %v304 = vshrl.u32 %v303, 7
    %v305 = vsub.s32 0, %v304
    %v306 = vrot.slane %v301, %v305
    %308 = vmatprep.subr.mxu0 0.0
    %309 = vmatpush1.msra.mxu0 0.0
    %310 = vmatprep.subr.mxu0 0.0
    %311 = vmatpush1.msra.mxu0 0.0
    %312 = vmatprep.subr.mxu0 0.0
    %313 = vmatpush1.msra.mxu0 0.0
    %314 = vmatprep.subr.mxu0 0.0
    %315 = vmatpush1.msra.mxu0 0.0
    %316 = vmatprep.subr.mxu0 0.0
    %317 = vmatpush1.msra.mxu0 0.0
    %318 = vmatprep.subr.mxu0 0.0
    %319 = vmatpush1.msra.mxu0 0.0
    %320 = vmatprep.subr.mxu0 0.0
    %321 = vmatpush1.msra.mxu0 0.0
    %322 = vmatprep.subr.mxu0 0.0
    %323 = vmatpush1.msra.mxu0 0.0
    %324 = vmatprep.subr.mxu0 0.0
    %325 = vmatpush1.msra.mxu0 0.0
    %326 = vmatprep.subr.mxu0 0.0
    %327 = vmatpush1.msra.mxu0 0.0
    %328 = vmatprep.subr.mxu0 0.0
    %329 = vmatpush1.msra.mxu0 0.0
    %330 = vmatprep.subr.mxu0 0.0
    %331 = vmatpush1.msra.mxu0 0.0
    %332 = vmatprep.subr.mxu0 0.0
    %333 = vmatpush1.msra.mxu0 %v300
    %334 = vmatprep.subr.mxu0 0.0
    %335 = vmatpush1.msra.mxu0 %v299
    %336 = vmatprep.subr.mxu0 0.0
    %337 = vmatpush1.msra.mxu0 %v298
    %338 = vmatprep.subr.mxu0 0.0
    %339 = vmatpush1.msra.mxu0 %v297
    %340 = vmatprep.subr.mxu0 0.0
    %341 = vmatpush2.msra.mxu0 0.0
    %342 = vmatprep.subr.mxu0 0.0
    %343 = vmatpush2.msra.mxu0 0.0
    %344 = vmatprep.subr.mxu0 0.0
    %345 = vmatpush2.msra.mxu0 0.0
    %346 = vmatprep.subr.mxu0 0.0
    %347 = vmatpush2.msra.mxu0 0.0
    %348 = vmatprep.subr.mxu0 0.0
    %349 = vmatpush2.msra.mxu0 0.0
    %350 = vmatprep.subr.mxu0 0.0
    %351 = vmatpush2.msra.mxu0 0.0
    %352 = vmatprep.subr.mxu0 0.0
    %353 = vmatpush2.msra.mxu0 0.0
    %354 = vmatprep.subr.mxu0 0.0
    %355 = vmatpush2.msra.mxu0 0.0
    %356 = vmatprep.subr.mxu0 0.0
    %357 = vmatpush2.msra.mxu0 0.0
    %358 = vmatprep.subr.mxu0 0.0
    %359 = vmatpush2.msra.mxu0 0.0
    %360 = vmatprep.subr.mxu0 0.0
    %361 = vmatpush2.msra.mxu0 0.0
    %362 = vmatprep.subr.mxu0 0.0
    %363 = vmatpush2.msra.mxu0 0.0
    %364 = vmatprep.subr.mxu0 0.0
    %365 = vmatpush2.msra.mxu0 0.0
    %366 = vmatprep.subr.mxu0 0.0
    %367 = vmatpush2.msra.mxu0 0.0
    %368 = vmatprep.subr.mxu0 0.0
    %369 = vmatpush2.msra.mxu0 0.0
    %370 = vmatprep.subr.mxu0 0.0
    %371 = vmatpush2.msra.mxu0 0.0
    %372 = vmatprep.mubr.f32.mxu0 0.0
    %373 = vmatmul.mubr.f32.gmra.mxu0 %v131
    %v374 = vpop.f32.mrf.mxu0
    %v375 = vadd.f32 %v306, %v374
    %v376 = vpop.f32.mrf.mxu0
    %377 = vmatprep.mubr.f32.mxu0 0.0
    %378 = vmatmul.mubr.f32.gmra.mxu0 %v134
    %v379 = vpop.f32.mrf.mxu0
    %v380 = vadd.f32 %v306, %v379
    %v381 = vpop.f32.mrf.mxu0
    %382 = vdwg.mxu0
    %v383 = vmul.f32 %v203, 0.35355338
    %v384 = vmul.f32 %v208, 0.35355338
    %vm385 = vcmask 64512
    %v387 = vsel %vm385, %v383, 0
    %v390 = vsel %vm385, %v289, 0
    %392 = vmatprep.subr.mxu0 0.0
    %393 = vmatpush1.xpose.msra.mxu0 0.0
    %394 = vmatprep.subr.mxu0 0.0
    %395 = vmatpush1.xpose.msra.mxu0 0.0
    %396 = vmatprep.subr.mxu0 0.0
    %397 = vmatpush1.xpose.msra.mxu0 0.0
    %398 = vmatprep.subr.mxu0 0.0
    %399 = vmatpush1.xpose.msra.mxu0 0.0
    %400 = vmatprep.subr.mxu0 0.0
    %401 = vmatpush1.xpose.msra.mxu0 0.0
    %402 = vmatprep.subr.mxu0 0.0
    %403 = vmatpush1.xpose.msra.mxu0 0.0
    %404 = vmatprep.subr.mxu0 0.0
    %405 = vmatpush1.xpose.msra.mxu0 0.0
    %406 = vmatprep.subr.mxu0 0.0
    %407 = vmatpush1.xpose.msra.mxu0 0.0
    %408 = vmatprep.subr.mxu0 0.0
    %409 = vmatpush1.xpose.msra.mxu0 0.0
    %410 = vmatprep.subr.mxu0 0.0
    %411 = vmatpush1.xpose.msra.mxu0 0.0
    %412 = vmatprep.subr.mxu0 0.0
    %413 = vmatpush1.xpose.msra.mxu0 0.0
    %414 = vmatprep.subr.mxu0 0.0
    %415 = vmatpush1.xpose.msra.mxu0 0.0
    %416 = vmatprep.subr.mxu0 0.0
    %417 = vmatpush1.xpose.msra.mxu0 0.0
    %418 = vmatprep.subr.mxu0 0.0
    %419 = vmatpush1.xpose.msra.mxu0 0.0
    %420 = vmatprep.subr.mxu0 0.0
    %421 = vmatpush1.xpose.msra.mxu0 0.0
    %422 = vmatprep.subr.mxu0 0.0
    %423 = vmatpush1.xpose.msra.mxu0 %v390
    %424 = vmatprep.subr.mxu0 0.0
    %425 = vmatpush2.xpose.msra.mxu0 0.0
    %426 = vmatprep.subr.mxu0 0.0
    %427 = vmatpush2.xpose.msra.mxu0 0.0
    %428 = vmatprep.subr.mxu0 0.0
    %429 = vmatpush2.xpose.msra.mxu0 0.0
    %430 = vmatprep.subr.mxu0 0.0
    %431 = vmatpush2.xpose.msra.mxu0 0.0
    %432 = vmatprep.subr.mxu0 0.0
    %433 = vmatpush2.xpose.msra.mxu0 0.0
    %434 = vmatprep.subr.mxu0 0.0
    %435 = vmatpush2.xpose.msra.mxu0 0.0
    %436 = vmatprep.subr.mxu0 0.0
    %437 = vmatpush2.xpose.msra.mxu0 0.0
    %438 = vmatprep.subr.mxu0 0.0
    %439 = vmatpush2.xpose.msra.mxu0 0.0
    %440 = vmatprep.subr.mxu0 0.0
    %441 = vmatpush2.xpose.msra.mxu0 0.0
    %442 = vmatprep.subr.mxu0 0.0
    %443 = vmatpush2.xpose.msra.mxu0 0.0
    %444 = vmatprep.subr.mxu0 0.0
    %445 = vmatpush2.xpose.msra.mxu0 0.0
    %446 = vmatprep.subr.mxu0 0.0
    %447 = vmatpush2.xpose.msra.mxu0 0.0
    %448 = vmatprep.subr.mxu0 0.0
    %449 = vmatpush2.xpose.msra.mxu0 0.0
    %450 = vmatprep.subr.mxu0 0.0
    %451 = vmatpush2.xpose.msra.mxu0 0.0
    %452 = vmatprep.subr.mxu0 0.0
    %453 = vmatpush2.xpose.msra.mxu0 0.0
    %454 = vmatprep.subr.mxu0 0.0
    %455 = vmatpush2.xpose.msra.mxu0 0.0
    %456 = vmatprep.mubr.f32.mxu0 0.0
    %457 = vmatmul.mubr.f32.gmra.mxu0 %v387
    %v458 = vpop.f32.mrf.mxu0
    %v459 = vadd.f32 0.0, %v458
    %v460 = vpop.f32.mrf.mxu0
    %461 = vdwg.mxu0
    %v463 = vsel %vm385, %v384, 0
    %v466 = vsel %vm385, %v294, 0
    %468 = vmatprep.subr.mxu0 0.0
    %469 = vmatpush1.xpose.msra.mxu0 0.0
    %470 = vmatprep.subr.mxu0 0.0
    %471 = vmatpush1.xpose.msra.mxu0 0.0
    %472 = vmatprep.subr.mxu0 0.0
    %473 = vmatpush1.xpose.msra.mxu0 0.0
    %474 = vmatprep.subr.mxu0 0.0
    %475 = vmatpush1.xpose.msra.mxu0 0.0
    %476 = vmatprep.subr.mxu0 0.0
    %477 = vmatpush1.xpose.msra.mxu0 0.0
    %478 = vmatprep.subr.mxu0 0.0
    %479 = vmatpush1.xpose.msra.mxu0 0.0
    %480 = vmatprep.subr.mxu0 0.0
    %481 = vmatpush1.xpose.msra.mxu0 0.0
    %482 = vmatprep.subr.mxu0 0.0
    %483 = vmatpush1.xpose.msra.mxu0 0.0
    %484 = vmatprep.subr.mxu0 0.0
    %485 = vmatpush1.xpose.msra.mxu0 0.0
    %486 = vmatprep.subr.mxu0 0.0
    %487 = vmatpush1.xpose.msra.mxu0 0.0
    %488 = vmatprep.subr.mxu0 0.0
    %489 = vmatpush1.xpose.msra.mxu0 0.0
    %490 = vmatprep.subr.mxu0 0.0
    %491 = vmatpush1.xpose.msra.mxu0 0.0
    %492 = vmatprep.subr.mxu0 0.0
    %493 = vmatpush1.xpose.msra.mxu0 0.0
    %494 = vmatprep.subr.mxu0 0.0
    %495 = vmatpush1.xpose.msra.mxu0 0.0
    %496 = vmatprep.subr.mxu0 0.0
    %497 = vmatpush1.xpose.msra.mxu0 0.0
    %498 = vmatprep.subr.mxu0 0.0
    %499 = vmatpush1.xpose.msra.mxu0 %v466
    %500 = vmatprep.subr.mxu0 0.0
    %501 = vmatpush2.xpose.msra.mxu0 0.0
    %502 = vmatprep.subr.mxu0 0.0
    %503 = vmatpush2.xpose.msra.mxu0 0.0
    %504 = vmatprep.subr.mxu0 0.0
    %505 = vmatpush2.xpose.msra.mxu0 0.0
    %506 = vmatprep.subr.mxu0 0.0
    %507 = vmatpush2.xpose.msra.mxu0 0.0
    %508 = vmatprep.subr.mxu0 0.0
    %509 = vmatpush2.xpose.msra.mxu0 0.0
    %510 = vmatprep.subr.mxu0 0.0
    %511 = vmatpush2.xpose.msra.mxu0 0.0
    %512 = vmatprep.subr.mxu0 0.0
    %513 = vmatpush2.xpose.msra.mxu0 0.0
    %514 = vmatprep.subr.mxu0 0.0
    %515 = vmatpush2.xpose.msra.mxu0 0.0
    %516 = vmatprep.subr.mxu0 0.0
    %517 = vmatpush2.xpose.msra.mxu0 0.0
    %518 = vmatprep.subr.mxu0 0.0
    %519 = vmatpush2.xpose.msra.mxu0 0.0
    %520 = vmatprep.subr.mxu0 0.0
    %521 = vmatpush2.xpose.msra.mxu0 0.0
    %522 = vmatprep.subr.mxu0 0.0
    %523 = vmatpush2.xpose.msra.mxu0 0.0
    %524 = vmatprep.subr.mxu0 0.0
    %525 = vmatpush2.xpose.msra.mxu0 0.0
    %526 = vmatprep.subr.mxu0 0.0
    %527 = vmatpush2.xpose.msra.mxu0 0.0
    %528 = vmatprep.subr.mxu0 0.0
    %529 = vmatpush2.xpose.msra.mxu0 0.0
    %530 = vmatprep.subr.mxu0 0.0
    %531 = vmatpush2.xpose.msra.mxu0 0.0
    %532 = vmatprep.mubr.f32.mxu0 0.0
    %533 = vmatmul.mubr.f32.gmra.mxu0 %v463
    %v534 = vpop.f32.mrf.mxu0
    %v535 = vadd.f32 0.0, %v534
    %v536 = vpop.f32.mrf.mxu0
    %537 = vdwg.mxu0
    %v538 = vsel %vm385, %v459, -inf
    %539 = vmax.xlane.f32.xlu0 %v538
    %v540 = vpop.xlane.xlu0 %539
    %v541 = vsel %vm385, %v535, -inf
    %542 = vmax.xlane.f32.xlu0 %v541
    %v543 = vpop.xlane.xlu0 %542
    %v544 = vsub.f32 %v459, %v540
    %v545 = vsub.f32 %v535, %v543
    %v546 = vmul.f32 %v544, 1.442695
    %v547 = vpow.pop %v546
    %v548 = vmul.f32 %v545, 1.442695
    %v549 = vpow.pop %v548
    %v550 = vsel %vm385, %v547, 0.0
    %551 = vadd.xlane.f32.xlu0 %v550
    %v552 = vpop.xlane.xlu0 %551
    %v553 = vsel %vm385, %v549, 0.0
    %554 = vadd.xlane.f32.xlu0 %v553
    %v555 = vpop.xlane.xlu0 %554
    %v556 = vrcp.pop %v552
    %v557 = vrcp.pop %v555
    %v558 = vmul.f32 %v547, %v556
    %v559 = vmul.f32 %v549, %v557
    %v561 = vsel %vm385, %v558, 0
    %563 = vmatprep.subr.mxu0 0.0
    %564 = vmatpush1.msra.mxu0 0.0
    %565 = vmatprep.subr.mxu0 0.0
    %566 = vmatpush1.msra.mxu0 0.0
    %567 = vmatprep.subr.mxu0 0.0
    %568 = vmatpush1.msra.mxu0 0.0
    %569 = vmatprep.subr.mxu0 0.0
    %570 = vmatpush1.msra.mxu0 0.0
    %571 = vmatprep.subr.mxu0 0.0
    %572 = vmatpush1.msra.mxu0 0.0
    %573 = vmatprep.subr.mxu0 0.0
    %574 = vmatpush1.msra.mxu0 0.0
    %575 = vmatprep.subr.mxu0 0.0
    %576 = vmatpush1.msra.mxu0 0.0
    %577 = vmatprep.subr.mxu0 0.0
    %578 = vmatpush1.msra.mxu0 0.0
    %579 = vmatprep.subr.mxu0 0.0
    %580 = vmatpush1.msra.mxu0 0.0
    %581 = vmatprep.subr.mxu0 0.0
    %582 = vmatpush1.msra.mxu0 0.0
    %583 = vmatprep.subr.mxu0 0.0
    %584 = vmatpush1.msra.mxu0 0.0
    %585 = vmatprep.subr.mxu0 0.0
    %586 = vmatpush1.msra.mxu0 0.0
    %587 = vmatprep.subr.mxu0 0.0
    %588 = vmatpush1.msra.mxu0 0.0
    %589 = vmatprep.subr.mxu0 0.0
    %590 = vmatpush1.msra.mxu0 0.0
    %591 = vmatprep.subr.mxu0 0.0
    %592 = vmatpush1.msra.mxu0 0.0
    %593 = vmatprep.subr.mxu0 0.0
    %594 = vmatpush1.msra.mxu0 %v375
    %595 = vmatprep.subr.mxu0 0.0
    %596 = vmatpush2.msra.mxu0 0.0
    %597 = vmatprep.subr.mxu0 0.0
    %598 = vmatpush2.msra.mxu0 0.0
    %599 = vmatprep.subr.mxu0 0.0
    %600 = vmatpush2.msra.mxu0 0.0
    %601 = vmatprep.subr.mxu0 0.0
    %602 = vmatpush2.msra.mxu0 0.0
    %603 = vmatprep.subr.mxu0 0.0
    %604 = vmatpush2.msra.mxu0 0.0
    %605 = vmatprep.subr.mxu0 0.0
    %606 = vmatpush2.msra.mxu0 0.0
    %607 = vmatprep.subr.mxu0 0.0
    %608 = vmatpush2.msra.mxu0 0.0
    %609 = vmatprep.subr.mxu0 0.0
    %610 = vmatpush2.msra.mxu0 0.0
    %611 = vmatprep.subr.mxu0 0.0
    %612 = vmatpush2.msra.mxu0 0.0
    %613 = vmatprep.subr.mxu0 0.0
    %614 = vmatpush2.msra.mxu0 0.0
    %615 = vmatprep.subr.mxu0 0.0
    %616 = vmatpush2.msra.mxu0 0.0
    %617 = vmatprep.subr.mxu0 0.0
    %618 = vmatpush2.msra.mxu0 0.0
    %619 = vmatprep.subr.mxu0 0.0
    %620 = vmatpush2.msra.mxu0 0.0
    %621 = vmatprep.subr.mxu0 0.0
    %622 = vmatpush2.msra.mxu0 0.0
    %623 = vmatprep.subr.mxu0 0.0
    %624 = vmatpush2.msra.mxu0 0.0
    %625 = vmatprep.subr.mxu0 0.0
    %626 = vmatpush2.msra.mxu0 0.0
    %627 = vmatprep.mubr.f32.mxu0 0.0
    %628 = vmatmul.mubr.f32.gmra.mxu0 %v561
    %v629 = vpop.f32.mrf.mxu0
    %v630 = vadd.f32 0.0, %v629
    %v631 = vpop.f32.mrf.mxu0
    %632 = vdwg.mxu0
    %v634 = vsel %vm385, %v559, 0
    %636 = vmatprep.subr.mxu0 0.0
    %637 = vmatpush1.msra.mxu0 0.0
    %638 = vmatprep.subr.mxu0 0.0
    %639 = vmatpush1.msra.mxu0 0.0
    %640 = vmatprep.subr.mxu0 0.0
    %641 = vmatpush1.msra.mxu0 0.0
    %642 = vmatprep.subr.mxu0 0.0
    %643 = vmatpush1.msra.mxu0 0.0
    %644 = vmatprep.subr.mxu0 0.0
    %645 = vmatpush1.msra.mxu0 0.0
    %646 = vmatprep.subr.mxu0 0.0
    %647 = vmatpush1.msra.mxu0 0.0
    %648 = vmatprep.subr.mxu0 0.0
    %649 = vmatpush1.msra.mxu0 0.0
    %650 = vmatprep.subr.mxu0 0.0
    %651 = vmatpush1.msra.mxu0 0.0
    %652 = vmatprep.subr.mxu0 0.0
    %653 = vmatpush1.msra.mxu0 0.0
    %654 = vmatprep.subr.mxu0 0.0
    %655 = vmatpush1.msra.mxu0 0.0
    %656 = vmatprep.subr.mxu0 0.0
    %657 = vmatpush1.msra.mxu0 0.0
    %658 = vmatprep.subr.mxu0 0.0
    %659 = vmatpush1.msra.mxu0 0.0
    %660 = vmatprep.subr.mxu0 0.0
    %661 = vmatpush1.msra.mxu0 0.0
    %662 = vmatprep.subr.mxu0 0.0
    %663 = vmatpush1.msra.mxu0 0.0
    %664 = vmatprep.subr.mxu0 0.0
    %665 = vmatpush1.msra.mxu0 0.0
    %666 = vmatprep.subr.mxu0 0.0
    %667 = vmatpush1.msra.mxu0 %v380
    %668 = vmatprep.subr.mxu0 0.0
    %669 = vmatpush2.msra.mxu0 0.0
    %670 = vmatprep.subr.mxu0 0.0
    %671 = vmatpush2.msra.mxu0 0.0
    %672 = vmatprep.subr.mxu0 0.0
    %673 = vmatpush2.msra.mxu0 0.0
    %674 = vmatprep.subr.mxu0 0.0
    %675 = vmatpush2.msra.mxu0 0.0
    %676 = vmatprep.subr.mxu0 0.0
    %677 = vmatpush2.msra.mxu0 0.0
    %678 = vmatprep.subr.mxu0 0.0
    %679 = vmatpush2.msra.mxu0 0.0
    %680 = vmatprep.subr.mxu0 0.0
    %681 = vmatpush2.msra.mxu0 0.0
    %682 = vmatprep.subr.mxu0 0.0
    %683 = vmatpush2.msra.mxu0 0.0
    %684 = vmatprep.subr.mxu0 0.0
    %685 = vmatpush2.msra.mxu0 0.0
    %686 = vmatprep.subr.mxu0 0.0
    %687 = vmatpush2.msra.mxu0 0.0
    %688 = vmatprep.subr.mxu0 0.0
    %689 = vmatpush2.msra.mxu0 0.0
    %690 = vmatprep.subr.mxu0 0.0
    %691 = vmatpush2.msra.mxu0 0.0
    %692 = vmatprep.subr.mxu0 0.0
    %693 = vmatpush2.msra.mxu0 0.0
    %694 = vmatprep.subr.mxu0 0.0
    %695 = vmatpush2.msra.mxu0 0.0
    %696 = vmatprep.subr.mxu0 0.0
    %697 = vmatpush2.msra.mxu0 0.0
    %698 = vmatprep.subr.mxu0 0.0
    %699 = vmatpush2.msra.mxu0 0.0
    %700 = vmatprep.mubr.f32.mxu0 0.0
    %701 = vmatmul.mubr.f32.gmra.mxu0 %v634
    %v702 = vpop.f32.mrf.mxu0
    %v703 = vadd.f32 0.0, %v702
    %v704 = vpop.f32.mrf.mxu0
    %705 = vdwg.mxu0
    %v706 = vld [vmem:[%s9] sm:$0xff]
    %707 = vrot.lane.b32.xlu0 %v383, 120
    %v708 = vpop.permute.xlu0 %707
    %709 = vrot.lane.b32.xlu0 %v289, 120
    %v710 = vpop.permute.xlu0 %709
    %v711 = vsel %vm385, %v708, 0
    %v713 = vsel %vm385, %v710, 0
    %715 = vmatprep.subr.mxu0 0.0
    %716 = vmatpush1.xpose.msra.mxu0 0.0
    %717 = vmatprep.subr.mxu0 0.0
    %718 = vmatpush1.xpose.msra.mxu0 0.0
    %719 = vmatprep.subr.mxu0 0.0
    %720 = vmatpush1.xpose.msra.mxu0 0.0
    %721 = vmatprep.subr.mxu0 0.0
    %722 = vmatpush1.xpose.msra.mxu0 0.0
    %723 = vmatprep.subr.mxu0 0.0
    %724 = vmatpush1.xpose.msra.mxu0 0.0
    %725 = vmatprep.subr.mxu0 0.0
    %726 = vmatpush1.xpose.msra.mxu0 0.0
    %727 = vmatprep.subr.mxu0 0.0
    %728 = vmatpush1.xpose.msra.mxu0 0.0
    %729 = vmatprep.subr.mxu0 0.0
    %730 = vmatpush1.xpose.msra.mxu0 0.0
    %731 = vmatprep.subr.mxu0 0.0
    %732 = vmatpush1.xpose.msra.mxu0 0.0
    %733 = vmatprep.subr.mxu0 0.0
    %734 = vmatpush1.xpose.msra.mxu0 0.0
    %735 = vmatprep.subr.mxu0 0.0
    %736 = vmatpush1.xpose.msra.mxu0 0.0
    %737 = vmatprep.subr.mxu0 0.0
    %738 = vmatpush1.xpose.msra.mxu0 0.0
    %739 = vmatprep.subr.mxu0 0.0
    %740 = vmatpush1.xpose.msra.mxu0 0.0
    %741 = vmatprep.subr.mxu0 0.0
    %742 = vmatpush1.xpose.msra.mxu0 0.0
    %743 = vmatprep.subr.mxu0 0.0
    %744 = vmatpush1.xpose.msra.mxu0 0.0
    %745 = vmatprep.subr.mxu0 0.0
    %746 = vmatpush1.xpose.msra.mxu0 %v713
    %747 = vmatprep.subr.mxu0 0.0
    %748 = vmatpush2.xpose.msra.mxu0 0.0
    %749 = vmatprep.subr.mxu0 0.0
    %750 = vmatpush2.xpose.msra.mxu0 0.0
    %751 = vmatprep.subr.mxu0 0.0
    %752 = vmatpush2.xpose.msra.mxu0 0.0
    %753 = vmatprep.subr.mxu0 0.0
    %754 = vmatpush2.xpose.msra.mxu0 0.0
    %755 = vmatprep.subr.mxu0 0.0
    %756 = vmatpush2.xpose.msra.mxu0 0.0
    %757 = vmatprep.subr.mxu0 0.0
    %758 = vmatpush2.xpose.msra.mxu0 0.0
    %759 = vmatprep.subr.mxu0 0.0
    %760 = vmatpush2.xpose.msra.mxu0 0.0
    %761 = vmatprep.subr.mxu0 0.0
    %762 = vmatpush2.xpose.msra.mxu0 0.0
    %763 = vmatprep.subr.mxu0 0.0
    %764 = vmatpush2.xpose.msra.mxu0 0.0
    %765 = vmatprep.subr.mxu0 0.0
    %766 = vmatpush2.xpose.msra.mxu0 0.0
    %767 = vmatprep.subr.mxu0 0.0
    %768 = vmatpush2.xpose.msra.mxu0 0.0
    %769 = vmatprep.subr.mxu0 0.0
    %770 = vmatpush2.xpose.msra.mxu0 0.0
    %771 = vmatprep.subr.mxu0 0.0
    %772 = vmatpush2.xpose.msra.mxu0 0.0
    %773 = vmatprep.subr.mxu0 0.0
    %774 = vmatpush2.xpose.msra.mxu0 0.0
    %775 = vmatprep.subr.mxu0 0.0
    %776 = vmatpush2.xpose.msra.mxu0 0.0
    %777 = vmatprep.subr.mxu0 0.0
    %778 = vmatpush2.xpose.msra.mxu0 0.0
    %779 = vmatprep.mubr.f32.mxu0 0.0
    %780 = vmatmul.mubr.f32.gmra.mxu0 %v711
    %v781 = vpop.f32.mrf.mxu0
    %v782 = vadd.f32 0.0, %v781
    %v783 = vpop.f32.mrf.mxu0
    %784 = vdwg.mxu0
    %785 = vrot.lane.b32.xlu0 %v384, 120
    %v786 = vpop.permute.xlu0 %785
    %787 = vrot.lane.b32.xlu0 %v294, 120
    %v788 = vpop.permute.xlu0 %787
    %v789 = vsel %vm385, %v786, 0
    %v791 = vsel %vm385, %v788, 0
    %793 = vmatprep.subr.mxu0 0.0
    %794 = vmatpush1.xpose.msra.mxu0 0.0
    %795 = vmatprep.subr.mxu0 0.0
    %796 = vmatpush1.xpose.msra.mxu0 0.0
    %797 = vmatprep.subr.mxu0 0.0
    %798 = vmatpush1.xpose.msra.mxu0 0.0
    %799 = vmatprep.subr.mxu0 0.0
    %800 = vmatpush1.xpose.msra.mxu0 0.0
    %801 = vmatprep.subr.mxu0 0.0
    %802 = vmatpush1.xpose.msra.mxu0 0.0
    %803 = vmatprep.subr.mxu0 0.0
    %804 = vmatpush1.xpose.msra.mxu0 0.0
    %805 = vmatprep.subr.mxu0 0.0
    %806 = vmatpush1.xpose.msra.mxu0 0.0
    %807 = vmatprep.subr.mxu0 0.0
    %808 = vmatpush1.xpose.msra.mxu0 0.0
    %809 = vmatprep.subr.mxu0 0.0
    %810 = vmatpush1.xpose.msra.mxu0 0.0
    %811 = vmatprep.subr.mxu0 0.0
    %812 = vmatpush1.xpose.msra.mxu0 0.0
    %813 = vmatprep.subr.mxu0 0.0
    %814 = vmatpush1.xpose.msra.mxu0 0.0
    %815 = vmatprep.subr.mxu0 0.0
    %816 = vmatpush1.xpose.msra.mxu0 0.0
    %817 = vmatprep.subr.mxu0 0.0
    %818 = vmatpush1.xpose.msra.mxu0 0.0
    %819 = vmatprep.subr.mxu0 0.0
    %820 = vmatpush1.xpose.msra.mxu0 0.0
    %821 = vmatprep.subr.mxu0 0.0
    %822 = vmatpush1.xpose.msra.mxu0 0.0
    %823 = vmatprep.subr.mxu0 0.0
    %824 = vmatpush1.xpose.msra.mxu0 %v791
    %825 = vmatprep.subr.mxu0 0.0
    %826 = vmatpush2.xpose.msra.mxu0 0.0
    %827 = vmatprep.subr.mxu0 0.0
    %828 = vmatpush2.xpose.msra.mxu0 0.0
    %829 = vmatprep.subr.mxu0 0.0
    %830 = vmatpush2.xpose.msra.mxu0 0.0
    %831 = vmatprep.subr.mxu0 0.0
    %832 = vmatpush2.xpose.msra.mxu0 0.0
    %833 = vmatprep.subr.mxu0 0.0
    %834 = vmatpush2.xpose.msra.mxu0 0.0
    %835 = vmatprep.subr.mxu0 0.0
    %836 = vmatpush2.xpose.msra.mxu0 0.0
    %837 = vmatprep.subr.mxu0 0.0
    %838 = vmatpush2.xpose.msra.mxu0 0.0
    %839 = vmatprep.subr.mxu0 0.0
    %840 = vmatpush2.xpose.msra.mxu0 0.0
    %841 = vmatprep.subr.mxu0 0.0
    %842 = vmatpush2.xpose.msra.mxu0 0.0
    %843 = vmatprep.subr.mxu0 0.0
    %844 = vmatpush2.xpose.msra.mxu0 0.0
    %845 = vmatprep.subr.mxu0 0.0
    %846 = vmatpush2.xpose.msra.mxu0 0.0
    %847 = vmatprep.subr.mxu0 0.0
    %848 = vmatpush2.xpose.msra.mxu0 0.0
    %849 = vmatprep.subr.mxu0 0.0
    %850 = vmatpush2.xpose.msra.mxu0 0.0
    %851 = vmatprep.subr.mxu0 0.0
    %852 = vmatpush2.xpose.msra.mxu0 0.0
    %853 = vmatprep.subr.mxu0 0.0
    %854 = vmatpush2.xpose.msra.mxu0 0.0
    %855 = vmatprep.subr.mxu0 0.0
    %856 = vmatpush2.xpose.msra.mxu0 0.0
    %857 = vmatprep.mubr.f32.mxu0 0.0
    %858 = vmatmul.mubr.f32.gmra.mxu0 %v789
    %v859 = vpop.f32.mrf.mxu0
    %v860 = vadd.f32 0.0, %v859
    %v861 = vpop.f32.mrf.mxu0
    %862 = vdwg.mxu0
    %v863 = vsel %vm385, %v782, -inf
    %864 = vmax.xlane.f32.xlu0 %v863
    %v865 = vpop.xlane.xlu0 %864
    %v866 = vsel %vm385, %v860, -inf
    %867 = vmax.xlane.f32.xlu0 %v866
    %v868 = vpop.xlane.xlu0 %867
    %v869 = vsub.f32 %v782, %v865
    %v870 = vsub.f32 %v860, %v868
    %v871 = vmul.f32 %v869, 1.442695
    %v872 = vpow.pop %v871
    %v873 = vmul.f32 %v870, 1.442695
    %v874 = vpow.pop %v873
    %v875 = vsel %vm385, %v872, 0.0
    %876 = vadd.xlane.f32.xlu0 %v875
    %v877 = vpop.xlane.xlu0 %876
    %v878 = vsel %vm385, %v874, 0.0
    %879 = vadd.xlane.f32.xlu0 %v878
    %v880 = vpop.xlane.xlu0 %879
    %v881 = vrcp.pop %v877
    %v882 = vrcp.pop %v880
    %v883 = vmul.f32 %v872, %v881
    %v884 = vmul.f32 %v874, %v882
    %886 = vrot.lane.b32.xlu0 %v375, 120
    %v887 = vpop.permute.xlu0 %886
    %v890 = vsel %vm385, %v883, 0
    %892 = vmatprep.subr.mxu0 0.0
    %893 = vmatpush1.msra.mxu0 0.0
    %894 = vmatprep.subr.mxu0 0.0
    %895 = vmatpush1.msra.mxu0 0.0
    %896 = vmatprep.subr.mxu0 0.0
    %897 = vmatpush1.msra.mxu0 0.0
    %898 = vmatprep.subr.mxu0 0.0
    %899 = vmatpush1.msra.mxu0 0.0
    %900 = vmatprep.subr.mxu0 0.0
    %901 = vmatpush1.msra.mxu0 0.0
    %902 = vmatprep.subr.mxu0 0.0
    %903 = vmatpush1.msra.mxu0 0.0
    %904 = vmatprep.subr.mxu0 0.0
    %905 = vmatpush1.msra.mxu0 0.0
    %906 = vmatprep.subr.mxu0 0.0
    %907 = vmatpush1.msra.mxu0 0.0
    %908 = vmatprep.subr.mxu0 0.0
    %909 = vmatpush1.msra.mxu0 0.0
    %910 = vmatprep.subr.mxu0 0.0
    %911 = vmatpush1.msra.mxu0 0.0
    %912 = vmatprep.subr.mxu0 0.0
    %913 = vmatpush1.msra.mxu0 0.0
    %914 = vmatprep.subr.mxu0 0.0
    %915 = vmatpush1.msra.mxu0 0.0
    %916 = vmatprep.subr.mxu0 0.0
    %917 = vmatpush1.msra.mxu0 0.0
    %918 = vmatprep.subr.mxu0 0.0
    %919 = vmatpush1.msra.mxu0 0.0
    %920 = vmatprep.subr.mxu0 0.0
    %921 = vmatpush1.msra.mxu0 0.0
    %922 = vmatprep.subr.mxu0 0.0
    %923 = vmatpush1.msra.mxu0 %v887
    %924 = vmatprep.subr.mxu0 0.0
    %925 = vmatpush2.msra.mxu0 0.0
    %926 = vmatprep.subr.mxu0 0.0
    %927 = vmatpush2.msra.mxu0 0.0
    %928 = vmatprep.subr.mxu0 0.0
    %929 = vmatpush2.msra.mxu0 0.0
    %930 = vmatprep.subr.mxu0 0.0
    %931 = vmatpush2.msra.mxu0 0.0
    %932 = vmatprep.subr.mxu0 0.0
    %933 = vmatpush2.msra.mxu0 0.0
    %934 = vmatprep.subr.mxu0 0.0
    %935 = vmatpush2.msra.mxu0 0.0
    %936 = vmatprep.subr.mxu0 0.0
    %937 = vmatpush2.msra.mxu0 0.0
    %938 = vmatprep.subr.mxu0 0.0
    %939 = vmatpush2.msra.mxu0 0.0
    %940 = vmatprep.subr.mxu0 0.0
    %941 = vmatpush2.msra.mxu0 0.0
    %942 = vmatprep.subr.mxu0 0.0
    %943 = vmatpush2.msra.mxu0 0.0
    %944 = vmatprep.subr.mxu0 0.0
    %945 = vmatpush2.msra.mxu0 0.0
    %946 = vmatprep.subr.mxu0 0.0
    %947 = vmatpush2.msra.mxu0 0.0
    %948 = vmatprep.subr.mxu0 0.0
    %949 = vmatpush2.msra.mxu0 0.0
    %950 = vmatprep.subr.mxu0 0.0
    %951 = vmatpush2.msra.mxu0 0.0
    %952 = vmatprep.subr.mxu0 0.0
    %953 = vmatpush2.msra.mxu0 0.0
    %954 = vmatprep.subr.mxu0 0.0
    %955 = vmatpush2.msra.mxu0 0.0
    %956 = vmatprep.mubr.f32.mxu0 0.0
    %957 = vmatmul.mubr.f32.gmra.mxu0 %v890
    %v958 = vpop.f32.mrf.mxu0
    %v959 = vadd.f32 0.0, %v958
    %v960 = vpop.f32.mrf.mxu0
    %961 = vdwg.mxu0
    %963 = vrot.lane.b32.xlu0 %v380, 120
    %v964 = vpop.permute.xlu0 %963
    %v967 = vsel %vm385, %v884, 0
    %969 = vmatprep.subr.mxu0 0.0
    %970 = vmatpush1.msra.mxu0 0.0
    %971 = vmatprep.subr.mxu0 0.0
    %972 = vmatpush1.msra.mxu0 0.0
    %973 = vmatprep.subr.mxu0 0.0
    %974 = vmatpush1.msra.mxu0 0.0
    %975 = vmatprep.subr.mxu0 0.0
    %976 = vmatpush1.msra.mxu0 0.0
    %977 = vmatprep.subr.mxu0 0.0
    %978 = vmatpush1.msra.mxu0 0.0
    %979 = vmatprep.subr.mxu0 0.0
    %980 = vmatpush1.msra.mxu0 0.0
    %981 = vmatprep.subr.mxu0 0.0
    %982 = vmatpush1.msra.mxu0 0.0
    %983 = vmatprep.subr.mxu0 0.0
    %984 = vmatpush1.msra.mxu0 0.0
    %985 = vmatprep.subr.mxu0 0.0
    %986 = vmatpush1.msra.mxu0 0.0
    %987 = vmatprep.subr.mxu0 0.0
    %988 = vmatpush1.msra.mxu0 0.0
    %989 = vmatprep.subr.mxu0 0.0
    %990 = vmatpush1.msra.mxu0 0.0
    %991 = vmatprep.subr.mxu0 0.0
    %992 = vmatpush1.msra.mxu0 0.0
    %993 = vmatprep.subr.mxu0 0.0
    %994 = vmatpush1.msra.mxu0 0.0
    %995 = vmatprep.subr.mxu0 0.0
    %996 = vmatpush1.msra.mxu0 0.0
    %997 = vmatprep.subr.mxu0 0.0
    %998 = vmatpush1.msra.mxu0 0.0
    %999 = vmatprep.subr.mxu0 0.0
    %1000 = vmatpush1.msra.mxu0 %v964
    %1001 = vmatprep.subr.mxu0 0.0
    %1002 = vmatpush2.msra.mxu0 0.0
    %1003 = vmatprep.subr.mxu0 0.0
    %1004 = vmatpush2.msra.mxu0 0.0
    %1005 = vmatprep.subr.mxu0 0.0
    %1006 = vmatpush2.msra.mxu0 0.0
    %1007 = vmatprep.subr.mxu0 0.0
    %1008 = vmatpush2.msra.mxu0 0.0
    %1009 = vmatprep.subr.mxu0 0.0
    %1010 = vmatpush2.msra.mxu0 0.0
    %1011 = vmatprep.subr.mxu0 0.0
    %1012 = vmatpush2.msra.mxu0 0.0
    %1013 = vmatprep.subr.mxu0 0.0
    %1014 = vmatpush2.msra.mxu0 0.0
    %1015 = vmatprep.subr.mxu0 0.0
    %1016 = vmatpush2.msra.mxu0 0.0
    %1017 = vmatprep.subr.mxu0 0.0
    %1018 = vmatpush2.msra.mxu0 0.0
    %1019 = vmatprep.subr.mxu0 0.0
    %1020 = vmatpush2.msra.mxu0 0.0
    %1021 = vmatprep.subr.mxu0 0.0
    %1022 = vmatpush2.msra.mxu0 0.0
    %1023 = vmatprep.subr.mxu0 0.0
    %1024 = vmatpush2.msra.mxu0 0.0
    %1025 = vmatprep.subr.mxu0 0.0
    %1026 = vmatpush2.msra.mxu0 0.0
    %1027 = vmatprep.subr.mxu0 0.0
    %1028 = vmatpush2.msra.mxu0 0.0
    %1029 = vmatprep.subr.mxu0 0.0
    %1030 = vmatpush2.msra.mxu0 0.0
    %1031 = vmatprep.subr.mxu0 0.0
    %1032 = vmatpush2.msra.mxu0 0.0
    %1033 = vmatprep.mubr.f32.mxu0 0.0
    %1034 = vmatmul.mubr.f32.gmra.mxu0 %v967
    %v1035 = vpop.f32.mrf.mxu0
    %v1036 = vadd.f32 0.0, %v1035
    %v1037 = vpop.f32.mrf.mxu0
    %1038 = vdwg.mxu0
    %s1039 = scalar_lea.vmem %s9, 8
    %v1040 = vld [vmem:[%s1039] sm:$0xff]
    %v1042 = vsel %vm385, %v959, 0
    %v1045 = vsel %vm385, %v1036, 0
    %1047 = vmatprep.subr.mxu0 0.0
    %1048 = vmatpush1.msra.mxu0 0.0
    %1049 = vmatprep.subr.mxu0 0.0
    %1050 = vmatpush1.msra.mxu0 0.0
    %1051 = vmatprep.subr.mxu0 0.0
    %1052 = vmatpush1.msra.mxu0 0.0
    %1053 = vmatprep.subr.mxu0 0.0
    %1054 = vmatpush1.msra.mxu0 0.0
    %1055 = vmatprep.subr.mxu0 0.0
    %1056 = vmatpush1.msra.mxu0 0.0
    %1057 = vmatprep.subr.mxu0 0.0
    %1058 = vmatpush1.msra.mxu0 0.0
    %1059 = vmatprep.subr.mxu0 0.0
    %1060 = vmatpush1.msra.mxu0 0.0
    %1061 = vmatprep.subr.mxu0 0.0
    %1062 = vmatpush1.msra.mxu0 0.0
    %1063 = vmatprep.subr.mxu0 0.0
    %1064 = vmatpush1.msra.mxu0 0.0
    %1065 = vmatprep.subr.mxu0 0.0
    %1066 = vmatpush1.msra.mxu0 0.0
    %1067 = vmatprep.subr.mxu0 0.0
    %1068 = vmatpush1.msra.mxu0 0.0
    %1069 = vmatprep.subr.mxu0 0.0
    %1070 = vmatpush1.msra.mxu0 0.0
    %1071 = vmatprep.subr.mxu0 0.0
    %1072 = vmatpush1.msra.mxu0 0.0
    %1073 = vmatprep.subr.mxu0 0.0
    %1074 = vmatpush1.msra.mxu0 0.0
    %1075 = vmatprep.subr.mxu0 0.0
    %1076 = vmatpush1.msra.mxu0 0.0
    %1077 = vmatprep.subr.mxu0 0.0
    %1078 = vmatpush1.msra.mxu0 %v1040
    %1079 = vmatprep.subr.mxu0 0.0
    %1080 = vmatpush2.msra.mxu0 0.0
    %1081 = vmatprep.subr.mxu0 0.0
    %1082 = vmatpush2.msra.mxu0 0.0
    %1083 = vmatprep.subr.mxu0 0.0
    %1084 = vmatpush2.msra.mxu0 0.0
    %1085 = vmatprep.subr.mxu0 0.0
    %1086 = vmatpush2.msra.mxu0 0.0
    %1087 = vmatprep.subr.mxu0 0.0
    %1088 = vmatpush2.msra.mxu0 0.0
    %1089 = vmatprep.subr.mxu0 0.0
    %1090 = vmatpush2.msra.mxu0 0.0
    %1091 = vmatprep.subr.mxu0 0.0
    %1092 = vmatpush2.msra.mxu0 0.0
    %1093 = vmatprep.subr.mxu0 0.0
    %1094 = vmatpush2.msra.mxu0 0.0
    %1095 = vmatprep.subr.mxu0 0.0
    %1096 = vmatpush2.msra.mxu0 0.0
    %1097 = vmatprep.subr.mxu0 0.0
    %1098 = vmatpush2.msra.mxu0 0.0
    %1099 = vmatprep.subr.mxu0 0.0
    %1100 = vmatpush2.msra.mxu0 0.0
    %1101 = vmatprep.subr.mxu0 0.0
    %1102 = vmatpush2.msra.mxu0 0.0
    %1103 = vmatprep.subr.mxu0 0.0
    %1104 = vmatpush2.msra.mxu0 0.0
    %1105 = vmatprep.subr.mxu0 0.0
    %1106 = vmatpush2.msra.mxu0 0.0
    %1107 = vmatprep.subr.mxu0 0.0
    %1108 = vmatpush2.msra.mxu0 0.0
    %1109 = vmatprep.subr.mxu0 0.0
    %1110 = vmatpush2.msra.mxu0 0.0
    %1111 = vmatprep.mubr.f32.mxu0 0.0
    %1112 = vmatmul.mubr.f32.gmra.mxu0 %v1042
    %v1113 = vpop.f32.mrf.mxu0
    %v1114 = vadd.f32 0.0, %v1113
    %v1115 = vpop.f32.mrf.mxu0
    %1116 = vmatprep.mubr.f32.mxu0 0.0
    %1117 = vmatmul.mubr.f32.gmra.mxu0 %v1045
    %v1118 = vpop.f32.mrf.mxu0
    %v1119 = vadd.f32 0.0, %v1118
    %v1120 = vpop.f32.mrf.mxu0
    %1121 = vdwg.mxu0
    %v1123 = vsel %vm385, %v630, 0
    %v1126 = vsel %vm385, %v703, 0
    %1128 = vmatprep.subr.mxu0 0.0
    %1129 = vmatpush1.msra.mxu0 0.0
    %1130 = vmatprep.subr.mxu0 0.0
    %1131 = vmatpush1.msra.mxu0 0.0
    %1132 = vmatprep.subr.mxu0 0.0
    %1133 = vmatpush1.msra.mxu0 0.0
    %1134 = vmatprep.subr.mxu0 0.0
    %1135 = vmatpush1.msra.mxu0 0.0
    %1136 = vmatprep.subr.mxu0 0.0
    %1137 = vmatpush1.msra.mxu0 0.0
    %1138 = vmatprep.subr.mxu0 0.0
    %1139 = vmatpush1.msra.mxu0 0.0
    %1140 = vmatprep.subr.mxu0 0.0
    %1141 = vmatpush1.msra.mxu0 0.0
    %1142 = vmatprep.subr.mxu0 0.0
    %1143 = vmatpush1.msra.mxu0 0.0
    %1144 = vmatprep.subr.mxu0 0.0
    %1145 = vmatpush1.msra.mxu0 0.0
    %1146 = vmatprep.subr.mxu0 0.0
    %1147 = vmatpush1.msra.mxu0 0.0
    %1148 = vmatprep.subr.mxu0 0.0
    %1149 = vmatpush1.msra.mxu0 0.0
    %1150 = vmatprep.subr.mxu0 0.0
    %1151 = vmatpush1.msra.mxu0 0.0
    %1152 = vmatprep.subr.mxu0 0.0
    %1153 = vmatpush1.msra.mxu0 0.0
    %1154 = vmatprep.subr.mxu0 0.0
    %1155 = vmatpush1.msra.mxu0 0.0
    %1156 = vmatprep.subr.mxu0 0.0
    %1157 = vmatpush1.msra.mxu0 0.0
    %1158 = vmatprep.subr.mxu0 0.0
    %1159 = vmatpush1.msra.mxu0 %v706
    %1160 = vmatprep.subr.mxu0 0.0
    %1161 = vmatpush2.msra.mxu0 0.0
    %1162 = vmatprep.subr.mxu0 0.0
    %1163 = vmatpush2.msra.mxu0 0.0
    %1164 = vmatprep.subr.mxu0 0.0
    %1165 = vmatpush2.msra.mxu0 0.0
    %1166 = vmatprep.subr.mxu0 0.0
    %1167 = vmatpush2.msra.mxu0 0.0
    %1168 = vmatprep.subr.mxu0 0.0
    %1169 = vmatpush2.msra.mxu0 0.0
    %1170 = vmatprep.subr.mxu0 0.0
    %1171 = vmatpush2.msra.mxu0 0.0
    %1172 = vmatprep.subr.mxu0 0.0
    %1173 = vmatpush2.msra.mxu0 0.0
    %1174 = vmatprep.subr.mxu0 0.0
    %1175 = vmatpush2.msra.mxu0 0.0
    %1176 = vmatprep.subr.mxu0 0.0
    %1177 = vmatpush2.msra.mxu0 0.0
    %1178 = vmatprep.subr.mxu0 0.0
    %1179 = vmatpush2.msra.mxu0 0.0
    %1180 = vmatprep.subr.mxu0 0.0
    %1181 = vmatpush2.msra.mxu0 0.0
    %1182 = vmatprep.subr.mxu0 0.0
    %1183 = vmatpush2.msra.mxu0 0.0
    %1184 = vmatprep.subr.mxu0 0.0
    %1185 = vmatpush2.msra.mxu0 0.0
    %1186 = vmatprep.subr.mxu0 0.0
    %1187 = vmatpush2.msra.mxu0 0.0
    %1188 = vmatprep.subr.mxu0 0.0
    %1189 = vmatpush2.msra.mxu0 0.0
    %1190 = vmatprep.subr.mxu0 0.0
    %1191 = vmatpush2.msra.mxu0 0.0
    %1192 = vmatprep.mubr.f32.mxu0 0.0
    %1193 = vmatmul.mubr.f32.gmra.mxu0 %v1123
    %v1194 = vpop.f32.mrf.mxu0
    %v1195 = vadd.f32 %v1114, %v1194
    %v1196 = vpop.f32.mrf.mxu0
    %1197 = vmatprep.mubr.f32.mxu0 0.0
    %1198 = vmatmul.mubr.f32.gmra.mxu0 %v1126
    %v1199 = vpop.f32.mrf.mxu0
    %v1200 = vadd.f32 %v1119, %v1199
    %v1201 = vpop.f32.mrf.mxu0
    %1202 = vdwg.mxu0
    %1203 = vrot.lane.b32.xlu0 %v383, 112
    %v1204 = vpop.permute.xlu0 %1203
    %1205 = vrot.lane.b32.xlu0 %v289, 112
    %v1206 = vpop.permute.xlu0 %1205
    %v1207 = vsel %vm385, %v1204, 0
    %v1209 = vsel %vm385, %v1206, 0
    %1211 = vmatprep.subr.mxu0 0.0
    %1212 = vmatpush1.xpose.msra.mxu0 0.0
    %1213 = vmatprep.subr.mxu0 0.0
    %1214 = vmatpush1.xpose.msra.mxu0 0.0
    %1215 = vmatprep.subr.mxu0 0.0
    %1216 = vmatpush1.xpose.msra.mxu0 0.0
    %1217 = vmatprep.subr.mxu0 0.0
    %1218 = vmatpush1.xpose.msra.mxu0 0.0
    %1219 = vmatprep.subr.mxu0 0.0
    %1220 = vmatpush1.xpose.msra.mxu0 0.0
    %1221 = vmatprep.subr.mxu0 0.0
    %1222 = vmatpush1.xpose.msra.mxu0 0.0
    %1223 = vmatprep.subr.mxu0 0.0
    %1224 = vmatpush1.xpose.msra.mxu0 0.0
    %1225 = vmatprep.subr.mxu0 0.0
    %1226 = vmatpush1.xpose.msra.mxu0 0.0
    %1227 = vmatprep.subr.mxu0 0.0
    %1228 = vmatpush1.xpose.msra.mxu0 0.0
    %1229 = vmatprep.subr.mxu0 0.0
    %1230 = vmatpush1.xpose.msra.mxu0 0.0
    %1231 = vmatprep.subr.mxu0 0.0
    %1232 = vmatpush1.xpose.msra.mxu0 0.0
    %1233 = vmatprep.subr.mxu0 0.0
    %1234 = vmatpush1.xpose.msra.mxu0 0.0
    %1235 = vmatprep.subr.mxu0 0.0
    %1236 = vmatpush1.xpose.msra.mxu0 0.0
    %1237 = vmatprep.subr.mxu0 0.0
    %1238 = vmatpush1.xpose.msra.mxu0 0.0
    %1239 = vmatprep.subr.mxu0 0.0
    %1240 = vmatpush1.xpose.msra.mxu0 0.0
    %1241 = vmatprep.subr.mxu0 0.0
    %1242 = vmatpush1.xpose.msra.mxu0 %v1209
    %1243 = vmatprep.subr.mxu0 0.0
    %1244 = vmatpush2.xpose.msra.mxu0 0.0
    %1245 = vmatprep.subr.mxu0 0.0
    %1246 = vmatpush2.xpose.msra.mxu0 0.0
    %1247 = vmatprep.subr.mxu0 0.0
    %1248 = vmatpush2.xpose.msra.mxu0 0.0
    %1249 = vmatprep.subr.mxu0 0.0
    %1250 = vmatpush2.xpose.msra.mxu0 0.0
    %1251 = vmatprep.subr.mxu0 0.0
    %1252 = vmatpush2.xpose.msra.mxu0 0.0
    %1253 = vmatprep.subr.mxu0 0.0
    %1254 = vmatpush2.xpose.msra.mxu0 0.0
    %1255 = vmatprep.subr.mxu0 0.0
    %1256 = vmatpush2.xpose.msra.mxu0 0.0
    %1257 = vmatprep.subr.mxu0 0.0
    %1258 = vmatpush2.xpose.msra.mxu0 0.0
    %1259 = vmatprep.subr.mxu0 0.0
    %1260 = vmatpush2.xpose.msra.mxu0 0.0
    %1261 = vmatprep.subr.mxu0 0.0
    %1262 = vmatpush2.xpose.msra.mxu0 0.0
    %1263 = vmatprep.subr.mxu0 0.0
    %1264 = vmatpush2.xpose.msra.mxu0 0.0
    %1265 = vmatprep.subr.mxu0 0.0
    %1266 = vmatpush2.xpose.msra.mxu0 0.0
    %1267 = vmatprep.subr.mxu0 0.0
    %1268 = vmatpush2.xpose.msra.mxu0 0.0
    %1269 = vmatprep.subr.mxu0 0.0
    %1270 = vmatpush2.xpose.msra.mxu0 0.0
    %1271 = vmatprep.subr.mxu0 0.0
    %1272 = vmatpush2.xpose.msra.mxu0 0.0
    %1273 = vmatprep.subr.mxu0 0.0
    %1274 = vmatpush2.xpose.msra.mxu0 0.0
    %1275 = vmatprep.mubr.f32.mxu0 0.0
    %1276 = vmatmul.mubr.f32.gmra.mxu0 %v1207
    %v1277 = vpop.f32.mrf.mxu0
    %v1278 = vadd.f32 0.0, %v1277
    %v1279 = vpop.f32.mrf.mxu0
    %1280 = vdwg.mxu0
    %1281 = vrot.lane.b32.xlu0 %v384, 112
    %v1282 = vpop.permute.xlu0 %1281
    %1283 = vrot.lane.b32.xlu0 %v294, 112
    %v1284 = vpop.permute.xlu0 %1283
    %v1285 = vsel %vm385, %v1282, 0
    %v1287 = vsel %vm385, %v1284, 0
    %1289 = vmatprep.subr.mxu0 0.0
    %1290 = vmatpush1.xpose.msra.mxu0 0.0
    %1291 = vmatprep.subr.mxu0 0.0
    %1292 = vmatpush1.xpose.msra.mxu0 0.0
    %1293 = vmatprep.subr.mxu0 0.0
    %1294 = vmatpush1.xpose.msra.mxu0 0.0
    %1295 = vmatprep.subr.mxu0 0.0
    %1296 = vmatpush1.xpose.msra.mxu0 0.0
    %1297 = vmatprep.subr.mxu0 0.0
    %1298 = vmatpush1.xpose.msra.mxu0 0.0
    %1299 = vmatprep.subr.mxu0 0.0
    %1300 = vmatpush1.xpose.msra.mxu0 0.0
    %1301 = vmatprep.subr.mxu0 0.0
    %1302 = vmatpush1.xpose.msra.mxu0 0.0
    %1303 = vmatprep.subr.mxu0 0.0
    %1304 = vmatpush1.xpose.msra.mxu0 0.0
    %1305 = vmatprep.subr.mxu0 0.0
    %1306 = vmatpush1.xpose.msra.mxu0 0.0
    %1307 = vmatprep.subr.mxu0 0.0
    %1308 = vmatpush1.xpose.msra.mxu0 0.0
    %1309 = vmatprep.subr.mxu0 0.0
    %1310 = vmatpush1.xpose.msra.mxu0 0.0
    %1311 = vmatprep.subr.mxu0 0.0
    %1312 = vmatpush1.xpose.msra.mxu0 0.0
    %1313 = vmatprep.subr.mxu0 0.0
    %1314 = vmatpush1.xpose.msra.mxu0 0.0
    %1315 = vmatprep.subr.mxu0 0.0
    %1316 = vmatpush1.xpose.msra.mxu0 0.0
    %1317 = vmatprep.subr.mxu0 0.0
    %1318 = vmatpush1.xpose.msra.mxu0 0.0
    %1319 = vmatprep.subr.mxu0 0.0
    %1320 = vmatpush1.xpose.msra.mxu0 %v1287
    %1321 = vmatprep.subr.mxu0 0.0
    %1322 = vmatpush2.xpose.msra.mxu0 0.0
    %1323 = vmatprep.subr.mxu0 0.0
    %1324 = vmatpush2.xpose.msra.mxu0 0.0
    %1325 = vmatprep.subr.mxu0 0.0
    %1326 = vmatpush2.xpose.msra.mxu0 0.0
    %1327 = vmatprep.subr.mxu0 0.0
    %1328 = vmatpush2.xpose.msra.mxu0 0.0
    %1329 = vmatprep.subr.mxu0 0.0
    %1330 = vmatpush2.xpose.msra.mxu0 0.0
    %1331 = vmatprep.subr.mxu0 0.0
    %1332 = vmatpush2.xpose.msra.mxu0 0.0
    %1333 = vmatprep.subr.mxu0 0.0
    %1334 = vmatpush2.xpose.msra.mxu0 0.0
    %1335 = vmatprep.subr.mxu0 0.0
    %1336 = vmatpush2.xpose.msra.mxu0 0.0
    %1337 = vmatprep.subr.mxu0 0.0
    %1338 = vmatpush2.xpose.msra.mxu0 0.0
    %1339 = vmatprep.subr.mxu0 0.0
    %1340 = vmatpush2.xpose.msra.mxu0 0.0
    %1341 = vmatprep.subr.mxu0 0.0
    %1342 = vmatpush2.xpose.msra.mxu0 0.0
    %1343 = vmatprep.subr.mxu0 0.0
    %1344 = vmatpush2.xpose.msra.mxu0 0.0
    %1345 = vmatprep.subr.mxu0 0.0
    %1346 = vmatpush2.xpose.msra.mxu0 0.0
    %1347 = vmatprep.subr.mxu0 0.0
    %1348 = vmatpush2.xpose.msra.mxu0 0.0
    %1349 = vmatprep.subr.mxu0 0.0
    %1350 = vmatpush2.xpose.msra.mxu0 0.0
    %1351 = vmatprep.subr.mxu0 0.0
    %1352 = vmatpush2.xpose.msra.mxu0 0.0
    %1353 = vmatprep.mubr.f32.mxu0 0.0
    %1354 = vmatmul.mubr.f32.gmra.mxu0 %v1285
    %v1355 = vpop.f32.mrf.mxu0
    %v1356 = vadd.f32 0.0, %v1355
    %v1357 = vpop.f32.mrf.mxu0
    %1358 = vdwg.mxu0
    %v1359 = vsel %vm385, %v1278, -inf
    %1360 = vmax.xlane.f32.xlu0 %v1359
    %v1361 = vpop.xlane.xlu0 %1360
    %v1362 = vsel %vm385, %v1356, -inf
    %1363 = vmax.xlane.f32.xlu0 %v1362
    %v1364 = vpop.xlane.xlu0 %1363
    %v1365 = vsub.f32 %v1278, %v1361
    %v1366 = vsub.f32 %v1356, %v1364
    %v1367 = vmul.f32 %v1365, 1.442695
    %v1368 = vpow.pop %v1367
    %v1369 = vmul.f32 %v1366, 1.442695
    %v1370 = vpow.pop %v1369
    %v1371 = vsel %vm385, %v1368, 0.0
    %1372 = vadd.xlane.f32.xlu0 %v1371
    %v1373 = vpop.xlane.xlu0 %1372
    %v1374 = vsel %vm385, %v1370, 0.0
    %1375 = vadd.xlane.f32.xlu0 %v1374
    %v1376 = vpop.xlane.xlu0 %1375
    %v1377 = vrcp.pop %v1373
    %v1378 = vrcp.pop %v1376
    %v1379 = vmul.f32 %v1368, %v1377
    %v1380 = vmul.f32 %v1370, %v1378
    %1381 = vrot.lane.b32.xlu0 %v375, 112
    %v1382 = vpop.permute.xlu0 %1381
    %v1385 = vsel %vm385, %v1379, 0
    %1387 = vmatprep.subr.mxu0 0.0
    %1388 = vmatpush1.msra.mxu0 0.0
    %1389 = vmatprep.subr.mxu0 0.0
    %1390 = vmatpush1.msra.mxu0 0.0
    %1391 = vmatprep.subr.mxu0 0.0
    %1392 = vmatpush1.msra.mxu0 0.0
    %1393 = vmatprep.subr.mxu0 0.0
    %1394 = vmatpush1.msra.mxu0 0.0
    %1395 = vmatprep.subr.mxu0 0.0
    %1396 = vmatpush1.msra.mxu0 0.0
    %1397 = vmatprep.subr.mxu0 0.0
    %1398 = vmatpush1.msra.mxu0 0.0
    %1399 = vmatprep.subr.mxu0 0.0
    %1400 = vmatpush1.msra.mxu0 0.0
    %1401 = vmatprep.subr.mxu0 0.0
    %1402 = vmatpush1.msra.mxu0 0.0
    %1403 = vmatprep.subr.mxu0 0.0
    %1404 = vmatpush1.msra.mxu0 0.0
    %1405 = vmatprep.subr.mxu0 0.0
    %1406 = vmatpush1.msra.mxu0 0.0
    %1407 = vmatprep.subr.mxu0 0.0
    %1408 = vmatpush1.msra.mxu0 0.0
    %1409 = vmatprep.subr.mxu0 0.0
    %1410 = vmatpush1.msra.mxu0 0.0
    %1411 = vmatprep.subr.mxu0 0.0
    %1412 = vmatpush1.msra.mxu0 0.0
    %1413 = vmatprep.subr.mxu0 0.0
    %1414 = vmatpush1.msra.mxu0 0.0
    %1415 = vmatprep.subr.mxu0 0.0
    %1416 = vmatpush1.msra.mxu0 0.0
    %1417 = vmatprep.subr.mxu0 0.0
    %1418 = vmatpush1.msra.mxu0 %v1382
    %1419 = vmatprep.subr.mxu0 0.0
    %1420 = vmatpush2.msra.mxu0 0.0
    %1421 = vmatprep.subr.mxu0 0.0
    %1422 = vmatpush2.msra.mxu0 0.0
    %1423 = vmatprep.subr.mxu0 0.0
    %1424 = vmatpush2.msra.mxu0 0.0
    %1425 = vmatprep.subr.mxu0 0.0
    %1426 = vmatpush2.msra.mxu0 0.0
    %1427 = vmatprep.subr.mxu0 0.0
    %1428 = vmatpush2.msra.mxu0 0.0
    %1429 = vmatprep.subr.mxu0 0.0
    %1430 = vmatpush2.msra.mxu0 0.0
    %1431 = vmatprep.subr.mxu0 0.0
    %1432 = vmatpush2.msra.mxu0 0.0
    %1433 = vmatprep.subr.mxu0 0.0
    %1434 = vmatpush2.msra.mxu0 0.0
    %1435 = vmatprep.subr.mxu0 0.0
    %1436 = vmatpush2.msra.mxu0 0.0
    %1437 = vmatprep.subr.mxu0 0.0
    %1438 = vmatpush2.msra.mxu0 0.0
    %1439 = vmatprep.subr.mxu0 0.0
    %1440 = vmatpush2.msra.mxu0 0.0
    %1441 = vmatprep.subr.mxu0 0.0
    %1442 = vmatpush2.msra.mxu0 0.0
    %1443 = vmatprep.subr.mxu0 0.0
    %1444 = vmatpush2.msra.mxu0 0.0
    %1445 = vmatprep.subr.mxu0 0.0
    %1446 = vmatpush2.msra.mxu0 0.0
    %1447 = vmatprep.subr.mxu0 0.0
    %1448 = vmatpush2.msra.mxu0 0.0
    %1449 = vmatprep.subr.mxu0 0.0
    %1450 = vmatpush2.msra.mxu0 0.0
    %1451 = vmatprep.mubr.f32.mxu0 0.0
    %1452 = vmatmul.mubr.f32.gmra.mxu0 %v1385
    %v1453 = vpop.f32.mrf.mxu0
    %v1454 = vadd.f32 0.0, %v1453
    %v1455 = vpop.f32.mrf.mxu0
    %1456 = vdwg.mxu0
    %1457 = vrot.lane.b32.xlu0 %v380, 112
    %v1458 = vpop.permute.xlu0 %1457
    %v1461 = vsel %vm385, %v1380, 0
    %1463 = vmatprep.subr.mxu0 0.0
    %1464 = vmatpush1.msra.mxu0 0.0
    %1465 = vmatprep.subr.mxu0 0.0
    %1466 = vmatpush1.msra.mxu0 0.0
    %1467 = vmatprep.subr.mxu0 0.0
    %1468 = vmatpush1.msra.mxu0 0.0
    %1469 = vmatprep.subr.mxu0 0.0
    %1470 = vmatpush1.msra.mxu0 0.0
    %1471 = vmatprep.subr.mxu0 0.0
    %1472 = vmatpush1.msra.mxu0 0.0
    %1473 = vmatprep.subr.mxu0 0.0
    %1474 = vmatpush1.msra.mxu0 0.0
    %1475 = vmatprep.subr.mxu0 0.0
    %1476 = vmatpush1.msra.mxu0 0.0
    %1477 = vmatprep.subr.mxu0 0.0
    %1478 = vmatpush1.msra.mxu0 0.0
    %1479 = vmatprep.subr.mxu0 0.0
    %1480 = vmatpush1.msra.mxu0 0.0
    %1481 = vmatprep.subr.mxu0 0.0
    %1482 = vmatpush1.msra.mxu0 0.0
    %1483 = vmatprep.subr.mxu0 0.0
    %1484 = vmatpush1.msra.mxu0 0.0
    %1485 = vmatprep.subr.mxu0 0.0
    %1486 = vmatpush1.msra.mxu0 0.0
    %1487 = vmatprep.subr.mxu0 0.0
    %1488 = vmatpush1.msra.mxu0 0.0
    %1489 = vmatprep.subr.mxu0 0.0
    %1490 = vmatpush1.msra.mxu0 0.0
    %1491 = vmatprep.subr.mxu0 0.0
    %1492 = vmatpush1.msra.mxu0 0.0
    %1493 = vmatprep.subr.mxu0 0.0
    %1494 = vmatpush1.msra.mxu0 %v1458
    %1495 = vmatprep.subr.mxu0 0.0
    %1496 = vmatpush2.msra.mxu0 0.0
    %1497 = vmatprep.subr.mxu0 0.0
    %1498 = vmatpush2.msra.mxu0 0.0
    %1499 = vmatprep.subr.mxu0 0.0
    %1500 = vmatpush2.msra.mxu0 0.0
    %1501 = vmatprep.subr.mxu0 0.0
    %1502 = vmatpush2.msra.mxu0 0.0
    %1503 = vmatprep.subr.mxu0 0.0
    %1504 = vmatpush2.msra.mxu0 0.0
    %1505 = vmatprep.subr.mxu0 0.0
    %1506 = vmatpush2.msra.mxu0 0.0
    %1507 = vmatprep.subr.mxu0 0.0
    %1508 = vmatpush2.msra.mxu0 0.0
    %1509 = vmatprep.subr.mxu0 0.0
    %1510 = vmatpush2.msra.mxu0 0.0
    %1511 = vmatprep.subr.mxu0 0.0
    %1512 = vmatpush2.msra.mxu0 0.0
    %1513 = vmatprep.subr.mxu0 0.0
    %1514 = vmatpush2.msra.mxu0 0.0
    %1515 = vmatprep.subr.mxu0 0.0
    %1516 = vmatpush2.msra.mxu0 0.0
    %1517 = vmatprep.subr.mxu0 0.0
    %1518 = vmatpush2.msra.mxu0 0.0
    %1519 = vmatprep.subr.mxu0 0.0
    %1520 = vmatpush2.msra.mxu0 0.0
    %1521 = vmatprep.subr.mxu0 0.0
    %1522 = vmatpush2.msra.mxu0 0.0
    %1523 = vmatprep.subr.mxu0 0.0
    %1524 = vmatpush2.msra.mxu0 0.0
    %1525 = vmatprep.subr.mxu0 0.0
    %1526 = vmatpush2.msra.mxu0 0.0
    %1527 = vmatprep.mubr.f32.mxu0 0.0
    %1528 = vmatmul.mubr.f32.gmra.mxu0 %v1461
    %v1529 = vpop.f32.mrf.mxu0
    %v1530 = vadd.f32 0.0, %v1529
    %v1531 = vpop.f32.mrf.mxu0
    %1532 = vdwg.mxu0
    %s1533 = scalar_lea.vmem %s9, 16
    %v1534 = vld [vmem:[%s1533] sm:$0xff]
    %v1536 = vsel %vm385, %v1454, 0
    %v1539 = vsel %vm385, %v1530, 0
    %1541 = vmatprep.subr.mxu0 0.0
    %1542 = vmatpush1.msra.mxu0 0.0
    %1543 = vmatprep.subr.mxu0 0.0
    %1544 = vmatpush1.msra.mxu0 0.0
    %1545 = vmatprep.subr.mxu0 0.0
    %1546 = vmatpush1.msra.mxu0 0.0
    %1547 = vmatprep.subr.mxu0 0.0
    %1548 = vmatpush1.msra.mxu0 0.0
    %1549 = vmatprep.subr.mxu0 0.0
    %1550 = vmatpush1.msra.mxu0 0.0
    %1551 = vmatprep.subr.mxu0 0.0
    %1552 = vmatpush1.msra.mxu0 0.0
    %1553 = vmatprep.subr.mxu0 0.0
    %1554 = vmatpush1.msra.mxu0 0.0
    %1555 = vmatprep.subr.mxu0 0.0
    %1556 = vmatpush1.msra.mxu0 0.0
    %1557 = vmatprep.subr.mxu0 0.0
    %1558 = vmatpush1.msra.mxu0 0.0
    %1559 = vmatprep.subr.mxu0 0.0
    %1560 = vmatpush1.msra.mxu0 0.0
    %1561 = vmatprep.subr.mxu0 0.0
    %1562 = vmatpush1.msra.mxu0 0.0
    %1563 = vmatprep.subr.mxu0 0.0
    %1564 = vmatpush1.msra.mxu0 0.0
    %1565 = vmatprep.subr.mxu0 0.0
    %1566 = vmatpush1.msra.mxu0 0.0
    %1567 = vmatprep.subr.mxu0 0.0
    %1568 = vmatpush1.msra.mxu0 0.0
    %1569 = vmatprep.subr.mxu0 0.0
    %1570 = vmatpush1.msra.mxu0 0.0
    %1571 = vmatprep.subr.mxu0 0.0
    %1572 = vmatpush1.msra.mxu0 %v1534
    %1573 = vmatprep.subr.mxu0 0.0
    %1574 = vmatpush2.msra.mxu0 0.0
    %1575 = vmatprep.subr.mxu0 0.0
    %1576 = vmatpush2.msra.mxu0 0.0
    %1577 = vmatprep.subr.mxu0 0.0
    %1578 = vmatpush2.msra.mxu0 0.0
    %1579 = vmatprep.subr.mxu0 0.0
    %1580 = vmatpush2.msra.mxu0 0.0
    %1581 = vmatprep.subr.mxu0 0.0
    %1582 = vmatpush2.msra.mxu0 0.0
    %1583 = vmatprep.subr.mxu0 0.0
    %1584 = vmatpush2.msra.mxu0 0.0
    %1585 = vmatprep.subr.mxu0 0.0
    %1586 = vmatpush2.msra.mxu0 0.0
    %1587 = vmatprep.subr.mxu0 0.0
    %1588 = vmatpush2.msra.mxu0 0.0
    %1589 = vmatprep.subr.mxu0 0.0
    %1590 = vmatpush2.msra.mxu0 0.0
    %1591 = vmatprep.subr.mxu0 0.0
    %1592 = vmatpush2.msra.mxu0 0.0
    %1593 = vmatprep.subr.mxu0 0.0
    %1594 = vmatpush2.msra.mxu0 0.0
    %1595 = vmatprep.subr.mxu0 0.0
    %1596 = vmatpush2.msra.mxu0 0.0
    %1597 = vmatprep.subr.mxu0 0.0
    %1598 = vmatpush2.msra.mxu0 0.0
    %1599 = vmatprep.subr.mxu0 0.0
    %1600 = vmatpush2.msra.mxu0 0.0
    %1601 = vmatprep.subr.mxu0 0.0
    %1602 = vmatpush2.msra.mxu0 0.0
    %1603 = vmatprep.subr.mxu0 0.0
    %1604 = vmatpush2.msra.mxu0 0.0
    %1605 = vmatprep.mubr.f32.mxu0 0.0
    %1606 = vmatmul.mubr.f32.gmra.mxu0 %v1536
    %v1607 = vpop.f32.mrf.mxu0
    %v1608 = vadd.f32 0.0, %v1607
    %v1609 = vpop.f32.mrf.mxu0
    %1610 = vmatprep.mubr.f32.mxu0 0.0
    %1611 = vmatmul.mubr.f32.gmra.mxu0 %v1539
    %v1612 = vpop.f32.mrf.mxu0
    %v1613 = vadd.f32 0.0, %v1612
    %v1614 = vpop.f32.mrf.mxu0
    %1615 = vdwg.mxu0
    %v1616 = vadd.f32 %v1195, %v1608
    %v1617 = vadd.f32 %v1200, %v1613
    %1618 = vrot.lane.b32.xlu0 %v383, 104
    %v1619 = vpop.permute.xlu0 %1618
    %1620 = vrot.lane.b32.xlu0 %v289, 104
    %v1621 = vpop.permute.xlu0 %1620
    %v1622 = vsel %vm385, %v1619, 0
    %v1624 = vsel %vm385, %v1621, 0
    %1626 = vmatprep.subr.mxu0 0.0
    %1627 = vmatpush1.xpose.msra.mxu0 0.0
    %1628 = vmatprep.subr.mxu0 0.0
    %1629 = vmatpush1.xpose.msra.mxu0 0.0
    %1630 = vmatprep.subr.mxu0 0.0
    %1631 = vmatpush1.xpose.msra.mxu0 0.0
    %1632 = vmatprep.subr.mxu0 0.0
    %1633 = vmatpush1.xpose.msra.mxu0 0.0
    %1634 = vmatprep.subr.mxu0 0.0
    %1635 = vmatpush1.xpose.msra.mxu0 0.0
    %1636 = vmatprep.subr.mxu0 0.0
    %1637 = vmatpush1.xpose.msra.mxu0 0.0
    %1638 = vmatprep.subr.mxu0 0.0
    %1639 = vmatpush1.xpose.msra.mxu0 0.0
    %1640 = vmatprep.subr.mxu0 0.0
    %1641 = vmatpush1.xpose.msra.mxu0 0.0
    %1642 = vmatprep.subr.mxu0 0.0
    %1643 = vmatpush1.xpose.msra.mxu0 0.0
    %1644 = vmatprep.subr.mxu0 0.0
    %1645 = vmatpush1.xpose.msra.mxu0 0.0
    %1646 = vmatprep.subr.mxu0 0.0
    %1647 = vmatpush1.xpose.msra.mxu0 0.0
    %1648 = vmatprep.subr.mxu0 0.0
    %1649 = vmatpush1.xpose.msra.mxu0 0.0
    %1650 = vmatprep.subr.mxu0 0.0
    %1651 = vmatpush1.xpose.msra.mxu0 0.0
    %1652 = vmatprep.subr.mxu0 0.0
    %1653 = vmatpush1.xpose.msra.mxu0 0.0
    %1654 = vmatprep.subr.mxu0 0.0
    %1655 = vmatpush1.xpose.msra.mxu0 0.0
    %1656 = vmatprep.subr.mxu0 0.0
    %1657 = vmatpush1.xpose.msra.mxu0 %v1624
    %1658 = vmatprep.subr.mxu0 0.0
    %1659 = vmatpush2.xpose.msra.mxu0 0.0
    %1660 = vmatprep.subr.mxu0 0.0
    %1661 = vmatpush2.xpose.msra.mxu0 0.0
    %1662 = vmatprep.subr.mxu0 0.0
    %1663 = vmatpush2.xpose.msra.mxu0 0.0
    %1664 = vmatprep.subr.mxu0 0.0
    %1665 = vmatpush2.xpose.msra.mxu0 0.0
    %1666 = vmatprep.subr.mxu0 0.0
    %1667 = vmatpush2.xpose.msra.mxu0 0.0
    %1668 = vmatprep.subr.mxu0 0.0
    %1669 = vmatpush2.xpose.msra.mxu0 0.0
    %1670 = vmatprep.subr.mxu0 0.0
    %1671 = vmatpush2.xpose.msra.mxu0 0.0
    %1672 = vmatprep.subr.mxu0 0.0
    %1673 = vmatpush2.xpose.msra.mxu0 0.0
    %1674 = vmatprep.subr.mxu0 0.0
    %1675 = vmatpush2.xpose.msra.mxu0 0.0
    %1676 = vmatprep.subr.mxu0 0.0
    %1677 = vmatpush2.xpose.msra.mxu0 0.0
    %1678 = vmatprep.subr.mxu0 0.0
    %1679 = vmatpush2.xpose.msra.mxu0 0.0
    %1680 = vmatprep.subr.mxu0 0.0
    %1681 = vmatpush2.xpose.msra.mxu0 0.0
    %1682 = vmatprep.subr.mxu0 0.0
    %1683 = vmatpush2.xpose.msra.mxu0 0.0
    %1684 = vmatprep.subr.mxu0 0.0
    %1685 = vmatpush2.xpose.msra.mxu0 0.0
    %1686 = vmatprep.subr.mxu0 0.0
    %1687 = vmatpush2.xpose.msra.mxu0 0.0
    %1688 = vmatprep.subr.mxu0 0.0
    %1689 = vmatpush2.xpose.msra.mxu0 0.0
    %1690 = vmatprep.mubr.f32.mxu0 0.0
    %1691 = vmatmul.mubr.f32.gmra.mxu0 %v1622
    %v1692 = vpop.f32.mrf.mxu0
    %v1693 = vadd.f32 0.0, %v1692
    %v1694 = vpop.f32.mrf.mxu0
    %1695 = vdwg.mxu0
    %1696 = vrot.lane.b32.xlu0 %v384, 104
    %v1697 = vpop.permute.xlu0 %1696
    %1698 = vrot.lane.b32.xlu0 %v294, 104
    %v1699 = vpop.permute.xlu0 %1698
    %v1700 = vsel %vm385, %v1697, 0
    %v1702 = vsel %vm385, %v1699, 0
    %1704 = vmatprep.subr.mxu0 0.0
    %1705 = vmatpush1.xpose.msra.mxu0 0.0
    %1706 = vmatprep.subr.mxu0 0.0
    %1707 = vmatpush1.xpose.msra.mxu0 0.0
    %1708 = vmatprep.subr.mxu0 0.0
    %1709 = vmatpush1.xpose.msra.mxu0 0.0
    %1710 = vmatprep.subr.mxu0 0.0
    %1711 = vmatpush1.xpose.msra.mxu0 0.0
    %1712 = vmatprep.subr.mxu0 0.0
    %1713 = vmatpush1.xpose.msra.mxu0 0.0
    %1714 = vmatprep.subr.mxu0 0.0
    %1715 = vmatpush1.xpose.msra.mxu0 0.0
    %1716 = vmatprep.subr.mxu0 0.0
    %1717 = vmatpush1.xpose.msra.mxu0 0.0
    %1718 = vmatprep.subr.mxu0 0.0
    %1719 = vmatpush1.xpose.msra.mxu0 0.0
    %1720 = vmatprep.subr.mxu0 0.0
    %1721 = vmatpush1.xpose.msra.mxu0 0.0
    %1722 = vmatprep.subr.mxu0 0.0
    %1723 = vmatpush1.xpose.msra.mxu0 0.0
    %1724 = vmatprep.subr.mxu0 0.0
    %1725 = vmatpush1.xpose.msra.mxu0 0.0
    %1726 = vmatprep.subr.mxu0 0.0
    %1727 = vmatpush1.xpose.msra.mxu0 0.0
    %1728 = vmatprep.subr.mxu0 0.0
    %1729 = vmatpush1.xpose.msra.mxu0 0.0
    %1730 = vmatprep.subr.mxu0 0.0
    %1731 = vmatpush1.xpose.msra.mxu0 0.0
    %1732 = vmatprep.subr.mxu0 0.0
    %1733 = vmatpush1.xpose.msra.mxu0 0.0
    %1734 = vmatprep.subr.mxu0 0.0
    %1735 = vmatpush1.xpose.msra.mxu0 %v1702
    %1736 = vmatprep.subr.mxu0 0.0
    %1737 = vmatpush2.xpose.msra.mxu0 0.0
    %1738 = vmatprep.subr.mxu0 0.0
    %1739 = vmatpush2.xpose.msra.mxu0 0.0
    %1740 = vmatprep.subr.mxu0 0.0
    %1741 = vmatpush2.xpose.msra.mxu0 0.0
    %1742 = vmatprep.subr.mxu0 0.0
    %1743 = vmatpush2.xpose.msra.mxu0 0.0
    %1744 = vmatprep.subr.mxu0 0.0
    %1745 = vmatpush2.xpose.msra.mxu0 0.0
    %1746 = vmatprep.subr.mxu0 0.0
    %1747 = vmatpush2.xpose.msra.mxu0 0.0
    %1748 = vmatprep.subr.mxu0 0.0
    %1749 = vmatpush2.xpose.msra.mxu0 0.0
    %1750 = vmatprep.subr.mxu0 0.0
    %1751 = vmatpush2.xpose.msra.mxu0 0.0
    %1752 = vmatprep.subr.mxu0 0.0
    %1753 = vmatpush2.xpose.msra.mxu0 0.0
    %1754 = vmatprep.subr.mxu0 0.0
    %1755 = vmatpush2.xpose.msra.mxu0 0.0
    %1756 = vmatprep.subr.mxu0 0.0
    %1757 = vmatpush2.xpose.msra.mxu0 0.0
    %1758 = vmatprep.subr.mxu0 0.0
    %1759 = vmatpush2.xpose.msra.mxu0 0.0
    %1760 = vmatprep.subr.mxu0 0.0
    %1761 = vmatpush2.xpose.msra.mxu0 0.0
    %1762 = vmatprep.subr.mxu0 0.0
    %1763 = vmatpush2.xpose.msra.mxu0 0.0
    %1764 = vmatprep.subr.mxu0 0.0
    %1765 = vmatpush2.xpose.msra.mxu0 0.0
    %1766 = vmatprep.subr.mxu0 0.0
    %1767 = vmatpush2.xpose.msra.mxu0 0.0
    %1768 = vmatprep.mubr.f32.mxu0 0.0
    %1769 = vmatmul.mubr.f32.gmra.mxu0 %v1700
    %v1770 = vpop.f32.mrf.mxu0
    %v1771 = vadd.f32 0.0, %v1770
    %v1772 = vpop.f32.mrf.mxu0
    %1773 = vdwg.mxu0
    %v1774 = vsel %vm385, %v1693, -inf
    %1775 = vmax.xlane.f32.xlu0 %v1774
    %v1776 = vpop.xlane.xlu0 %1775
    %v1777 = vsel %vm385, %v1771, -inf
    %1778 = vmax.xlane.f32.xlu0 %v1777
    %v1779 = vpop.xlane.xlu0 %1778
    %v1780 = vsub.f32 %v1693, %v1776
    %v1781 = vsub.f32 %v1771, %v1779
    %v1782 = vmul.f32 %v1780, 1.442695
    %v1783 = vpow.pop %v1782
    %v1784 = vmul.f32 %v1781, 1.442695
    %v1785 = vpow.pop %v1784
    %v1786 = vsel %vm385, %v1783, 0.0
    %1787 = vadd.xlane.f32.xlu0 %v1786
    %v1788 = vpop.xlane.xlu0 %1787
    %v1789 = vsel %vm385, %v1785, 0.0
    %1790 = vadd.xlane.f32.xlu0 %v1789
    %v1791 = vpop.xlane.xlu0 %1790
    %v1792 = vrcp.pop %v1788
    %v1793 = vrcp.pop %v1791
    %v1794 = vmul.f32 %v1783, %v1792
    %v1795 = vmul.f32 %v1785, %v1793
    %1796 = vrot.lane.b32.xlu0 %v375, 104
    %v1797 = vpop.permute.xlu0 %1796
    %v1800 = vsel %vm385, %v1794, 0
    %1802 = vmatprep.subr.mxu0 0.0
    %1803 = vmatpush1.msra.mxu0 0.0
    %1804 = vmatprep.subr.mxu0 0.0
    %1805 = vmatpush1.msra.mxu0 0.0
    %1806 = vmatprep.subr.mxu0 0.0
    %1807 = vmatpush1.msra.mxu0 0.0
    %1808 = vmatprep.subr.mxu0 0.0
    %1809 = vmatpush1.msra.mxu0 0.0
    %1810 = vmatprep.subr.mxu0 0.0
    %1811 = vmatpush1.msra.mxu0 0.0
    %1812 = vmatprep.subr.mxu0 0.0
    %1813 = vmatpush1.msra.mxu0 0.0
    %1814 = vmatprep.subr.mxu0 0.0
    %1815 = vmatpush1.msra.mxu0 0.0
    %1816 = vmatprep.subr.mxu0 0.0
    %1817 = vmatpush1.msra.mxu0 0.0
    %1818 = vmatprep.subr.mxu0 0.0
    %1819 = vmatpush1.msra.mxu0 0.0
    %1820 = vmatprep.subr.mxu0 0.0
    %1821 = vmatpush1.msra.mxu0 0.0
    %1822 = vmatprep.subr.mxu0 0.0
    %1823 = vmatpush1.msra.mxu0 0.0
    %1824 = vmatprep.subr.mxu0 0.0
    %1825 = vmatpush1.msra.mxu0 0.0
    %1826 = vmatprep.subr.mxu0 0.0
    %1827 = vmatpush1.msra.mxu0 0.0
    %1828 = vmatprep.subr.mxu0 0.0
    %1829 = vmatpush1.msra.mxu0 0.0
    %1830 = vmatprep.subr.mxu0 0.0
    %1831 = vmatpush1.msra.mxu0 0.0
    %1832 = vmatprep.subr.mxu0 0.0
    %1833 = vmatpush1.msra.mxu0 %v1797
    %1834 = vmatprep.subr.mxu0 0.0
    %1835 = vmatpush2.msra.mxu0 0.0
    %1836 = vmatprep.subr.mxu0 0.0
    %1837 = vmatpush2.msra.mxu0 0.0
    %1838 = vmatprep.subr.mxu0 0.0
    %1839 = vmatpush2.msra.mxu0 0.0
    %1840 = vmatprep.subr.mxu0 0.0
    %1841 = vmatpush2.msra.mxu0 0.0
    %1842 = vmatprep.subr.mxu0 0.0
    %1843 = vmatpush2.msra.mxu0 0.0
    %1844 = vmatprep.subr.mxu0 0.0
    %1845 = vmatpush2.msra.mxu0 0.0
    %1846 = vmatprep.subr.mxu0 0.0
    %1847 = vmatpush2.msra.mxu0 0.0
    %1848 = vmatprep.subr.mxu0 0.0
    %1849 = vmatpush2.msra.mxu0 0.0
    %1850 = vmatprep.subr.mxu0 0.0
    %1851 = vmatpush2.msra.mxu0 0.0
    %1852 = vmatprep.subr.mxu0 0.0
    %1853 = vmatpush2.msra.mxu0 0.0
    %1854 = vmatprep.subr.mxu0 0.0
    %1855 = vmatpush2.msra.mxu0 0.0
    %1856 = vmatprep.subr.mxu0 0.0
    %1857 = vmatpush2.msra.mxu0 0.0
    %1858 = vmatprep.subr.mxu0 0.0
    %1859 = vmatpush2.msra.mxu0 0.0
    %1860 = vmatprep.subr.mxu0 0.0
    %1861 = vmatpush2.msra.mxu0 0.0
    %1862 = vmatprep.subr.mxu0 0.0
    %1863 = vmatpush2.msra.mxu0 0.0
    %1864 = vmatprep.subr.mxu0 0.0
    %1865 = vmatpush2.msra.mxu0 0.0
    %1866 = vmatprep.mubr.f32.mxu0 0.0
    %1867 = vmatmul.mubr.f32.gmra.mxu0 %v1800
    %v1868 = vpop.f32.mrf.mxu0
    %v1869 = vadd.f32 0.0, %v1868
    %v1870 = vpop.f32.mrf.mxu0
    %1871 = vdwg.mxu0
    %1872 = vrot.lane.b32.xlu0 %v380, 104
    %v1873 = vpop.permute.xlu0 %1872
    %v1876 = vsel %vm385, %v1795, 0
    %1878 = vmatprep.subr.mxu0 0.0
    %1879 = vmatpush1.msra.mxu0 0.0
    %1880 = vmatprep.subr.mxu0 0.0
    %1881 = vmatpush1.msra.mxu0 0.0
    %1882 = vmatprep.subr.mxu0 0.0
    %1883 = vmatpush1.msra.mxu0 0.0
    %1884 = vmatprep.subr.mxu0 0.0
    %1885 = vmatpush1.msra.mxu0 0.0
    %1886 = vmatprep.subr.mxu0 0.0
    %1887 = vmatpush1.msra.mxu0 0.0
    %1888 = vmatprep.subr.mxu0 0.0
    %1889 = vmatpush1.msra.mxu0 0.0
    %1890 = vmatprep.subr.mxu0 0.0
    %1891 = vmatpush1.msra.mxu0 0.0
    %1892 = vmatprep.subr.mxu0 0.0
    %1893 = vmatpush1.msra.mxu0 0.0
    %1894 = vmatprep.subr.mxu0 0.0
    %1895 = vmatpush1.msra.mxu0 0.0
    %1896 = vmatprep.subr.mxu0 0.0
    %1897 = vmatpush1.msra.mxu0 0.0
    %1898 = vmatprep.subr.mxu0 0.0
    %1899 = vmatpush1.msra.mxu0 0.0
    %1900 = vmatprep.subr.mxu0 0.0
    %1901 = vmatpush1.msra.mxu0 0.0
    %1902 = vmatprep.subr.mxu0 0.0
    %1903 = vmatpush1.msra.mxu0 0.0
    %1904 = vmatprep.subr.mxu0 0.0
    %1905 = vmatpush1.msra.mxu0 0.0
    %1906 = vmatprep.subr.mxu0 0.0
    %1907 = vmatpush1.msra.mxu0 0.0
    %1908 = vmatprep.subr.mxu0 0.0
    %1909 = vmatpush1.msra.mxu0 %v1873
    %1910 = vmatprep.subr.mxu0 0.0
    %1911 = vmatpush2.msra.mxu0 0.0
    %1912 = vmatprep.subr.mxu0 0.0
    %1913 = vmatpush2.msra.mxu0 0.0
    %1914 = vmatprep.subr.mxu0 0.0
    %1915 = vmatpush2.msra.mxu0 0.0
    %1916 = vmatprep.subr.mxu0 0.0
    %1917 = vmatpush2.msra.mxu0 0.0
    %1918 = vmatprep.subr.mxu0 0.0
    %1919 = vmatpush2.msra.mxu0 0.0
    %1920 = vmatprep.subr.mxu0 0.0
    %1921 = vmatpush2.msra.mxu0 0.0
    %1922 = vmatprep.subr.mxu0 0.0
    %1923 = vmatpush2.msra.mxu0 0.0
    %1924 = vmatprep.subr.mxu0 0.0
    %1925 = vmatpush2.msra.mxu0 0.0
    %1926 = vmatprep.subr.mxu0 0.0
    %1927 = vmatpush2.msra.mxu0 0.0
    %1928 = vmatprep.subr.mxu0 0.0
    %1929 = vmatpush2.msra.mxu0 0.0
    %1930 = vmatprep.subr.mxu0 0.0
    %1931 = vmatpush2.msra.mxu0 0.0
    %1932 = vmatprep.subr.mxu0 0.0
    %1933 = vmatpush2.msra.mxu0 0.0
    %1934 = vmatprep.subr.mxu0 0.0
    %1935 = vmatpush2.msra.mxu0 0.0
    %1936 = vmatprep.subr.mxu0 0.0
    %1937 = vmatpush2.msra.mxu0 0.0
    %1938 = vmatprep.subr.mxu0 0.0
    %1939 = vmatpush2.msra.mxu0 0.0
    %1940 = vmatprep.subr.mxu0 0.0
    %1941 = vmatpush2.msra.mxu0 0.0
    %1942 = vmatprep.mubr.f32.mxu0 0.0
    %1943 = vmatmul.mubr.f32.gmra.mxu0 %v1876
    %v1944 = vpop.f32.mrf.mxu0
    %v1945 = vadd.f32 0.0, %v1944
    %v1946 = vpop.f32.mrf.mxu0
    %1947 = vdwg.mxu0
    %s1948 = scalar_lea.vmem %s9, 24
    %v1949 = vld [vmem:[%s1948] sm:$0xff]
    %v1951 = vsel %vm385, %v1869, 0
    %v1954 = vsel %vm385, %v1945, 0
    %1956 = vmatprep.subr.mxu0 0.0
    %1957 = vmatpush1.msra.mxu0 0.0
    %1958 = vmatprep.subr.mxu0 0.0
    %1959 = vmatpush1.msra.mxu0 0.0
    %1960 = vmatprep.subr.mxu0 0.0
    %1961 = vmatpush1.msra.mxu0 0.0
    %1962 = vmatprep.subr.mxu0 0.0
    %1963 = vmatpush1.msra.mxu0 0.0
    %1964 = vmatprep.subr.mxu0 0.0
    %1965 = vmatpush1.msra.mxu0 0.0
    %1966 = vmatprep.subr.mxu0 0.0
    %1967 = vmatpush1.msra.mxu0 0.0
    %1968 = vmatprep.subr.mxu0 0.0
    %1969 = vmatpush1.msra.mxu0 0.0
    %1970 = vmatprep.subr.mxu0 0.0
    %1971 = vmatpush1.msra.mxu0 0.0
    %1972 = vmatprep.subr.mxu0 0.0
    %1973 = vmatpush1.msra.mxu0 0.0
    %1974 = vmatprep.subr.mxu0 0.0
    %1975 = vmatpush1.msra.mxu0 0.0
    %1976 = vmatprep.subr.mxu0 0.0
    %1977 = vmatpush1.msra.mxu0 0.0
    %1978 = vmatprep.subr.mxu0 0.0
    %1979 = vmatpush1.msra.mxu0 0.0
    %1980 = vmatprep.subr.mxu0 0.0
    %1981 = vmatpush1.msra.mxu0 0.0
    %1982 = vmatprep.subr.mxu0 0.0
    %1983 = vmatpush1.msra.mxu0 0.0
    %1984 = vmatprep.subr.mxu0 0.0
    %1985 = vmatpush1.msra.mxu0 0.0
    %1986 = vmatprep.subr.mxu0 0.0
    %1987 = vmatpush1.msra.mxu0 %v1949
    %1988 = vmatprep.subr.mxu0 0.0
    %1989 = vmatpush2.msra.mxu0 0.0
    %1990 = vmatprep.subr.mxu0 0.0
    %1991 = vmatpush2.msra.mxu0 0.0
    %1992 = vmatprep.subr.mxu0 0.0
    %1993 = vmatpush2.msra.mxu0 0.0
    %1994 = vmatprep.subr.mxu0 0.0
    %1995 = vmatpush2.msra.mxu0 0.0
    %1996 = vmatprep.subr.mxu0 0.0
    %1997 = vmatpush2.msra.mxu0 0.0
    %1998 = vmatprep.subr.mxu0 0.0
    %1999 = vmatpush2.msra.mxu0 0.0
    %2000 = vmatprep.subr.mxu0 0.0
    %2001 = vmatpush2.msra.mxu0 0.0
    %2002 = vmatprep.subr.mxu0 0.0
    %2003 = vmatpush2.msra.mxu0 0.0
    %2004 = vmatprep.subr.mxu0 0.0
    %2005 = vmatpush2.msra.mxu0 0.0
    %2006 = vmatprep.subr.mxu0 0.0
    %2007 = vmatpush2.msra.mxu0 0.0
    %2008 = vmatprep.subr.mxu0 0.0
    %2009 = vmatpush2.msra.mxu0 0.0
    %2010 = vmatprep.subr.mxu0 0.0
    %2011 = vmatpush2.msra.mxu0 0.0
    %2012 = vmatprep.subr.mxu0 0.0
    %2013 = vmatpush2.msra.mxu0 0.0
    %2014 = vmatprep.subr.mxu0 0.0
    %2015 = vmatpush2.msra.mxu0 0.0
    %2016 = vmatprep.subr.mxu0 0.0
    %2017 = vmatpush2.msra.mxu0 0.0
    %2018 = vmatprep.subr.mxu0 0.0
    %2019 = vmatpush2.msra.mxu0 0.0
    %2020 = vmatprep.mubr.f32.mxu0 0.0
    %2021 = vmatmul.mubr.f32.gmra.mxu0 %v1951
    %v2022 = vpop.f32.mrf.mxu0
    %v2023 = vadd.f32 0.0, %v2022
    %v2024 = vpop.f32.mrf.mxu0
    %2025 = vmatprep.mubr.f32.mxu0 0.0
    %2026 = vmatmul.mubr.f32.gmra.mxu0 %v1954
    %v2027 = vpop.f32.mrf.mxu0
    %v2028 = vadd.f32 0.0, %v2027
    %v2029 = vpop.f32.mrf.mxu0
    %2030 = vdwg.mxu0
    %v2031 = vadd.f32 %v1616, %v2023
    %v2032 = vadd.f32 %v1617, %v2028
    %v2033 = vld [vmem:[%s10] sm:$0x1]
    %v2035 = vlaneseq
    %v2036 = vshrl.u32 %v2035, 7
    %v2037 = vsub.s32 0, %v2036
    %v2038 = vrot.slane %v2033, %v2037
    %v2040 = vadd.f32 %v2031, %v2038
    %v2041 = vadd.f32 %v2032, %v2038
    %v2042 = vadd.f32 %v71, %v2040
    %v2043 = vadd.f32 %v72, %v2041
    %v2044 = vsel %vm73, %v2042, 0.0
    %2045 = vadd.xlane.f32.xlu0 %v2044
    %v2046 = vpop.xlane.xlu0 %2045
    %v2047 = vsel %vm73, %v2043, 0.0
    %2048 = vadd.xlane.f32.xlu0 %v2047
    %v2049 = vpop.xlane.xlu0 %2048
    %v2050 = vmul.f32 %v2046, %v80
    %v2051 = vmul.f32 %v2049, %v80
    %v2052 = vsub.f32 %v2042, %v2050
    %v2053 = vsub.f32 %v2043, %v2051
    %v2054 = vmul.f32 %v2052, %v2052
    %v2055 = vmul.f32 %v2053, %v2053
    %v2056 = vsel %vm73, %v2054, 0.0
    %2057 = vadd.xlane.f32.xlu0 %v2056
    %v2058 = vpop.xlane.xlu0 %2057
    %v2059 = vsel %vm73, %v2055, 0.0
    %2060 = vadd.xlane.f32.xlu0 %v2059
    %v2061 = vpop.xlane.xlu0 %2060
    %v2062 = vmul.f32 %v2058, %v80
    %v2063 = vmul.f32 %v2061, %v80
    %v2064 = vadd.f32 %v2062, 1e-05
    %v2065 = vadd.f32 %v2063, 1e-05
    %v2066 = vrsqrt.pop %v2064
    %v2067 = vrsqrt.pop %v2065
    %v2068 = vmul.f32 %v2052, %v2066
    %v2069 = vmul.f32 %v2053, %v2067
    %v2070 = vld [vmem:[%s11] sm:$0x1]
    %v2072 = vlaneseq
    %v2073 = vshrl.u32 %v2072, 7
    %v2074 = vsub.s32 0, %v2073
    %v2075 = vrot.slane %v2070, %v2074
    %v2077 = vmul.f32 %v2068, %v2075
    %v2078 = vmul.f32 %v2069, %v2075
    %v2079 = vld [vmem:[%s12] sm:$0x1]
    %v2081 = vlaneseq
    %v2082 = vshrl.u32 %v2081, 7
    %v2083 = vsub.s32 0, %v2082
    %v2084 = vrot.slane %v2079, %v2083
    %v2086 = vadd.f32 %v2077, %v2084
    %v2087 = vadd.f32 %v2078, %v2084
    %v2088 = vld [vmem:[%s13] sm:$0xff]
    %v2089 = vld [vmem:[%s13 + $0x8] sm:$0xff]
    %v2090 = vld [vmem:[%s13 + $0x10] sm:$0xff]
    %v2091 = vld [vmem:[%s13 + $0x18] sm:$0xff]
    %v2092 = vld [vmem:[%s14] sm:$0x1]
    %v2094 = vlaneseq
    %v2095 = vshrl.u32 %v2094, 7
    %v2096 = vsub.s32 0, %v2095
    %v2097 = vrot.slane %v2092, %v2096
    %v2100 = vsel %vm73, %v2086, 0
    %v2103 = vsel %vm73, %v2087, 0
    %2105 = vmatprep.subr.mxu0 0.0
    %2106 = vmatpush1.msra.mxu0 0.0
    %2107 = vmatprep.subr.mxu0 0.0
    %2108 = vmatpush1.msra.mxu0 0.0
    %2109 = vmatprep.subr.mxu0 0.0
    %2110 = vmatpush1.msra.mxu0 0.0
    %2111 = vmatprep.subr.mxu0 0.0
    %2112 = vmatpush1.msra.mxu0 0.0
    %2113 = vmatprep.subr.mxu0 0.0
    %2114 = vmatpush1.msra.mxu0 0.0
    %2115 = vmatprep.subr.mxu0 0.0
    %2116 = vmatpush1.msra.mxu0 0.0
    %2117 = vmatprep.subr.mxu0 0.0
    %2118 = vmatpush1.msra.mxu0 0.0
    %2119 = vmatprep.subr.mxu0 0.0
    %2120 = vmatpush1.msra.mxu0 0.0
    %2121 = vmatprep.subr.mxu0 0.0
    %2122 = vmatpush1.msra.mxu0 0.0
    %2123 = vmatprep.subr.mxu0 0.0
    %2124 = vmatpush1.msra.mxu0 0.0
    %2125 = vmatprep.subr.mxu0 0.0
    %2126 = vmatpush1.msra.mxu0 0.0
    %2127 = vmatprep.subr.mxu0 0.0
    %2128 = vmatpush1.msra.mxu0 0.0
    %2129 = vmatprep.subr.mxu0 0.0
    %2130 = vmatpush1.msra.mxu0 %v2091
    %2131 = vmatprep.subr.mxu0 0.0
    %2132 = vmatpush1.msra.mxu0 %v2090
    %2133 = vmatprep.subr.mxu0 0.0
    %2134 = vmatpush1.msra.mxu0 %v2089
    %2135 = vmatprep.subr.mxu0 0.0
    %2136 = vmatpush1.msra.mxu0 %v2088
    %2137 = vmatprep.subr.mxu0 0.0
    %2138 = vmatpush2.msra.mxu0 0.0
    %2139 = vmatprep.subr.mxu0 0.0
    %2140 = vmatpush2.msra.mxu0 0.0
    %2141 = vmatprep.subr.mxu0 0.0
    %2142 = vmatpush2.msra.mxu0 0.0
    %2143 = vmatprep.subr.mxu0 0.0
    %2144 = vmatpush2.msra.mxu0 0.0
    %2145 = vmatprep.subr.mxu0 0.0
    %2146 = vmatpush2.msra.mxu0 0.0
    %2147 = vmatprep.subr.mxu0 0.0
    %2148 = vmatpush2.msra.mxu0 0.0
    %2149 = vmatprep.subr.mxu0 0.0
    %2150 = vmatpush2.msra.mxu0 0.0
    %2151 = vmatprep.subr.mxu0 0.0
    %2152 = vmatpush2.msra.mxu0 0.0
    %2153 = vmatprep.subr.mxu0 0.0
    %2154 = vmatpush2.msra.mxu0 0.0
    %2155 = vmatprep.subr.mxu0 0.0
    %2156 = vmatpush2.msra.mxu0 0.0
    %2157 = vmatprep.subr.mxu0 0.0
    %2158 = vmatpush2.msra.mxu0 0.0
    %2159 = vmatprep.subr.mxu0 0.0
    %2160 = vmatpush2.msra.mxu0 0.0
    %2161 = vmatprep.subr.mxu0 0.0
    %2162 = vmatpush2.msra.mxu0 0.0
    %2163 = vmatprep.subr.mxu0 0.0
    %2164 = vmatpush2.msra.mxu0 0.0
    %2165 = vmatprep.subr.mxu0 0.0
    %2166 = vmatpush2.msra.mxu0 0.0
    %2167 = vmatprep.subr.mxu0 0.0
    %2168 = vmatpush2.msra.mxu0 0.0
    %2169 = vmatprep.mubr.f32.mxu0 0.0
    %2170 = vmatmul.mubr.f32.gmra.mxu0 %v2100
    %v2171 = vpop.f32.mrf.mxu0
    %v2172 = vadd.f32 %v2097, %v2171
    %v2173 = vpop.f32.mrf.mxu0
    %2174 = vmatprep.mubr.f32.mxu0 0.0
    %2175 = vmatmul.mubr.f32.gmra.mxu0 %v2103
    %v2176 = vpop.f32.mrf.mxu0
    %v2177 = vadd.f32 %v2097, %v2176
    %v2178 = vpop.f32.mrf.mxu0
    %2179 = vdwg.mxu0
    %v2180 = vmul.f32 %v2172, 0.5
    %v2181 = vmul.f32 %v2177, 0.5
    %v2182 = vmul.f32 %v2172, 0.70710677
    %v2183 = vmul.f32 %v2177, 0.70710677
    %v2184 = verf.f32.pop %v2182
    %v2185 = verf.f32.pop %v2183
    %v2186 = vadd.f32 %v2184, 1.0
    %v2187 = vadd.f32 %v2185, 1.0
    %v2188 = vmul.f32 %v2180, %v2186
    %v2189 = vmul.f32 %v2181, %v2187
    %v2190 = vld [vmem:[%s15] sm:$0xff]
    %v2191 = vld [vmem:[%s15 + $0x8] sm:$0xff]
    %v2192 = vld [vmem:[%s15 + $0x10] sm:$0xff]
    %v2193 = vld [vmem:[%s15 + $0x18] sm:$0xff]
    %v2194 = vld [vmem:[%s15 + $0x20] sm:$0xff]
    %v2195 = vld [vmem:[%s15 + $0x28] sm:$0xff]
    %v2196 = vld [vmem:[%s15 + $0x30] sm:$0xff]
    %v2197 = vld [vmem:[%s15 + $0x38] sm:$0xff]
    %v2198 = vld [vmem:[%s15 + $0x40] sm:$0xff]
    %v2199 = vld [vmem:[%s15 + $0x48] sm:$0xff]
    %v2200 = vld [vmem:[%s15 + $0x50] sm:$0xff]
    %v2201 = vld [vmem:[%s15 + $0x58] sm:$0xff]
    %v2202 = vld [vmem:[%s15 + $0x60] sm:$0xff]
    %v2203 = vld [vmem:[%s15 + $0x68] sm:$0xff]
    %v2204 = vld [vmem:[%s15 + $0x70] sm:$0xff]
    %v2205 = vld [vmem:[%s15 + $0x78] sm:$0xff]
    %v2206 = vld [vmem:[%s16] sm:$0x1]
    %v2208 = vlaneseq
    %v2209 = vshrl.u32 %v2208, 7
    %v2210 = vsub.s32 0, %v2209
    %v2211 = vrot.slane %v2206, %v2210
    %2213 = vmatprep.subr.mxu0 0.0
    %2214 = vmatpush1.msra.mxu0 %v2205
    %2215 = vmatprep.subr.mxu0 0.0
    %2216 = vmatpush1.msra.mxu0 %v2204
    %2217 = vmatprep.subr.mxu0 0.0
    %2218 = vmatpush1.msra.mxu0 %v2203
    %2219 = vmatprep.subr.mxu0 0.0
    %2220 = vmatpush1.msra.mxu0 %v2202
    %2221 = vmatprep.subr.mxu0 0.0
    %2222 = vmatpush1.msra.mxu0 %v2201
    %2223 = vmatprep.subr.mxu0 0.0
    %2224 = vmatpush1.msra.mxu0 %v2200
    %2225 = vmatprep.subr.mxu0 0.0
    %2226 = vmatpush1.msra.mxu0 %v2199
    %2227 = vmatprep.subr.mxu0 0.0
    %2228 = vmatpush1.msra.mxu0 %v2198
    %2229 = vmatprep.subr.mxu0 0.0
    %2230 = vmatpush1.msra.mxu0 %v2197
    %2231 = vmatprep.subr.mxu0 0.0
    %2232 = vmatpush1.msra.mxu0 %v2196
    %2233 = vmatprep.subr.mxu0 0.0
    %2234 = vmatpush1.msra.mxu0 %v2195
    %2235 = vmatprep.subr.mxu0 0.0
    %2236 = vmatpush1.msra.mxu0 %v2194
    %2237 = vmatprep.subr.mxu0 0.0
    %2238 = vmatpush1.msra.mxu0 %v2193
    %2239 = vmatprep.subr.mxu0 0.0
    %2240 = vmatpush1.msra.mxu0 %v2192
    %2241 = vmatprep.subr.mxu0 0.0
    %2242 = vmatpush1.msra.mxu0 %v2191
    %2243 = vmatprep.subr.mxu0 0.0
    %2244 = vmatpush1.msra.mxu0 %v2190
    %2245 = vmatprep.subr.mxu0 0.0
    %2246 = vmatpush2.msra.mxu0 0.0
    %2247 = vmatprep.subr.mxu0 0.0
    %2248 = vmatpush2.msra.mxu0 0.0
    %2249 = vmatprep.subr.mxu0 0.0
    %2250 = vmatpush2.msra.mxu0 0.0
    %2251 = vmatprep.subr.mxu0 0.0
    %2252 = vmatpush2.msra.mxu0 0.0
    %2253 = vmatprep.subr.mxu0 0.0
    %2254 = vmatpush2.msra.mxu0 0.0
    %2255 = vmatprep.subr.mxu0 0.0
    %2256 = vmatpush2.msra.mxu0 0.0
    %2257 = vmatprep.subr.mxu0 0.0
    %2258 = vmatpush2.msra.mxu0 0.0
    %2259 = vmatprep.subr.mxu0 0.0
    %2260 = vmatpush2.msra.mxu0 0.0
    %2261 = vmatprep.subr.mxu0 0.0
    %2262 = vmatpush2.msra.mxu0 0.0
    %2263 = vmatprep.subr.mxu0 0.0
    %2264 = vmatpush2.msra.mxu0 0.0
    %2265 = vmatprep.subr.mxu0 0.0
    %2266 = vmatpush2.msra.mxu0 0.0
    %2267 = vmatprep.subr.mxu0 0.0
    %2268 = vmatpush2.msra.mxu0 0.0
    %2269 = vmatprep.subr.mxu0 0.0
    %2270 = vmatpush2.msra.mxu0 0.0
    %2271 = vmatprep.subr.mxu0 0.0
    %2272 = vmatpush2.msra.mxu0 0.0
    %2273 = vmatprep.subr.mxu0 0.0
    %2274 = vmatpush2.msra.mxu0 0.0
    %2275 = vmatprep.subr.mxu0 0.0
    %2276 = vmatpush2.msra.mxu0 0.0
    %2277 = vmatprep.mubr.f32.mxu0 0.0
    %2278 = vmatmul.mubr.f32.gmra.mxu0 %v2188
    %v2279 = vpop.f32.mrf.mxu0
    %v2280 = vadd.f32 %v2211, %v2279
    %v2281 = vpop.f32.mrf.mxu0
    %2282 = vmatprep.mubr.f32.mxu0 0.0
    %2283 = vmatmul.mubr.f32.gmra.mxu0 %v2189
    %v2284 = vpop.f32.mrf.mxu0
    %v2285 = vadd.f32 %v2211, %v2284
    %v2286 = vpop.f32.mrf.mxu0
    %2287 = vdwg.mxu0
    %v2288 = vadd.f32 %v2042, %v2280
    %v2289 = vadd.f32 %v2043, %v2285
    %2290 = vst.msk [vmem:[#allocation5] sm:$0xff] %vm73, %v2288
    %2291 = vst.msk [vmem:[#allocation5 + $0x8] sm:$0xff] %vm73, %v2289
    // Predicated region
    $region74: #{tpu_custom_call.1} parent=1 // pred_check
      _
    $region75: #{tpu_custom_call.1} parent=1 // pred_check_branch
      %2293 = sbr.rel (0) target = $region77
    $region76: #{tpu_custom_call.1} parent=1 // pred_region
      %s2295 = ssub.s32 256, 256
      %2296 = vsyncadd [#allocation4], %s2295
      %s2297 = sshll.u32 [#allocation5], 4
      %s2298 = int_to_ptr.vmem [resolvable:$true] %s2297
      %2303 = dma.vmem_to_hbm [thread:$0]  %s2298, 256, %s17, [#allocation4], 128, 128, 8
    $region77: #{tpu_custom_call.1} parent=1 // pred_fallthru
      _
    // Predicated region
    $region78: #{tpu_custom_call.1} parent=1 // pred_check
      _
    $region79: #{tpu_custom_call.1} parent=1 // pred_check_branch
      %2305 = sbr.rel (0) target = $region81
    $region80: #{tpu_custom_call.1} parent=1 // pred_region
      %2306 = dma.done [#allocation4], 256
    $region81: #{tpu_custom_call.1} parent=1 // pred_fallthru
      _
    %2307 = vsyncpa [#allocation3], 1
    %2308 = vsyncpa [#allocation4], 1

// kernel: tpu_custom_call.1
$region0: #{tpu_custom_call.1}
  #allocation0 [shape = 'u32[]', space=smem, size = 0x4, offset = 0x4, fixed_abs, tag = 'smem constant byte address 0x4 - core index']
  #allocation1 [shape = 'u32[144,128]{1,0:T(1,128)}', space=vmem, size = 0x12000, scoped, tag = 'internal scratch']
  %s0 = inlined_call_operand.hbm [shape: f32[16,32], index: 0, kind: input, shape index: {}]
  %s1 = inlined_call_operand.vmem [shape: f32[1,32], index: 1, kind: input, shape index: {}]
  %s2 = inlined_call_operand.vmem [shape: f32[1,32], index: 2, kind: input, shape index: {}]
  %s3 = inlined_call_operand.vmem [shape: f32[32,32], index: 3, kind: input, shape index: {}]
  %s4 = inlined_call_operand.vmem [shape: f32[32,32], index: 4, kind: input, shape index: {}]
  %s5 = inlined_call_operand.vmem [shape: f32[32,32], index: 5, kind: input, shape index: {}]
  %s6 = inlined_call_operand.vmem [shape: f32[1,32], index: 6, kind: input, shape index: {}]
  %s7 = inlined_call_operand.vmem [shape: f32[1,32], index: 7, kind: input, shape index: {}]
  %s8 = inlined_call_operand.vmem [shape: f32[1,32], index: 8, kind: input, shape index: {}]
  %s9 = inlined_call_operand.vmem [shape: f32[4,8,32], index: 9, kind: input, shape index: {}]
  %s10 = inlined_call_operand.vmem [shape: f32[1,32], index: 10, kind: input, shape index: {}]
  %s11 = inlined_call_operand.vmem [shape: f32[1,32], index: 11, kind: input, shape index: {}]
  %s12 = inlined_call_operand.vmem [shape: f32[1,32], index: 12, kind: input, shape index: {}]
  %s13 = inlined_call_operand.vmem [shape: f32[32,128], index: 13, kind: input, shape index: {}]
  %s14 = inlined_call_operand.vmem [shape: f32[1,128], index: 14, kind: input, shape index: {}]
  %s15 = inlined_call_operand.vmem [shape: f32[128,32], index: 15, kind: input, shape index: {}]
  %s16 = inlined_call_operand.vmem [shape: f32[1,32], index: 16, kind: input, shape index: {}]
  %s17 = inlined_call_operand.hbm [shape: f32[16,32], index: 17, kind: output, shape index: {}]
  %s18 = sld [smem:[#allocation0]]
  $region82: #{tpu_custom_call.1} parent=0
    _
  %s20 = ssub.s32 1, %s18
  %s21 = scalar_select 0, %s20, %s18
  $region1: #{tpu_custom_call.1} parent=0
    #allocation2 [shape = 'u8[8192]{0}', space=vmem, size = 0x2000, scoped, tag = 'input window, operand 0, single buffered']
    #allocation3 [shape = 's32[1]{0}', space=sflag, size = 0x4, scoped, tag = 'scoped memory for tpu_custom_call.1']
    #allocation4 [shape = 's32[1]{0}', space=sflag, size = 0x4, scoped, tag = 'scoped memory for tpu_custom_call.1']
    #allocation5 [shape = 'u8[8192]{0}', space=vmem, size = 0x2000, scoped, tag = 'output window, operand 0, single buffered']
    %22 = vsyncpa [#allocation3], 0
    %23 = vsyncpa [#allocation4], 0
    // Predicated region
    $region2: #{tpu_custom_call.1} parent=1 // pred_check
      _
    $region3: #{tpu_custom_call.1} parent=1 // pred_check_branch
      %25 = sbr.rel (0) target = $region5
    $region4: #{tpu_custom_call.1} parent=1 // pred_region
      %s27 = ssub.s32 256, 256
      %28 = vsyncadd [#allocation3], %s27
      %s29 = sshll.u32 [#allocation2], 4
      %s30 = int_to_ptr.vmem [resolvable:$true] %s29
      %35 = dma.hbm_to_vmem [thread:$0]  %s0, 256, %s30, [#allocation3], 128, 128, 8
    $region5: #{tpu_custom_call.1} parent=1 // pred_fallthru
      _
    // Predicated region
    $region6: #{tpu_custom_call.1} parent=1 // pred_check
      _
    $region7: #{tpu_custom_call.1} parent=1 // pred_check_branch
      %37 = sbr.rel (0) target = $region9
    $region8: #{tpu_custom_call.1} parent=1 // pred_region
      _
    $region9: #{tpu_custom_call.1} parent=1 // pred_fallthru
      _
    // Predicated region
    $region10: #{tpu_custom_call.1} parent=1 // pred_check
      _
    $region11: #{tpu_custom_call.1} parent=1 // pred_check_branch
      %39 = sbr.rel (0) target = $region13
    $region12: #{tpu_custom_call.1} parent=1 // pred_region
      _
    $region13: #{tpu_custom_call.1} parent=1 // pred_fallthru
      _
    // Predicated region
    $region14: #{tpu_custom_call.1} parent=1 // pred_check
      _
    $region15: #{tpu_custom_call.1} parent=1 // pred_check_branch
      %41 = sbr.rel (0) target = $region17
    $region16: #{tpu_custom_call.1} parent=1 // pred_region
      _
    $region17: #{tpu_custom_call.1} parent=1 // pred_fallthru
      _
    // Predicated region
    $region18: #{tpu_custom_call.1} parent=1 // pred_check
      _
    $region19: #{tpu_custom_call.1} parent=1 // pred_check_branch
      %43 = sbr.rel (0) target = $region21
    $region20: #{tpu_custom_call.1} parent=1 // pred_region
      _
    $region21: #{tpu_custom_call.1} parent=1 // pred_fallthru
      _
    // Predicated region
    $region22: #{tpu_custom_call.1} parent=1 // pred_check
      _
    $region23: #{tpu_custom_call.1} parent=1 // pred_check_branch
      %45 = sbr.rel (0) target = $region25
    $region24: #{tpu_custom_call.1} parent=1 // pred_region
      _
    $region25: #{tpu_custom_call.1} parent=1 // pred_fallthru
      _
    // Predicated region
    $region26: #{tpu_custom_call.1} parent=1 // pred_check
      _
    $region27: #{tpu_custom_call.1} parent=1 // pred_check_branch
      %47 = sbr.rel (0) target = $region29
    $region28: #{tpu_custom_call.1} parent=1 // pred_region
      _
    $region29: #{tpu_custom_call.1} parent=1 // pred_fallthru
      _
    // Predicated region
    $region30: #{tpu_custom_call.1} parent=1 // pred_check
      _
    $region31: #{tpu_custom_call.1} parent=1 // pred_check_branch
      %49 = sbr.rel (0) target = $region33
    $region32: #{tpu_custom_call.1} parent=1 // pred_region
      _
    $region33: #{tpu_custom_call.1} parent=1 // pred_fallthru
      _
    // Predicated region
    $region34: #{tpu_custom_call.1} parent=1 // pred_check
      _
    $region35: #{tpu_custom_call.1} parent=1 // pred_check_branch
      %51 = sbr.rel (0) target = $region37
    $region36: #{tpu_custom_call.1} parent=1 // pred_region
      _
    $region37: #{tpu_custom_call.1} parent=1 // pred_fallthru
      _
    // Predicated region
    $region38: #{tpu_custom_call.1} parent=1 // pred_check
      _
    $region39: #{tpu_custom_call.1} parent=1 // pred_check_branch
      %53 = sbr.rel (0) target = $region41
    $region40: #{tpu_custom_call.1} parent=1 // pred_region
      _
    $region41: #{tpu_custom_call.1} parent=1 // pred_fallthru
      _
    // Predicated region
    $region42: #{tpu_custom_call.1} parent=1 // pred_check
      _
    $region43: #{tpu_custom_call.1} parent=1 // pred_check_branch
      %55 = sbr.rel (0) target = $region45
    $region44: #{tpu_custom_call.1} parent=1 // pred_region
      _
    $region45: #{tpu_custom_call.1} parent=1 // pred_fallthru
      _
    // Predicated region
    $region46: #{tpu_custom_call.1} parent=1 // pred_check
      _
    $region47: #{tpu_custom_call.1} parent=1 // pred_check_branch
      %57 = sbr.rel (0) target = $region49
    $region48: #{tpu_custom_call.1} parent=1 // pred_region
      _
    $region49: #{tpu_custom_call.1} parent=1 // pred_fallthru
      _
    // Predicated region
    $region50: #{tpu_custom_call.1} parent=1 // pred_check
      _
    $region51: #{tpu_custom_call.1} parent=1 // pred_check_branch
      %59 = sbr.rel (0) target = $region53
    $region52: #{tpu_custom_call.1} parent=1 // pred_region
      _
    $region53: #{tpu_custom_call.1} parent=1 // pred_fallthru
      _
    // Predicated region
    $region54: #{tpu_custom_call.1} parent=1 // pred_check
      _
    $region55: #{tpu_custom_call.1} parent=1 // pred_check_branch
      %61 = sbr.rel (0) target = $region57
    $region56: #{tpu_custom_call.1} parent=1 // pred_region
      _
    $region57: #{tpu_custom_call.1} parent=1 // pred_fallthru
      _
    // Predicated region
    $region58: #{tpu_custom_call.1} parent=1 // pred_check
      _
    $region59: #{tpu_custom_call.1} parent=1 // pred_check_branch
      %63 = sbr.rel (0) target = $region61
    $region60: #{tpu_custom_call.1} parent=1 // pred_region
      _
    $region61: #{tpu_custom_call.1} parent=1 // pred_fallthru
      _
    // Predicated region
    $region62: #{tpu_custom_call.1} parent=1 // pred_check
      _
    $region63: #{tpu_custom_call.1} parent=1 // pred_check_branch
      %65 = sbr.rel (0) target = $region65
    $region64: #{tpu_custom_call.1} parent=1 // pred_region
      _
    $region65: #{tpu_custom_call.1} parent=1 // pred_fallthru
      _
    // Predicated region
    $region66: #{tpu_custom_call.1} parent=1 // pred_check
      _
    $region67: #{tpu_custom_call.1} parent=1 // pred_check_branch
      %67 = sbr.rel (0) target = $region69
    $region68: #{tpu_custom_call.1} parent=1 // pred_region
      _
    $region69: #{tpu_custom_call.1} parent=1 // pred_fallthru
      _
    // Predicated region
    $region70: #{tpu_custom_call.1} parent=1 // pred_check
      _
    $region71: #{tpu_custom_call.1} parent=1 // pred_check_branch
      %69 = sbr.rel (0) target = $region73
    $region72: #{tpu_custom_call.1} parent=1 // pred_region
      %70 = dma.done [#allocation3], 256
    $region73: #{tpu_custom_call.1} parent=1 // pred_fallthru
      _
    %v71 = vld [vmem:[#allocation2] sm:$0xff]
    %v72 = vld [vmem:[#allocation2 + $0x8] sm:$0xff]
    %vm73 = vcmask 261120
    %v74 = vsel %vm73, %v71, 0.0
    %75 = vadd.xlane.f32.xlu0 %v74
    %v76 = vpop.xlane.xlu0 %75
    %v77 = vsel %vm73, %v72, 0.0
    %78 = vadd.xlane.f32.xlu0 %v77
    %v79 = vpop.xlane.xlu0 %78
    %v80 = vrcp.pop 32.0
    %v81 = vmul.f32 %v76, %v80
    %v82 = vmul.f32 %v79, %v80
    %v83 = vsub.f32 %v71, %v81
    %v84 = vsub.f32 %v72, %v82
    %v85 = vmul.f32 %v83, %v83
    %v86 = vmul.f32 %v84, %v84
    %v87 = vsel %vm73, %v85, 0.0
    %88 = vadd.xlane.f32.xlu0 %v87
    %v89 = vpop.xlane.xlu0 %88
    %v90 = vsel %vm73, %v86, 0.0
    %91 = vadd.xlane.f32.xlu0 %v90
    %v92 = vpop.xlane.xlu0 %91
    %v93 = vmul.f32 %v89, %v80
    %v94 = vmul.f32 %v92, %v80
    %v95 = vadd.f32 %v93, 1e-05
    %v96 = vadd.f32 %v94, 1e-05
    %v97 = vrsqrt.pop %v95
    %v98 = vrsqrt.pop %v96
    %v99 = vmul.f32 %v83, %v97
    %v100 = vmul.f32 %v84, %v98
    %v101 = vld [vmem:[%s1] sm:$0x1]
    %v103 = vlaneseq
    %v104 = vshrl.u32 %v103, 7
    %v105 = vsub.s32 0, %v104
    %v106 = vrot.slane %v101, %v105
    %v108 = vmul.f32 %v99, %v106
    %v109 = vmul.f32 %v100, %v106
    %v110 = vld [vmem:[%s2] sm:$0x1]
    %v112 = vlaneseq
    %v113 = vshrl.u32 %v112, 7
    %v114 = vsub.s32 0, %v113
    %v115 = vrot.slane %v110, %v114
    %v117 = vadd.f32 %v108, %v115
    %v118 = vadd.f32 %v109, %v115
    %v119 = vld [vmem:[%s3] sm:$0xff]
    %v120 = vld [vmem:[%s3 + $0x8] sm:$0xff]
    %v121 = vld [vmem:[%s3 + $0x10] sm:$0xff]
    %v122 = vld [vmem:[%s3 + $0x18] sm:$0xff]
    %v123 = vld [vmem:[%s6] sm:$0x1]
    %v125 = vlaneseq
    %v126 = vshrl.u32 %v125, 7
    %v127 = vsub.s32 0, %v126
    %v128 = vrot.slane %v123, %v127
    %v131 = vsel %vm73, %v117, 0
    %v134 = vsel %vm73, %v118, 0
    %136 = vmatprep.subr.mxu0 0.0
    %137 = vmatpush1.msra.mxu0 0.0
    %138 = vmatprep.subr.mxu0 0.0
    %139 = vmatpush1.msra.mxu0 0.0
    %140 = vmatprep.subr.mxu0 0.0
    %141 = vmatpush1.msra.mxu0 0.0
    %142 = vmatprep.subr.mxu0 0.0
    %143 = vmatpush1.msra.mxu0 0.0
    %144 = vmatprep.subr.mxu0 0.0
    %145 = vmatpush1.msra.mxu0 0.0
    %146 = vmatprep.subr.mxu0 0.0
    %147 = vmatpush1.msra.mxu0 0.0
    %148 = vmatprep.subr.mxu0 0.0
    %149 = vmatpush1.msra.mxu0 0.0
    %150 = vmatprep.subr.mxu0 0.0
    %151 = vmatpush1.msra.mxu0 0.0
    %152 = vmatprep.subr.mxu0 0.0
    %153 = vmatpush1.msra.mxu0 0.0
    %154 = vmatprep.subr.mxu0 0.0
    %155 = vmatpush1.msra.mxu0 0.0
    %156 = vmatprep.subr.mxu0 0.0
    %157 = vmatpush1.msra.mxu0 0.0
    %158 = vmatprep.subr.mxu0 0.0
    %159 = vmatpush1.msra.mxu0 0.0
    %160 = vmatprep.subr.mxu0 0.0
    %161 = vmatpush1.msra.mxu0 %v122
    %162 = vmatprep.subr.mxu0 0.0
    %163 = vmatpush1.msra.mxu0 %v121
    %164 = vmatprep.subr.mxu0 0.0
    %165 = vmatpush1.msra.mxu0 %v120
    %166 = vmatprep.subr.mxu0 0.0
    %167 = vmatpush1.msra.mxu0 %v119
    %168 = vmatprep.subr.mxu0 0.0
    %169 = vmatpush2.msra.mxu0 0.0
    %170 = vmatprep.subr.mxu0 0.0
    %171 = vmatpush2.msra.mxu0 0.0
    %172 = vmatprep.subr.mxu0 0.0
    %173 = vmatpush2.msra.mxu0 0.0
    %174 = vmatprep.subr.mxu0 0.0
    %175 = vmatpush2.msra.mxu0 0.0
    %176 = vmatprep.subr.mxu0 0.0
    %177 = vmatpush2.msra.mxu0 0.0
    %178 = vmatprep.subr.mxu0 0.0
    %179 = vmatpush2.msra.mxu0 0.0
    %180 = vmatprep.subr.mxu0 0.0
    %181 = vmatpush2.msra.mxu0 0.0
    %182 = vmatprep.subr.mxu0 0.0
    %183 = vmatpush2.msra.mxu0 0.0
    %184 = vmatprep.subr.mxu0 0.0
    %185 = vmatpush2.msra.mxu0 0.0
    %186 = vmatprep.subr.mxu0 0.0
    %187 = vmatpush2.msra.mxu0 0.0
    %188 = vmatprep.subr.mxu0 0.0
    %189 = vmatpush2.msra.mxu0 0.0
    %190 = vmatprep.subr.mxu0 0.0
    %191 = vmatpush2.msra.mxu0 0.0
    %192 = vmatprep.subr.mxu0 0.0
    %193 = vmatpush2.msra.mxu0 0.0
    %194 = vmatprep.subr.mxu0 0.0
    %195 = vmatpush2.msra.mxu0 0.0
    %196 = vmatprep.subr.mxu0 0.0
    %197 = vmatpush2.msra.mxu0 0.0
    %198 = vmatprep.subr.mxu0 0.0
    %199 = vmatpush2.msra.mxu0 0.0
    %200 = vmatprep.mubr.f32.mxu0 0.0
    %201 = vmatmul.mubr.f32.gmra.mxu0 %v131
    %v202 = vpop.f32.mrf.mxu0
    %v203 = vadd.f32 %v128, %v202
    %v204 = vpop.f32.mrf.mxu0
    %205 = vmatprep.mubr.f32.mxu0 0.0
    %206 = vmatmul.mubr.f32.gmra.mxu0 %v134
    %v207 = vpop.f32.mrf.mxu0
    %v208 = vadd.f32 %v128, %v207
    %v209 = vpop.f32.mrf.mxu0
    %210 = vdwg.mxu0
    %v211 = vld [vmem:[%s4] sm:$0xff]
    %v212 = vld [vmem:[%s4 + $0x8] sm:$0xff]
    %v213 = vld [vmem:[%s4 + $0x10] sm:$0xff]
    %v214 = vld [vmem:[%s4 + $0x18] sm:$0xff]
    %v215 = vld [vmem:[%s7] sm:$0x1]
    %v217 = vlaneseq
    %v218 = vshrl.u32 %v217, 7
    %v219 = vsub.s32 0, %v218
    %v220 = vrot.slane %v215, %v219
    %222 = vmatprep.subr.mxu0 0.0
    %223 = vmatpush1.msra.mxu0 0.0
    %224 = vmatprep.subr.mxu0 0.0
    %225 = vmatpush1.msra.mxu0 0.0
    %226 = vmatprep.subr.mxu0 0.0
    %227 = vmatpush1.msra.mxu0 0.0
    %228 = vmatprep.subr.mxu0 0.0
    %229 = vmatpush1.msra.mxu0 0.0
    %230 = vmatprep.subr.mxu0 0.0
    %231 = vmatpush1.msra.mxu0 0.0
    %232 = vmatprep.subr.mxu0 0.0
    %233 = vmatpush1.msra.mxu0 0.0
    %234 = vmatprep.subr.mxu0 0.0
    %235 = vmatpush1.msra.mxu0 0.0
    %236 = vmatprep.subr.mxu0 0.0
    %237 = vmatpush1.msra.mxu0 0.0
    %238 = vmatprep.subr.mxu0 0.0
    %239 = vmatpush1.msra.mxu0 0.0
    %240 = vmatprep.subr.mxu0 0.0
    %241 = vmatpush1.msra.mxu0 0.0
    %242 = vmatprep.subr.mxu0 0.0
    %243 = vmatpush1.msra.mxu0 0.0
    %244 = vmatprep.subr.mxu0 0.0
    %245 = vmatpush1.msra.mxu0 0.0
    %246 = vmatprep.subr.mxu0 0.0
    %247 = vmatpush1.msra.mxu0 %v214
    %248 = vmatprep.subr.mxu0 0.0
    %249 = vmatpush1.msra.mxu0 %v213
    %250 = vmatprep.subr.mxu0 0.0
    %251 = vmatpush1.msra.mxu0 %v212
    %252 = vmatprep.subr.mxu0 0.0
    %253 = vmatpush1.msra.mxu0 %v211
    %254 = vmatprep.subr.mxu0 0.0
    %255 = vmatpush2.msra.mxu0 0.0
    %256 = vmatprep.subr.mxu0 0.0
    %257 = vmatpush2.msra.mxu0 0.0
    %258 = vmatprep.subr.mxu0 0.0
    %259 = vmatpush2.msra.mxu0 0.0
    %260 = vmatprep.subr.mxu0 0.0
    %261 = vmatpush2.msra.mxu0 0.0
    %262 = vmatprep.subr.mxu0 0.0
    %263 = vmatpush2.msra.mxu0 0.0
    %264 = vmatprep.subr.mxu0 0.0
    %265 = vmatpush2.msra.mxu0 0.0
    %266 = vmatprep.subr.mxu0 0.0
    %267 = vmatpush2.msra.mxu0 0.0
    %268 = vmatprep.subr.mxu0 0.0
    %269 = vmatpush2.msra.mxu0 0.0
    %270 = vmatprep.subr.mxu0 0.0
    %271 = vmatpush2.msra.mxu0 0.0
    %272 = vmatprep.subr.mxu0 0.0
    %273 = vmatpush2.msra.mxu0 0.0
    %274 = vmatprep.subr.mxu0 0.0
    %275 = vmatpush2.msra.mxu0 0.0
    %276 = vmatprep.subr.mxu0 0.0
    %277 = vmatpush2.msra.mxu0 0.0
    %278 = vmatprep.subr.mxu0 0.0
    %279 = vmatpush2.msra.mxu0 0.0
    %280 = vmatprep.subr.mxu0 0.0
    %281 = vmatpush2.msra.mxu0 0.0
    %282 = vmatprep.subr.mxu0 0.0
    %283 = vmatpush2.msra.mxu0 0.0
    %284 = vmatprep.subr.mxu0 0.0
    %285 = vmatpush2.msra.mxu0 0.0
    %286 = vmatprep.mubr.f32.mxu0 0.0
    %287 = vmatmul.mubr.f32.gmra.mxu0 %v131
    %v288 = vpop.f32.mrf.mxu0
    %v289 = vadd.f32 %v220, %v288
    %v290 = vpop.f32.mrf.mxu0
    %291 = vmatprep.mubr.f32.mxu0 0.0
    %292 = vmatmul.mubr.f32.gmra.mxu0 %v134
    %v293 = vpop.f32.mrf.mxu0
    %v294 = vadd.f32 %v220, %v293
    %v295 = vpop.f32.mrf.mxu0
    %296 = vdwg.mxu0
    %v297 = vld [vmem:[%s5] sm:$0xff]
    %v298 = vld [vmem:[%s5 + $0x8] sm:$0xff]
    %v299 = vld [vmem:[%s5 + $0x10] sm:$0xff]
    %v300 = vld [vmem:[%s5 + $0x18] sm:$0xff]
    %v301 = vld [vmem:[%s8] sm:$0x1]
    %v303 = vlaneseq
    %v304 = vshrl.u32 %v303, 7
    %v305 = vsub.s32 0, %v304
    %v306 = vrot.slane %v301, %v305
    %308 = vmatprep.subr.mxu0 0.0
    %309 = vmatpush1.msra.mxu0 0.0
    %310 = vmatprep.subr.mxu0 0.0
    %311 = vmatpush1.msra.mxu0 0.0
    %312 = vmatprep.subr.mxu0 0.0
    %313 = vmatpush1.msra.mxu0 0.0
    %314 = vmatprep.subr.mxu0 0.0
    %315 = vmatpush1.msra.mxu0 0.0
    %316 = vmatprep.subr.mxu0 0.0
    %317 = vmatpush1.msra.mxu0 0.0
    %318 = vmatprep.subr.mxu0 0.0
    %319 = vmatpush1.msra.mxu0 0.0
    %320 = vmatprep.subr.mxu0 0.0
    %321 = vmatpush1.msra.mxu0 0.0
    %322 = vmatprep.subr.mxu0 0.0
    %323 = vmatpush1.msra.mxu0 0.0
    %324 = vmatprep.subr.mxu0 0.0
    %325 = vmatpush1.msra.mxu0 0.0
    %326 = vmatprep.subr.mxu0 0.0
    %327 = vmatpush1.msra.mxu0 0.0
    %328 = vmatprep.subr.mxu0 0.0
    %329 = vmatpush1.msra.mxu0 0.0
    %330 = vmatprep.subr.mxu0 0.0
    %331 = vmatpush1.msra.mxu0 0.0
    %332 = vmatprep.subr.mxu0 0.0
    %333 = vmatpush1.msra.mxu0 %v300
    %334 = vmatprep.subr.mxu0 0.0
    %335 = vmatpush1.msra.mxu0 %v299
    %336 = vmatprep.subr.mxu0 0.0
    %337 = vmatpush1.msra.mxu0 %v298
    %338 = vmatprep.subr.mxu0 0.0
    %339 = vmatpush1.msra.mxu0 %v297
    %340 = vmatprep.subr.mxu0 0.0
    %341 = vmatpush2.msra.mxu0 0.0
    %342 = vmatprep.subr.mxu0 0.0
    %343 = vmatpush2.msra.mxu0 0.0
    %344 = vmatprep.subr.mxu0 0.0
    %345 = vmatpush2.msra.mxu0 0.0
    %346 = vmatprep.subr.mxu0 0.0
    %347 = vmatpush2.msra.mxu0 0.0
    %348 = vmatprep.subr.mxu0 0.0
    %349 = vmatpush2.msra.mxu0 0.0
    %350 = vmatprep.subr.mxu0 0.0
    %351 = vmatpush2.msra.mxu0 0.0
    %352 = vmatprep.subr.mxu0 0.0
    %353 = vmatpush2.msra.mxu0 0.0
    %354 = vmatprep.subr.mxu0 0.0
    %355 = vmatpush2.msra.mxu0 0.0
    %356 = vmatprep.subr.mxu0 0.0
    %357 = vmatpush2.msra.mxu0 0.0
    %358 = vmatprep.subr.mxu0 0.0
    %359 = vmatpush2.msra.mxu0 0.0
    %360 = vmatprep.subr.mxu0 0.0
    %361 = vmatpush2.msra.mxu0 0.0
    %362 = vmatprep.subr.mxu0 0.0
    %363 = vmatpush2.msra.mxu0 0.0
    %364 = vmatprep.subr.mxu0 0.0
    %365 = vmatpush2.msra.mxu0 0.0
    %366 = vmatprep.subr.mxu0 0.0
    %367 = vmatpush2.msra.mxu0 0.0
    %368 = vmatprep.subr.mxu0 0.0
    %369 = vmatpush2.msra.mxu0 0.0
    %370 = vmatprep.subr.mxu0 0.0
    %371 = vmatpush2.msra.mxu0 0.0
    %372 = vmatprep.mubr.f32.mxu0 0.0
    %373 = vmatmul.mubr.f32.gmra.mxu0 %v131
    %v374 = vpop.f32.mrf.mxu0
    %v375 = vadd.f32 %v306, %v374
    %v376 = vpop.f32.mrf.mxu0
    %377 = vmatprep.mubr.f32.mxu0 0.0
    %378 = vmatmul.mubr.f32.gmra.mxu0 %v134
    %v379 = vpop.f32.mrf.mxu0
    %v380 = vadd.f32 %v306, %v379
    %v381 = vpop.f32.mrf.mxu0
    %382 = vdwg.mxu0
    %v383 = vmul.f32 %v203, 0.35355338
    %v384 = vmul.f32 %v208, 0.35355338
    %vm385 = vcmask 64512
    %v387 = vsel %vm385, %v383, 0
    %v390 = vsel %vm385, %v289, 0
    %392 = vmatprep.subr.mxu0 0.0
    %393 = vmatpush1.xpose.msra.mxu0 0.0
    %394 = vmatprep.subr.mxu0 0.0
    %395 = vmatpush1.xpose.msra.mxu0 0.0
    %396 = vmatprep.subr.mxu0 0.0
    %397 = vmatpush1.xpose.msra.mxu0 0.0
    %398 = vmatprep.subr.mxu0 0.0
    %399 = vmatpush1.xpose.msra.mxu0 0.0
    %400 = vmatprep.subr.mxu0 0.0
    %401 = vmatpush1.xpose.msra.mxu0 0.0
    %402 = vmatprep.subr.mxu0 0.0
    %403 = vmatpush1.xpose.msra.mxu0 0.0
    %404 = vmatprep.subr.mxu0 0.0
    %405 = vmatpush1.xpose.msra.mxu0 0.0
    %406 = vmatprep.subr.mxu0 0.0
    %407 = vmatpush1.xpose.msra.mxu0 0.0
    %408 = vmatprep.subr.mxu0 0.0
    %409 = vmatpush1.xpose.msra.mxu0 0.0
    %410 = vmatprep.subr.mxu0 0.0
    %411 = vmatpush1.xpose.msra.mxu0 0.0
    %412 = vmatprep.subr.mxu0 0.0
    %413 = vmatpush1.xpose.msra.mxu0 0.0
    %414 = vmatprep.subr.mxu0 0.0
    %415 = vmatpush1.xpose.msra.mxu0 0.0
    %416 = vmatprep.subr.mxu0 0.0
    %417 = vmatpush1.xpose.msra.mxu0 0.0
    %418 = vmatprep.subr.mxu0 0.0
    %419 = vmatpush1.xpose.msra.mxu0 0.0
    %420 = vmatprep.subr.mxu0 0.0
    %421 = vmatpush1.xpose.msra.mxu0 0.0
    %422 = vmatprep.subr.mxu0 0.0
    %423 = vmatpush1.xpose.msra.mxu0 %v390
    %424 = vmatprep.subr.mxu0 0.0
    %425 = vmatpush2.xpose.msra.mxu0 0.0
    %426 = vmatprep.subr.mxu0 0.0
    %427 = vmatpush2.xpose.msra.mxu0 0.0
    %428 = vmatprep.subr.mxu0 0.0
    %429 = vmatpush2.xpose.msra.mxu0 0.0
    %430 = vmatprep.subr.mxu0 0.0
    %431 = vmatpush2.xpose.msra.mxu0 0.0
    %432 = vmatprep.subr.mxu0 0.0
    %433 = vmatpush2.xpose.msra.mxu0 0.0
    %434 = vmatprep.subr.mxu0 0.0
    %435 = vmatpush2.xpose.msra.mxu0 0.0
    %436 = vmatprep.subr.mxu0 0.0
    %437 = vmatpush2.xpose.msra.mxu0 0.0
    %438 = vmatprep.subr.mxu0 0.0
    %439 = vmatpush2.xpose.msra.mxu0 0.0
    %440 = vmatprep.subr.mxu0 0.0
    %441 = vmatpush2.xpose.msra.mxu0 0.0
    %442 = vmatprep.subr.mxu0 0.0
    %443 = vmatpush2.xpose.msra.mxu0 0.0
    %444 = vmatprep.subr.mxu0 0.0
    %445 = vmatpush2.xpose.msra.mxu0 0.0
    %446 = vmatprep.subr.mxu0 0.0
    %447 = vmatpush2.xpose.msra.mxu0 0.0
    %448 = vmatprep.subr.mxu0 0.0
    %449 = vmatpush2.xpose.msra.mxu0 0.0
    %450 = vmatprep.subr.mxu0 0.0
    %451 = vmatpush2.xpose.msra.mxu0 0.0
    %452 = vmatprep.subr.mxu0 0.0
    %453 = vmatpush2.xpose.msra.mxu0 0.0
    %454 = vmatprep.subr.mxu0 0.0
    %455 = vmatpush2.xpose.msra.mxu0 0.0
    %456 = vmatprep.mubr.f32.mxu0 0.0
    %457 = vmatmul.mubr.f32.gmra.mxu0 %v387
    %v458 = vpop.f32.mrf.mxu0
    %v459 = vadd.f32 0.0, %v458
    %v460 = vpop.f32.mrf.mxu0
    %461 = vdwg.mxu0
    %v463 = vsel %vm385, %v384, 0
    %v466 = vsel %vm385, %v294, 0
    %468 = vmatprep.subr.mxu0 0.0
    %469 = vmatpush1.xpose.msra.mxu0 0.0
    %470 = vmatprep.subr.mxu0 0.0
    %471 = vmatpush1.xpose.msra.mxu0 0.0
    %472 = vmatprep.subr.mxu0 0.0
    %473 = vmatpush1.xpose.msra.mxu0 0.0
    %474 = vmatprep.subr.mxu0 0.0
    %475 = vmatpush1.xpose.msra.mxu0 0.0
    %476 = vmatprep.subr.mxu0 0.0
    %477 = vmatpush1.xpose.msra.mxu0 0.0
    %478 = vmatprep.subr.mxu0 0.0
    %479 = vmatpush1.xpose.msra.mxu0 0.0
    %480 = vmatprep.subr.mxu0 0.0
    %481 = vmatpush1.xpose.msra.mxu0 0.0
    %482 = vmatprep.subr.mxu0 0.0
    %483 = vmatpush1.xpose.msra.mxu0 0.0
    %484 = vmatprep.subr.mxu0 0.0
    %485 = vmatpush1.xpose.msra.mxu0 0.0
    %486 = vmatprep.subr.mxu0 0.0
    %487 = vmatpush1.xpose.msra.mxu0 0.0
    %488 = vmatprep.subr.mxu0 0.0
    %489 = vmatpush1.xpose.msra.mxu0 0.0
    %490 = vmatprep.subr.mxu0 0.0
    %491 = vmatpush1.xpose.msra.mxu0 0.0
    %492 = vmatprep.subr.mxu0 0.0
    %493 = vmatpush1.xpose.msra.mxu0 0.0
    %494 = vmatprep.subr.mxu0 0.0
    %495 = vmatpush1.xpose.msra.mxu0 0.0
    %496 = vmatprep.subr.mxu0 0.0
    %497 = vmatpush1.xpose.msra.mxu0 0.0
    %498 = vmatprep.subr.mxu0 0.0
    %499 = vmatpush1.xpose.msra.mxu0 %v466
    %500 = vmatprep.subr.mxu0 0.0
    %501 = vmatpush2.xpose.msra.mxu0 0.0
    %502 = vmatprep.subr.mxu0 0.0
    %503 = vmatpush2.xpose.msra.mxu0 0.0
    %504 = vmatprep.subr.mxu0 0.0
    %505 = vmatpush2.xpose.msra.mxu0 0.0
    %506 = vmatprep.subr.mxu0 0.0
    %507 = vmatpush2.xpose.msra.mxu0 0.0
    %508 = vmatprep.subr.mxu0 0.0
    %509 = vmatpush2.xpose.msra.mxu0 0.0
    %510 = vmatprep.subr.mxu0 0.0
    %511 = vmatpush2.xpose.msra.mxu0 0.0
    %512 = vmatprep.subr.mxu0 0.0
    %513 = vmatpush2.xpose.msra.mxu0 0.0
    %514 = vmatprep.subr.mxu0 0.0
    %515 = vmatpush2.xpose.msra.mxu0 0.0
    %516 = vmatprep.subr.mxu0 0.0
    %517 = vmatpush2.xpose.msra.mxu0 0.0
    %518 = vmatprep.subr.mxu0 0.0
    %519 = vmatpush2.xpose.msra.mxu0 0.0
    %520 = vmatprep.subr.mxu0 0.0
    %521 = vmatpush2.xpose.msra.mxu0 0.0
    %522 = vmatprep.subr.mxu0 0.0
    %523 = vmatpush2.xpose.msra.mxu0 0.0
    %524 = vmatprep.subr.mxu0 0.0
    %525 = vmatpush2.xpose.msra.mxu0 0.0
    %526 = vmatprep.subr.mxu0 0.0
    %527 = vmatpush2.xpose.msra.mxu0 0.0
    %528 = vmatprep.subr.mxu0 0.0
    %529 = vmatpush2.xpose.msra.mxu0 0.0
    %530 = vmatprep.subr.mxu0 0.0
    %531 = vmatpush2.xpose.msra.mxu0 0.0
    %532 = vmatprep.mubr.f32.mxu0 0.0
    %533 = vmatmul.mubr.f32.gmra.mxu0 %v463
    %v534 = vpop.f32.mrf.mxu0
    %v535 = vadd.f32 0.0, %v534
    %v536 = vpop.f32.mrf.mxu0
    %537 = vdwg.mxu0
    %v538 = vsel %vm385, %v459, -inf
    %539 = vmax.xlane.f32.xlu0 %v538
    %v540 = vpop.xlane.xlu0 %539
    %v541 = vsel %vm385, %v535, -inf
    %542 = vmax.xlane.f32.xlu0 %v541
    %v543 = vpop.xlane.xlu0 %542
    %v544 = vsub.f32 %v459, %v540
    %v545 = vsub.f32 %v535, %v543
    %v546 = vmul.f32 %v544, 1.442695
    %v547 = vpow.pop %v546
    %v548 = vmul.f32 %v545, 1.442695
    %v549 = vpow.pop %v548
    %v550 = vsel %vm385, %v547, 0.0
    %551 = vadd.xlane.f32.xlu0 %v550
    %v552 = vpop.xlane.xlu0 %551
    %v553 = vsel %vm385, %v549, 0.0
    %554 = vadd.xlane.f32.xlu0 %v553
    %v555 = vpop.xlane.xlu0 %554
    %v556 = vrcp.pop %v552
    %v557 = vrcp.pop %v555
    %v558 = vmul.f32 %v547, %v556
    %v559 = vmul.f32 %v549, %v557
    %v561 = vsel %vm385, %v558, 0
    %563 = vmatprep.subr.mxu0 0.0
    %564 = vmatpush1.msra.mxu0 0.0
    %565 = vmatprep.subr.mxu0 0.0
    %566 = vmatpush1.msra.mxu0 0.0
    %567 = vmatprep.subr.mxu0 0.0
    %568 = vmatpush1.msra.mxu0 0.0
    %569 = vmatprep.subr.mxu0 0.0
    %570 = vmatpush1.msra.mxu0 0.0
    %571 = vmatprep.subr.mxu0 0.0
    %572 = vmatpush1.msra.mxu0 0.0
    %573 = vmatprep.subr.mxu0 0.0
    %574 = vmatpush1.msra.mxu0 0.0
    %575 = vmatprep.subr.mxu0 0.0
    %576 = vmatpush1.msra.mxu0 0.0
    %577 = vmatprep.subr.mxu0 0.0
    %578 = vmatpush1.msra.mxu0 0.0
    %579 = vmatprep.subr.mxu0 0.0
    %580 = vmatpush1.msra.mxu0 0.0
    %581 = vmatprep.subr.mxu0 0.0
    %582 = vmatpush1.msra.mxu0 0.0
    %583 = vmatprep.subr.mxu0 0.0
    %584 = vmatpush1.msra.mxu0 0.0
    %585 = vmatprep.subr.mxu0 0.0
    %586 = vmatpush1.msra.mxu0 0.0
    %587 = vmatprep.subr.mxu0 0.0
    %588 = vmatpush1.msra.mxu0 0.0
    %589 = vmatprep.subr.mxu0 0.0
    %590 = vmatpush1.msra.mxu0 0.0
    %591 = vmatprep.subr.mxu0 0.0
    %592 = vmatpush1.msra.mxu0 0.0
    %593 = vmatprep.subr.mxu0 0.0
    %594 = vmatpush1.msra.mxu0 %v375
    %595 = vmatprep.subr.mxu0 0.0
    %596 = vmatpush2.msra.mxu0 0.0
    %597 = vmatprep.subr.mxu0 0.0
    %598 = vmatpush2.msra.mxu0 0.0
    %599 = vmatprep.subr.mxu0 0.0
    %600 = vmatpush2.msra.mxu0 0.0
    %601 = vmatprep.subr.mxu0 0.0
    %602 = vmatpush2.msra.mxu0 0.0
    %603 = vmatprep.subr.mxu0 0.0
    %604 = vmatpush2.msra.mxu0 0.0
    %605 = vmatprep.subr.mxu0 0.0
    %606 = vmatpush2.msra.mxu0 0.0
    %607 = vmatprep.subr.mxu0 0.0
    %608 = vmatpush2.msra.mxu0 0.0
    %609 = vmatprep.subr.mxu0 0.0
    %610 = vmatpush2.msra.mxu0 0.0
    %611 = vmatprep.subr.mxu0 0.0
    %612 = vmatpush2.msra.mxu0 0.0
    %613 = vmatprep.subr.mxu0 0.0
    %614 = vmatpush2.msra.mxu0 0.0
    %615 = vmatprep.subr.mxu0 0.0
    %616 = vmatpush2.msra.mxu0 0.0
    %617 = vmatprep.subr.mxu0 0.0
    %618 = vmatpush2.msra.mxu0 0.0
    %619 = vmatprep.subr.mxu0 0.0
    %620 = vmatpush2.msra.mxu0 0.0
    %621 = vmatprep.subr.mxu0 0.0
    %622 = vmatpush2.msra.mxu0 0.0
    %623 = vmatprep.subr.mxu0 0.0
    %624 = vmatpush2.msra.mxu0 0.0
    %625 = vmatprep.subr.mxu0 0.0
    %626 = vmatpush2.msra.mxu0 0.0
    %627 = vmatprep.mubr.f32.mxu0 0.0
    %628 = vmatmul.mubr.f32.gmra.mxu0 %v561
    %v629 = vpop.f32.mrf.mxu0
    %v630 = vadd.f32 0.0, %v629
    %v631 = vpop.f32.mrf.mxu0
    %632 = vdwg.mxu0
    %v634 = vsel %vm385, %v559, 0
    %636 = vmatprep.subr.mxu0 0.0
    %637 = vmatpush1.msra.mxu0 0.0
    %638 = vmatprep.subr.mxu0 0.0
    %639 = vmatpush1.msra.mxu0 0.0
    %640 = vmatprep.subr.mxu0 0.0
    %641 = vmatpush1.msra.mxu0 0.0
    %642 = vmatprep.subr.mxu0 0.0
    %643 = vmatpush1.msra.mxu0 0.0
    %644 = vmatprep.subr.mxu0 0.0
    %645 = vmatpush1.msra.mxu0 0.0
    %646 = vmatprep.subr.mxu0 0.0
    %647 = vmatpush1.msra.mxu0 0.0
    %648 = vmatprep.subr.mxu0 0.0
    %649 = vmatpush1.msra.mxu0 0.0
    %650 = vmatprep.subr.mxu0 0.0
    %651 = vmatpush1.msra.mxu0 0.0
    %652 = vmatprep.subr.mxu0 0.0
    %653 = vmatpush1.msra.mxu0 0.0
    %654 = vmatprep.subr.mxu0 0.0
    %655 = vmatpush1.msra.mxu0 0.0
    %656 = vmatprep.subr.mxu0 0.0
    %657 = vmatpush1.msra.mxu0 0.0
    %658 = vmatprep.subr.mxu0 0.0
    %659 = vmatpush1.msra.mxu0 0.0
    %660 = vmatprep.subr.mxu0 0.0
    %661 = vmatpush1.msra.mxu0 0.0
    %662 = vmatprep.subr.mxu0 0.0
    %663 = vmatpush1.msra.mxu0 0.0
    %664 = vmatprep.subr.mxu0 0.0
    %665 = vmatpush1.msra.mxu0 0.0
    %666 = vmatprep.subr.mxu0 0.0
    %667 = vmatpush1.msra.mxu0 %v380
    %668 = vmatprep.subr.mxu0 0.0
    %669 = vmatpush2.msra.mxu0 0.0
    %670 = vmatprep.subr.mxu0 0.0
    %671 = vmatpush2.msra.mxu0 0.0
    %672 = vmatprep.subr.mxu0 0.0
    %673 = vmatpush2.msra.mxu0 0.0
    %674 = vmatprep.subr.mxu0 0.0
    %675 = vmatpush2.msra.mxu0 0.0
    %676 = vmatprep.subr.mxu0 0.0
    %677 = vmatpush2.msra.mxu0 0.0
    %678 = vmatprep.subr.mxu0 0.0
    %679 = vmatpush2.msra.mxu0 0.0
    %680 = vmatprep.subr.mxu0 0.0
    %681 = vmatpush2.msra.mxu0 0.0
    %682 = vmatprep.subr.mxu0 0.0
    %683 = vmatpush2.msra.mxu0 0.0
    %684 = vmatprep.subr.mxu0 0.0
    %685 = vmatpush2.msra.mxu0 0.0
    %686 = vmatprep.subr.mxu0 0.0
    %687 = vmatpush2.msra.mxu0 0.0
    %688 = vmatprep.subr.mxu0 0.0
    %689 = vmatpush2.msra.mxu0 0.0
    %690 = vmatprep.subr.mxu0 0.0
    %691 = vmatpush2.msra.mxu0 0.0
    %692 = vmatprep.subr.mxu0 0.0
    %693 = vmatpush2.msra.mxu0 0.0
    %694 = vmatprep.subr.mxu0 0.0
    %695 = vmatpush2.msra.mxu0 0.0
    %696 = vmatprep.subr.mxu0 0.0
    %697 = vmatpush2.msra.mxu0 0.0
    %698 = vmatprep.subr.mxu0 0.0
    %699 = vmatpush2.msra.mxu0 0.0
    %700 = vmatprep.mubr.f32.mxu0 0.0
    %701 = vmatmul.mubr.f32.gmra.mxu0 %v634
    %v702 = vpop.f32.mrf.mxu0
    %v703 = vadd.f32 0.0, %v702
    %v704 = vpop.f32.mrf.mxu0
    %705 = vdwg.mxu0
    %v706 = vld [vmem:[%s9] sm:$0xff]
    %707 = vrot.lane.b32.xlu0 %v383, 120
    %v708 = vpop.permute.xlu0 %707
    %709 = vrot.lane.b32.xlu0 %v289, 120
    %v710 = vpop.permute.xlu0 %709
    %v711 = vsel %vm385, %v708, 0
    %v713 = vsel %vm385, %v710, 0
    %715 = vmatprep.subr.mxu0 0.0
    %716 = vmatpush1.xpose.msra.mxu0 0.0
    %717 = vmatprep.subr.mxu0 0.0
    %718 = vmatpush1.xpose.msra.mxu0 0.0
    %719 = vmatprep.subr.mxu0 0.0
    %720 = vmatpush1.xpose.msra.mxu0 0.0
    %721 = vmatprep.subr.mxu0 0.0
    %722 = vmatpush1.xpose.msra.mxu0 0.0
    %723 = vmatprep.subr.mxu0 0.0
    %724 = vmatpush1.xpose.msra.mxu0 0.0
    %725 = vmatprep.subr.mxu0 0.0
    %726 = vmatpush1.xpose.msra.mxu0 0.0
    %727 = vmatprep.subr.mxu0 0.0
    %728 = vmatpush1.xpose.msra.mxu0 0.0
    %729 = vmatprep.subr.mxu0 0.0
    %730 = vmatpush1.xpose.msra.mxu0 0.0
    %731 = vmatprep.subr.mxu0 0.0
    %732 = vmatpush1.xpose.msra.mxu0 0.0
    %733 = vmatprep.subr.mxu0 0.0
    %734 = vmatpush1.xpose.msra.mxu0 0.0
    %735 = vmatprep.subr.mxu0 0.0
    %736 = vmatpush1.xpose.msra.mxu0 0.0
    %737 = vmatprep.subr.mxu0 0.0
    %738 = vmatpush1.xpose.msra.mxu0 0.0
    %739 = vmatprep.subr.mxu0 0.0
    %740 = vmatpush1.xpose.msra.mxu0 0.0
    %741 = vmatprep.subr.mxu0 0.0
    %742 = vmatpush1.xpose.msra.mxu0 0.0
    %743 = vmatprep.subr.mxu0 0.0
    %744 = vmatpush1.xpose.msra.mxu0 0.0
    %745 = vmatprep.subr.mxu0 0.0
    %746 = vmatpush1.xpose.msra.mxu0 %v713
    %747 = vmatprep.subr.mxu0 0.0
    %748 = vmatpush2.xpose.msra.mxu0 0.0
    %749 = vmatprep.subr.mxu0 0.0
    %750 = vmatpush2.xpose.msra.mxu0 0.0
    %751 = vmatprep.subr.mxu0 0.0
    %752 = vmatpush2.xpose.msra.mxu0 0.0
    %753 = vmatprep.subr.mxu0 0.0
    %754 = vmatpush2.xpose.msra.mxu0 0.0
    %755 = vmatprep.subr.mxu0 0.0
    %756 = vmatpush2.xpose.msra.mxu0 0.0
    %757 = vmatprep.subr.mxu0 0.0
    %758 = vmatpush2.xpose.msra.mxu0 0.0
    %759 = vmatprep.subr.mxu0 0.0
    %760 = vmatpush2.xpose.msra.mxu0 0.0
    %761 = vmatprep.subr.mxu0 0.0
    %762 = vmatpush2.xpose.msra.mxu0 0.0
    %763 = vmatprep.subr.mxu0 0.0
    %764 = vmatpush2.xpose.msra.mxu0 0.0
    %765 = vmatprep.subr.mxu0 0.0
    %766 = vmatpush2.xpose.msra.mxu0 0.0
    %767 = vmatprep.subr.mxu0 0.0
    %768 = vmatpush2.xpose.msra.mxu0 0.0
    %769 = vmatprep.subr.mxu0 0.0
    %770 = vmatpush2.xpose.msra.mxu0 0.0
    %771 = vmatprep.subr.mxu0 0.0
    %772 = vmatpush2.xpose.msra.mxu0 0.0
    %773 = vmatprep.subr.mxu0 0.0
    %774 = vmatpush2.xpose.msra.mxu0 0.0
    %775 = vmatprep.subr.mxu0 0.0
    %776 = vmatpush2.xpose.msra.mxu0 0.0
    %777 = vmatprep.subr.mxu0 0.0
    %778 = vmatpush2.xpose.msra.mxu0 0.0
    %779 = vmatprep.mubr.f32.mxu0 0.0
    %780 = vmatmul.mubr.f32.gmra.mxu0 %v711
    %v781 = vpop.f32.mrf.mxu0
    %v782 = vadd.f32 0.0, %v781
    %v783 = vpop.f32.mrf.mxu0
    %784 = vdwg.mxu0
    %785 = vrot.lane.b32.xlu0 %v384, 120
    %v786 = vpop.permute.xlu0 %785
    %787 = vrot.lane.b32.xlu0 %v294, 120
    %v788 = vpop.permute.xlu0 %787
    %v789 = vsel %vm385, %v786, 0
    %v791 = vsel %vm385, %v788, 0
    %793 = vmatprep.subr.mxu0 0.0
    %794 = vmatpush1.xpose.msra.mxu0 0.0
    %795 = vmatprep.subr.mxu0 0.0
    %796 = vmatpush1.xpose.msra.mxu0 0.0
    %797 = vmatprep.subr.mxu0 0.0
    %798 = vmatpush1.xpose.msra.mxu0 0.0
    %799 = vmatprep.subr.mxu0 0.0
    %800 = vmatpush1.xpose.msra.mxu0 0.0
    %801 = vmatprep.subr.mxu0 0.0
    %802 = vmatpush1.xpose.msra.mxu0 0.0
    %803 = vmatprep.subr.mxu0 0.0
    %804 = vmatpush1.xpose.msra.mxu0 0.0
    %805 = vmatprep.subr.mxu0 0.0
    %806 = vmatpush1.xpose.msra.mxu0 0.0
    %807 = vmatprep.subr.mxu0 0.0
    %808 = vmatpush1.xpose.msra.mxu0 0.0
    %809 = vmatprep.subr.mxu0 0.0
    %810 = vmatpush1.xpose.msra.mxu0 0.0
    %811 = vmatprep.subr.mxu0 0.0
    %812 = vmatpush1.xpose.msra.mxu0 0.0
    %813 = vmatprep.subr.mxu0 0.0
    %814 = vmatpush1.xpose.msra.mxu0 0.0
    %815 = vmatprep.subr.mxu0 0.0
    %816 = vmatpush1.xpose.msra.mxu0 0.0
    %817 = vmatprep.subr.mxu0 0.0
    %818 = vmatpush1.xpose.msra.mxu0 0.0
    %819 = vmatprep.subr.mxu0 0.0
    %820 = vmatpush1.xpose.msra.mxu0 0.0
    %821 = vmatprep.subr.mxu0 0.0
    %822 = vmatpush1.xpose.msra.mxu0 0.0
    %823 = vmatprep.subr.mxu0 0.0
    %824 = vmatpush1.xpose.msra.mxu0 %v791
    %825 = vmatprep.subr.mxu0 0.0
    %826 = vmatpush2.xpose.msra.mxu0 0.0
    %827 = vmatprep.subr.mxu0 0.0
    %828 = vmatpush2.xpose.msra.mxu0 0.0
    %829 = vmatprep.subr.mxu0 0.0
    %830 = vmatpush2.xpose.msra.mxu0 0.0
    %831 = vmatprep.subr.mxu0 0.0
    %832 = vmatpush2.xpose.msra.mxu0 0.0
    %833 = vmatprep.subr.mxu0 0.0
    %834 = vmatpush2.xpose.msra.mxu0 0.0
    %835 = vmatprep.subr.mxu0 0.0
    %836 = vmatpush2.xpose.msra.mxu0 0.0
    %837 = vmatprep.subr.mxu0 0.0
    %838 = vmatpush2.xpose.msra.mxu0 0.0
    %839 = vmatprep.subr.mxu0 0.0
    %840 = vmatpush2.xpose.msra.mxu0 0.0
    %841 = vmatprep.subr.mxu0 0.0
    %842 = vmatpush2.xpose.msra.mxu0 0.0
    %843 = vmatprep.subr.mxu0 0.0
    %844 = vmatpush2.xpose.msra.mxu0 0.0
    %845 = vmatprep.subr.mxu0 0.0
    %846 = vmatpush2.xpose.msra.mxu0 0.0
    %847 = vmatprep.subr.mxu0 0.0
    %848 = vmatpush2.xpose.msra.mxu0 0.0
    %849 = vmatprep.subr.mxu0 0.0
    %850 = vmatpush2.xpose.msra.mxu0 0.0
    %851 = vmatprep.subr.mxu0 0.0
    %852 = vmatpush2.xpose.msra.mxu0 0.0
    %853 = vmatprep.subr.mxu0 0.0
    %854 = vmatpush2.xpose.msra.mxu0 0.0
    %855 = vmatprep.subr.mxu0 0.0
    %856 = vmatpush2.xpose.msra.mxu0 0.0
    %857 = vmatprep.mubr.f32.mxu0 0.0
    %858 = vmatmul.mubr.f32.gmra.mxu0 %v789
    %v859 = vpop.f32.mrf.mxu0
    %v860 = vadd.f32 0.0, %v859
    %v861 = vpop.f32.mrf.mxu0
    %862 = vdwg.mxu0
    %v863 = vsel %vm385, %v782, -inf
    %864 = vmax.xlane.f32.xlu0 %v863
    %v865 = vpop.xlane.xlu0 %864
    %v866 = vsel %vm385, %v860, -inf
    %867 = vmax.xlane.f32.xlu0 %v866
    %v868 = vpop.xlane.xlu0 %867
    %v869 = vsub.f32 %v782, %v865
    %v870 = vsub.f32 %v860, %v868
    %v871 = vmul.f32 %v869, 1.442695
    %v872 = vpow.pop %v871
    %v873 = vmul.f32 %v870, 1.442695
    %v874 = vpow.pop %v873
    %v875 = vsel %vm385, %v872, 0.0
    %876 = vadd.xlane.f32.xlu0 %v875
    %v877 = vpop.xlane.xlu0 %876
    %v878 = vsel %vm385, %v874, 0.0
    %879 = vadd.xlane.f32.xlu0 %v878
    %v880 = vpop.xlane.xlu0 %879
    %v881 = vrcp.pop %v877
    %v882 = vrcp.pop %v880
    %v883 = vmul.f32 %v872, %v881
    %v884 = vmul.f32 %v874, %v882
    %886 = vrot.lane.b32.xlu0 %v375, 120
    %v887 = vpop.permute.xlu0 %886
    %v890 = vsel %vm385, %v883, 0
    %892 = vmatprep.subr.mxu0 0.0
    %893 = vmatpush1.msra.mxu0 0.0
    %894 = vmatprep.subr.mxu0 0.0
    %895 = vmatpush1.msra.mxu0 0.0
    %896 = vmatprep.subr.mxu0 0.0
    %897 = vmatpush1.msra.mxu0 0.0
    %898 = vmatprep.subr.mxu0 0.0
    %899 = vmatpush1.msra.mxu0 0.0
    %900 = vmatprep.subr.mxu0 0.0
    %901 = vmatpush1.msra.mxu0 0.0
    %902 = vmatprep.subr.mxu0 0.0
    %903 = vmatpush1.msra.mxu0 0.0
    %904 = vmatprep.subr.mxu0 0.0
    %905 = vmatpush1.msra.mxu0 0.0
    %906 = vmatprep.subr.mxu0 0.0
    %907 = vmatpush1.msra.mxu0 0.0
    %908 = vmatprep.subr.mxu0 0.0
    %909 = vmatpush1.msra.mxu0 0.0
    %910 = vmatprep.subr.mxu0 0.0
    %911 = vmatpush1.msra.mxu0 0.0
    %912 = vmatprep.subr.mxu0 0.0
    %913 = vmatpush1.msra.mxu0 0.0
    %914 = vmatprep.subr.mxu0 0.0
    %915 = vmatpush1.msra.mxu0 0.0
    %916 = vmatprep.subr.mxu0 0.0
    %917 = vmatpush1.msra.mxu0 0.0
    %918 = vmatprep.subr.mxu0 0.0
    %919 = vmatpush1.msra.mxu0 0.0
    %920 = vmatprep.subr.mxu0 0.0
    %921 = vmatpush1.msra.mxu0 0.0
    %922 = vmatprep.subr.mxu0 0.0
    %923 = vmatpush1.msra.mxu0 %v887
    %924 = vmatprep.subr.mxu0 0.0
    %925 = vmatpush2.msra.mxu0 0.0
    %926 = vmatprep.subr.mxu0 0.0
    %927 = vmatpush2.msra.mxu0 0.0
    %928 = vmatprep.subr.mxu0 0.0
    %929 = vmatpush2.msra.mxu0 0.0
    %930 = vmatprep.subr.mxu0 0.0
    %931 = vmatpush2.msra.mxu0 0.0
    %932 = vmatprep.subr.mxu0 0.0
    %933 = vmatpush2.msra.mxu0 0.0
    %934 = vmatprep.subr.mxu0 0.0
    %935 = vmatpush2.msra.mxu0 0.0
    %936 = vmatprep.subr.mxu0 0.0
    %937 = vmatpush2.msra.mxu0 0.0
    %938 = vmatprep.subr.mxu0 0.0
    %939 = vmatpush2.msra.mxu0 0.0
    %940 = vmatprep.subr.mxu0 0.0
    %941 = vmatpush2.msra.mxu0 0.0
    %942 = vmatprep.subr.mxu0 0.0
    %943 = vmatpush2.msra.mxu0 0.0
    %944 = vmatprep.subr.mxu0 0.0
    %945 = vmatpush2.msra.mxu0 0.0
    %946 = vmatprep.subr.mxu0 0.0
    %947 = vmatpush2.msra.mxu0 0.0
    %948 = vmatprep.subr.mxu0 0.0
    %949 = vmatpush2.msra.mxu0 0.0
    %950 = vmatprep.subr.mxu0 0.0
    %951 = vmatpush2.msra.mxu0 0.0
    %952 = vmatprep.subr.mxu0 0.0
    %953 = vmatpush2.msra.mxu0 0.0
    %954 = vmatprep.subr.mxu0 0.0
    %955 = vmatpush2.msra.mxu0 0.0
    %956 = vmatprep.mubr.f32.mxu0 0.0
    %957 = vmatmul.mubr.f32.gmra.mxu0 %v890
    %v958 = vpop.f32.mrf.mxu0
    %v959 = vadd.f32 0.0, %v958
    %v960 = vpop.f32.mrf.mxu0
    %961 = vdwg.mxu0
    %963 = vrot.lane.b32.xlu0 %v380, 120
    %v964 = vpop.permute.xlu0 %963
    %v967 = vsel %vm385, %v884, 0
    %969 = vmatprep.subr.mxu0 0.0
    %970 = vmatpush1.msra.mxu0 0.0
    %971 = vmatprep.subr.mxu0 0.0
    %972 = vmatpush1.msra.mxu0 0.0
    %973 = vmatprep.subr.mxu0 0.0
    %974 = vmatpush1.msra.mxu0 0.0
    %975 = vmatprep.subr.mxu0 0.0
    %976 = vmatpush1.msra.mxu0 0.0
    %977 = vmatprep.subr.mxu0 0.0
    %978 = vmatpush1.msra.mxu0 0.0
    %979 = vmatprep.subr.mxu0 0.0
    %980 = vmatpush1.msra.mxu0 0.0
    %981 = vmatprep.subr.mxu0 0.0
    %982 = vmatpush1.msra.mxu0 0.0
    %983 = vmatprep.subr.mxu0 0.0
    %984 = vmatpush1.msra.mxu0 0.0
    %985 = vmatprep.subr.mxu0 0.0
    %986 = vmatpush1.msra.mxu0 0.0
    %987 = vmatprep.subr.mxu0 0.0
    %988 = vmatpush1.msra.mxu0 0.0
    %989 = vmatprep.subr.mxu0 0.0
    %990 = vmatpush1.msra.mxu0 0.0
    %991 = vmatprep.subr.mxu0 0.0
    %992 = vmatpush1.msra.mxu0 0.0
    %993 = vmatprep.subr.mxu0 0.0
    %994 = vmatpush1.msra.mxu0 0.0
    %995 = vmatprep.subr.mxu0 0.0
    %996 = vmatpush1.msra.mxu0 0.0
    %997 = vmatprep.subr.mxu0 0.0
    %998 = vmatpush1.msra.mxu0 0.0
    %999 = vmatprep.subr.mxu0 0.0
    %1000 = vmatpush1.msra.mxu0 %v964
    %1001 = vmatprep.subr.mxu0 0.0
    %1002 = vmatpush2.msra.mxu0 0.0
    %1003 = vmatprep.subr.mxu0 0.0
    %1004 = vmatpush2.msra.mxu0 0.0
    %1005 = vmatprep.subr.mxu0 0.0
    %1006 = vmatpush2.msra.mxu0 0.0
    %1007 = vmatprep.subr.mxu0 0.0
    %1008 = vmatpush2.msra.mxu0 0.0
    %1009 = vmatprep.subr.mxu0 0.0
    %1010 = vmatpush2.msra.mxu0 0.0
    %1011 = vmatprep.subr.mxu0 0.0
    %1012 = vmatpush2.msra.mxu0 0.0
    %1013 = vmatprep.subr.mxu0 0.0
    %1014 = vmatpush2.msra.mxu0 0.0
    %1015 = vmatprep.subr.mxu0 0.0
    %1016 = vmatpush2.msra.mxu0 0.0
    %1017 = vmatprep.subr.mxu0 0.0
    %1018 = vmatpush2.msra.mxu0 0.0
    %1019 = vmatprep.subr.mxu0 0.0
    %1020 = vmatpush2.msra.mxu0 0.0
    %1021 = vmatprep.subr.mxu0 0.0
    %1022 = vmatpush2.msra.mxu0 0.0
    %1023 = vmatprep.subr.mxu0 0.0
    %1024 = vmatpush2.msra.mxu0 0.0
    %1025 = vmatprep.subr.mxu0 0.0
    %1026 = vmatpush2.msra.mxu0 0.0
    %1027 = vmatprep.subr.mxu0 0.0
    %1028 = vmatpush2.msra.mxu0 0.0
    %1029 = vmatprep.subr.mxu0 0.0
    %1030 = vmatpush2.msra.mxu0 0.0
    %1031 = vmatprep.subr.mxu0 0.0
    %1032 = vmatpush2.msra.mxu0 0.0
    %1033 = vmatprep.mubr.f32.mxu0 0.0
    %1034 = vmatmul.mubr.f32.gmra.mxu0 %v967
    %v1035 = vpop.f32.mrf.mxu0
    %v1036 = vadd.f32 0.0, %v1035
    %v1037 = vpop.f32.mrf.mxu0
    %1038 = vdwg.mxu0
    %s1039 = scalar_lea.vmem %s9, 8
    %v1040 = vld [vmem:[%s1039] sm:$0xff]
    %v1042 = vsel %vm385, %v959, 0
    %v1045 = vsel %vm385, %v1036, 0
    %1047 = vmatprep.subr.mxu0 0.0
    %1048 = vmatpush1.msra.mxu0 0.0
    %1049 = vmatprep.subr.mxu0 0.0
    %1050 = vmatpush1.msra.mxu0 0.0
    %1051 = vmatprep.subr.mxu0 0.0
    %1052 = vmatpush1.msra.mxu0 0.0
    %1053 = vmatprep.subr.mxu0 0.0
    %1054 = vmatpush1.msra.mxu0 0.0
    %1055 = vmatprep.subr.mxu0 0.0
    %1056 = vmatpush1.msra.mxu0 0.0
    %1057 = vmatprep.subr.mxu0 0.0
    %1058 = vmatpush1.msra.mxu0 0.0
    %1059 = vmatprep.subr.mxu0 0.0
    %1060 = vmatpush1.msra.mxu0 0.0
    %1061 = vmatprep.subr.mxu0 0.0
    %1062 = vmatpush1.msra.mxu0 0.0
    %1063 = vmatprep.subr.mxu0 0.0
    %1064 = vmatpush1.msra.mxu0 0.0
    %1065 = vmatprep.subr.mxu0 0.0
    %1066 = vmatpush1.msra.mxu0 0.0
    %1067 = vmatprep.subr.mxu0 0.0
    %1068 = vmatpush1.msra.mxu0 0.0
    %1069 = vmatprep.subr.mxu0 0.0
    %1070 = vmatpush1.msra.mxu0 0.0
    %1071 = vmatprep.subr.mxu0 0.0
    %1072 = vmatpush1.msra.mxu0 0.0
    %1073 = vmatprep.subr.mxu0 0.0
    %1074 = vmatpush1.msra.mxu0 0.0
    %1075 = vmatprep.subr.mxu0 0.0
    %1076 = vmatpush1.msra.mxu0 0.0
    %1077 = vmatprep.subr.mxu0 0.0
    %1078 = vmatpush1.msra.mxu0 %v1040
    %1079 = vmatprep.subr.mxu0 0.0
    %1080 = vmatpush2.msra.mxu0 0.0
    %1081 = vmatprep.subr.mxu0 0.0
    %1082 = vmatpush2.msra.mxu0 0.0
    %1083 = vmatprep.subr.mxu0 0.0
    %1084 = vmatpush2.msra.mxu0 0.0
    %1085 = vmatprep.subr.mxu0 0.0
    %1086 = vmatpush2.msra.mxu0 0.0
    %1087 = vmatprep.subr.mxu0 0.0
    %1088 = vmatpush2.msra.mxu0 0.0
    %1089 = vmatprep.subr.mxu0 0.0
    %1090 = vmatpush2.msra.mxu0 0.0
    %1091 = vmatprep.subr.mxu0 0.0
    %1092 = vmatpush2.msra.mxu0 0.0
    %1093 = vmatprep.subr.mxu0 0.0
    %1094 = vmatpush2.msra.mxu0 0.0
    %1095 = vmatprep.subr.mxu0 0.0
    %1096 = vmatpush2.msra.mxu0 0.0
    %1097 = vmatprep.subr.mxu0 0.0
    %1098 = vmatpush2.msra.mxu0 0.0
    %1099 = vmatprep.subr.mxu0 0.0
    %1100 = vmatpush2.msra.mxu0 0.0
    %1101 = vmatprep.subr.mxu0 0.0
    %1102 = vmatpush2.msra.mxu0 0.0
    %1103 = vmatprep.subr.mxu0 0.0
    %1104 = vmatpush2.msra.mxu0 0.0
    %1105 = vmatprep.subr.mxu0 0.0
    %1106 = vmatpush2.msra.mxu0 0.0
    %1107 = vmatprep.subr.mxu0 0.0
    %1108 = vmatpush2.msra.mxu0 0.0
    %1109 = vmatprep.subr.mxu0 0.0
    %1110 = vmatpush2.msra.mxu0 0.0
    %1111 = vmatprep.mubr.f32.mxu0 0.0
    %1112 = vmatmul.mubr.f32.gmra.mxu0 %v1042
    %v1113 = vpop.f32.mrf.mxu0
    %v1114 = vadd.f32 0.0, %v1113
    %v1115 = vpop.f32.mrf.mxu0
    %1116 = vmatprep.mubr.f32.mxu0 0.0
    %1117 = vmatmul.mubr.f32.gmra.mxu0 %v1045
    %v1118 = vpop.f32.mrf.mxu0
    %v1119 = vadd.f32 0.0, %v1118
    %v1120 = vpop.f32.mrf.mxu0
    %1121 = vdwg.mxu0
    %v1123 = vsel %vm385, %v630, 0
    %v1126 = vsel %vm385, %v703, 0
    %1128 = vmatprep.subr.mxu0 0.0
    %1129 = vmatpush1.msra.mxu0 0.0
    %1130 = vmatprep.subr.mxu0 0.0
    %1131 = vmatpush1.msra.mxu0 0.0
    %1132 = vmatprep.subr.mxu0 0.0
    %1133 = vmatpush1.msra.mxu0 0.0
    %1134 = vmatprep.subr.mxu0 0.0
    %1135 = vmatpush1.msra.mxu0 0.0
    %1136 = vmatprep.subr.mxu0 0.0
    %1137 = vmatpush1.msra.mxu0 0.0
    %1138 = vmatprep.subr.mxu0 0.0
    %1139 = vmatpush1.msra.mxu0 0.0
    %1140 = vmatprep.subr.mxu0 0.0
    %1141 = vmatpush1.msra.mxu0 0.0
    %1142 = vmatprep.subr.mxu0 0.0
    %1143 = vmatpush1.msra.mxu0 0.0
    %1144 = vmatprep.subr.mxu0 0.0
    %1145 = vmatpush1.msra.mxu0 0.0
    %1146 = vmatprep.subr.mxu0 0.0
    %1147 = vmatpush1.msra.mxu0 0.0
    %1148 = vmatprep.subr.mxu0 0.0
    %1149 = vmatpush1.msra.mxu0 0.0
    %1150 = vmatprep.subr.mxu0 0.0
    %1151 = vmatpush1.msra.mxu0 0.0
    %1152 = vmatprep.subr.mxu0 0.0
    %1153 = vmatpush1.msra.mxu0 0.0
    %1154 = vmatprep.subr.mxu0 0.0
    %1155 = vmatpush1.msra.mxu0 0.0
    %1156 = vmatprep.subr.mxu0 0.0
    %1157 = vmatpush1.msra.mxu0 0.0
    %1158 = vmatprep.subr.mxu0 0.0
    %1159 = vmatpush1.msra.mxu0 %v706
    %1160 = vmatprep.subr.mxu0 0.0
    %1161 = vmatpush2.msra.mxu0 0.0
    %1162 = vmatprep.subr.mxu0 0.0
    %1163 = vmatpush2.msra.mxu0 0.0
    %1164 = vmatprep.subr.mxu0 0.0
    %1165 = vmatpush2.msra.mxu0 0.0
    %1166 = vmatprep.subr.mxu0 0.0
    %1167 = vmatpush2.msra.mxu0 0.0
    %1168 = vmatprep.subr.mxu0 0.0
    %1169 = vmatpush2.msra.mxu0 0.0
    %1170 = vmatprep.subr.mxu0 0.0
    %1171 = vmatpush2.msra.mxu0 0.0
    %1172 = vmatprep.subr.mxu0 0.0
    %1173 = vmatpush2.msra.mxu0 0.0
    %1174 = vmatprep.subr.mxu0 0.0
    %1175 = vmatpush2.msra.mxu0 0.0
    %1176 = vmatprep.subr.mxu0 0.0
    %1177 = vmatpush2.msra.mxu0 0.0
    %1178 = vmatprep.subr.mxu0 0.0
    %1179 = vmatpush2.msra.mxu0 0.0
    %1180 = vmatprep.subr.mxu0 0.0
    %1181 = vmatpush2.msra.mxu0 0.0
    %1182 = vmatprep.subr.mxu0 0.0
    %1183 = vmatpush2.msra.mxu0 0.0
    %1184 = vmatprep.subr.mxu0 0.0
    %1185 = vmatpush2.msra.mxu0 0.0
    %1186 = vmatprep.subr.mxu0 0.0
    %1187 = vmatpush2.msra.mxu0 0.0
    %1188 = vmatprep.subr.mxu0 0.0
    %1189 = vmatpush2.msra.mxu0 0.0
    %1190 = vmatprep.subr.mxu0 0.0
    %1191 = vmatpush2.msra.mxu0 0.0
    %1192 = vmatprep.mubr.f32.mxu0 0.0
    %1193 = vmatmul.mubr.f32.gmra.mxu0 %v1123
    %v1194 = vpop.f32.mrf.mxu0
    %v1195 = vadd.f32 %v1114, %v1194
    %v1196 = vpop.f32.mrf.mxu0
    %1197 = vmatprep.mubr.f32.mxu0 0.0
    %1198 = vmatmul.mubr.f32.gmra.mxu0 %v1126
    %v1199 = vpop.f32.mrf.mxu0
    %v1200 = vadd.f32 %v1119, %v1199
    %v1201 = vpop.f32.mrf.mxu0
    %1202 = vdwg.mxu0
    %1203 = vrot.lane.b32.xlu0 %v383, 112
    %v1204 = vpop.permute.xlu0 %1203
    %1205 = vrot.lane.b32.xlu0 %v289, 112
    %v1206 = vpop.permute.xlu0 %1205
    %v1207 = vsel %vm385, %v1204, 0
    %v1209 = vsel %vm385, %v1206, 0
    %1211 = vmatprep.subr.mxu0 0.0
    %1212 = vmatpush1.xpose.msra.mxu0 0.0
    %1213 = vmatprep.subr.mxu0 0.0
    %1214 = vmatpush1.xpose.msra.mxu0 0.0
    %1215 = vmatprep.subr.mxu0 0.0
    %1216 = vmatpush1.xpose.msra.mxu0 0.0
    %1217 = vmatprep.subr.mxu0 0.0
    %1218 = vmatpush1.xpose.msra.mxu0 0.0
    %1219 = vmatprep.subr.mxu0 0.0
    %1220 = vmatpush1.xpose.msra.mxu0 0.0
    %1221 = vmatprep.subr.mxu0 0.0
    %1222 = vmatpush1.xpose.msra.mxu0 0.0
    %1223 = vmatprep.subr.mxu0 0.0
    %1224 = vmatpush1.xpose.msra.mxu0 0.0
    %1225 = vmatprep.subr.mxu0 0.0
    %1226 = vmatpush1.xpose.msra.mxu0 0.0
    %1227 = vmatprep.subr.mxu0 0.0
    %1228 = vmatpush1.xpose.msra.mxu0 0.0
    %1229 = vmatprep.subr.mxu0 0.0
    %1230 = vmatpush1.xpose.msra.mxu0 0.0
    %1231 = vmatprep.subr.mxu0 0.0
    %1232 = vmatpush1.xpose.msra.mxu0 0.0
    %1233 = vmatprep.subr.mxu0 0.0
    %1234 = vmatpush1.xpose.msra.mxu0 0.0
    %1235 = vmatprep.subr.mxu0 0.0
    %1236 = vmatpush1.xpose.msra.mxu0 0.0
    %1237 = vmatprep.subr.mxu0 0.0
    %1238 = vmatpush1.xpose.msra.mxu0 0.0
    %1239 = vmatprep.subr.mxu0 0.0
    %1240 = vmatpush1.xpose.msra.mxu0 0.0
    %1241 = vmatprep.subr.mxu0 0.0
    %1242 = vmatpush1.xpose.msra.mxu0 %v1209
    %1243 = vmatprep.subr.mxu0 0.0
    %1244 = vmatpush2.xpose.msra.mxu0 0.0
    %1245 = vmatprep.subr.mxu0 0.0
    %1246 = vmatpush2.xpose.msra.mxu0 0.0
    %1247 = vmatprep.subr.mxu0 0.0
    %1248 = vmatpush2.xpose.msra.mxu0 0.0
    %1249 = vmatprep.subr.mxu0 0.0
    %1250 = vmatpush2.xpose.msra.mxu0 0.0
    %1251 = vmatprep.subr.mxu0 0.0
    %1252 = vmatpush2.xpose.msra.mxu0 0.0
    %1253 = vmatprep.subr.mxu0 0.0
    %1254 = vmatpush2.xpose.msra.mxu0 0.0
    %1255 = vmatprep.subr.mxu0 0.0
    %1256 = vmatpush2.xpose.msra.mxu0 0.0
    %1257 = vmatprep.subr.mxu0 0.0
    %1258 = vmatpush2.xpose.msra.mxu0 0.0
    %1259 = vmatprep.subr.mxu0 0.0
    %1260 = vmatpush2.xpose.msra.mxu0 0.0
    %1261 = vmatprep.subr.mxu0 0.0
    %1262 = vmatpush2.xpose.msra.mxu0 0.0
    %1263 = vmatprep.subr.mxu0 0.0
    %1264 = vmatpush2.xpose.msra.mxu0 0.0
    %1265 = vmatprep.subr.mxu0 0.0
    %1266 = vmatpush2.xpose.msra.mxu0 0.0
    %1267 = vmatprep.subr.mxu0 0.0
    %1268 = vmatpush2.xpose.msra.mxu0 0.0
    %1269 = vmatprep.subr.mxu0 0.0
    %1270 = vmatpush2.xpose.msra.mxu0 0.0
    %1271 = vmatprep.subr.mxu0 0.0
    %1272 = vmatpush2.xpose.msra.mxu0 0.0
    %1273 = vmatprep.subr.mxu0 0.0
    %1274 = vmatpush2.xpose.msra.mxu0 0.0
    %1275 = vmatprep.mubr.f32.mxu0 0.0
    %1276 = vmatmul.mubr.f32.gmra.mxu0 %v1207
    %v1277 = vpop.f32.mrf.mxu0
    %v1278 = vadd.f32 0.0, %v1277
    %v1279 = vpop.f32.mrf.mxu0
    %1280 = vdwg.mxu0
    %1281 = vrot.lane.b32.xlu0 %v384, 112
    %v1282 = vpop.permute.xlu0 %1281
    %1283 = vrot.lane.b32.xlu0 %v294, 112
    %v1284 = vpop.permute.xlu0 %1283
    %v1285 = vsel %vm385, %v1282, 0
    %v1287 = vsel %vm385, %v1284, 0
    %1289 = vmatprep.subr.mxu0 0.0
    %1290 = vmatpush1.xpose.msra.mxu0 0.0
    %1291 = vmatprep.subr.mxu0 0.0
    %1292 = vmatpush1.xpose.msra.mxu0 0.0
    %1293 = vmatprep.subr.mxu0 0.0
    %1294 = vmatpush1.xpose.msra.mxu0 0.0
    %1295 = vmatprep.subr.mxu0 0.0
    %1296 = vmatpush1.xpose.msra.mxu0 0.0
    %1297 = vmatprep.subr.mxu0 0.0
    %1298 = vmatpush1.xpose.msra.mxu0 0.0
    %1299 = vmatprep.subr.mxu0 0.0
    %1300 = vmatpush1.xpose.msra.mxu0 0.0
    %1301 = vmatprep.subr.mxu0 0.0
    %1302 = vmatpush1.xpose.msra.mxu0 0.0
    %1303 = vmatprep.subr.mxu0 0.0
    %1304 = vmatpush1.xpose.msra.mxu0 0.0
    %1305 = vmatprep.subr.mxu0 0.0
    %1306 = vmatpush1.xpose.msra.mxu0 0.0
    %1307 = vmatprep.subr.mxu0 0.0
    %1308 = vmatpush1.xpose.msra.mxu0 0.0
    %1309 = vmatprep.subr.mxu0 0.0
    %1310 = vmatpush1.xpose.msra.mxu0 0.0
    %1311 = vmatprep.subr.mxu0 0.0
    %1312 = vmatpush1.xpose.msra.mxu0 0.0
    %1313 = vmatprep.subr.mxu0 0.0
    %1314 = vmatpush1.xpose.msra.mxu0 0.0
    %1315 = vmatprep.subr.mxu0 0.0
    %1316 = vmatpush1.xpose.msra.mxu0 0.0
    %1317 = vmatprep.subr.mxu0 0.0
    %1318 = vmatpush1.xpose.msra.mxu0 0.0
    %1319 = vmatprep.subr.mxu0 0.0
    %1320 = vmatpush1.xpose.msra.mxu0 %v1287
    %1321 = vmatprep.subr.mxu0 0.0
    %1322 = vmatpush2.xpose.msra.mxu0 0.0
    %1323 = vmatprep.subr.mxu0 0.0
    %1324 = vmatpush2.xpose.msra.mxu0 0.0
    %1325 = vmatprep.subr.mxu0 0.0
    %1326 = vmatpush2.xpose.msra.mxu0 0.0
    %1327 = vmatprep.subr.mxu0 0.0
    %1328 = vmatpush2.xpose.msra.mxu0 0.0
    %1329 = vmatprep.subr.mxu0 0.0
    %1330 = vmatpush2.xpose.msra.mxu0 0.0
    %1331 = vmatprep.subr.mxu0 0.0
    %1332 = vmatpush2.xpose.msra.mxu0 0.0
    %1333 = vmatprep.subr.mxu0 0.0
    %1334 = vmatpush2.xpose.msra.mxu0 0.0
    %1335 = vmatprep.subr.mxu0 0.0
    %1336 = vmatpush2.xpose.msra.mxu0 0.0
    %1337 = vmatprep.subr.mxu0 0.0
    %1338 = vmatpush2.xpose.msra.mxu0 0.0
    %1339 = vmatprep.subr.mxu0 0.0
    %1340 = vmatpush2.xpose.msra.mxu0 0.0
    %1341 = vmatprep.subr.mxu0 0.0
    %1342 = vmatpush2.xpose.msra.mxu0 0.0
    %1343 = vmatprep.subr.mxu0 0.0
    %1344 = vmatpush2.xpose.msra.mxu0 0.0
    %1345 = vmatprep.subr.mxu0 0.0
    %1346 = vmatpush2.xpose.msra.mxu0 0.0
    %1347 = vmatprep.subr.mxu0 0.0
    %1348 = vmatpush2.xpose.msra.mxu0 0.0
    %1349 = vmatprep.subr.mxu0 0.0
    %1350 = vmatpush2.xpose.msra.mxu0 0.0
    %1351 = vmatprep.subr.mxu0 0.0
    %1352 = vmatpush2.xpose.msra.mxu0 0.0
    %1353 = vmatprep.mubr.f32.mxu0 0.0
    %1354 = vmatmul.mubr.f32.gmra.mxu0 %v1285
    %v1355 = vpop.f32.mrf.mxu0
    %v1356 = vadd.f32 0.0, %v1355
    %v1357 = vpop.f32.mrf.mxu0
    %1358 = vdwg.mxu0
    %v1359 = vsel %vm385, %v1278, -inf
    %1360 = vmax.xlane.f32.xlu0 %v1359
    %v1361 = vpop.xlane.xlu0 %1360
    %v1362 = vsel %vm385, %v1356, -inf
    %1363 = vmax.xlane.f32.xlu0 %v1362
    %v1364 = vpop.xlane.xlu0 %1363
    %v1365 = vsub.f32 %v1278, %v1361
    %v1366 = vsub.f32 %v1356, %v1364
    %v1367 = vmul.f32 %v1365, 1.442695
    %v1368 = vpow.pop %v1367
    %v1369 = vmul.f32 %v1366, 1.442695
    %v1370 = vpow.pop %v1369
    %v1371 = vsel %vm385, %v1368, 0.0
    %1372 = vadd.xlane.f32.xlu0 %v1371
    %v1373 = vpop.xlane.xlu0 %1372
    %v1374 = vsel %vm385, %v1370, 0.0
    %1375 = vadd.xlane.f32.xlu0 %v1374
    %v1376 = vpop.xlane.xlu0 %1375
    %v1377 = vrcp.pop %v1373
    %v1378 = vrcp.pop %v1376
    %v1379 = vmul.f32 %v1368, %v1377
    %v1380 = vmul.f32 %v1370, %v1378
    %1381 = vrot.lane.b32.xlu0 %v375, 112
    %v1382 = vpop.permute.xlu0 %1381
    %v1385 = vsel %vm385, %v1379, 0
    %1387 = vmatprep.subr.mxu0 0.0
    %1388 = vmatpush1.msra.mxu0 0.0
    %1389 = vmatprep.subr.mxu0 0.0
    %1390 = vmatpush1.msra.mxu0 0.0
    %1391 = vmatprep.subr.mxu0 0.0
    %1392 = vmatpush1.msra.mxu0 0.0
    %1393 = vmatprep.subr.mxu0 0.0
    %1394 = vmatpush1.msra.mxu0 0.0
    %1395 = vmatprep.subr.mxu0 0.0
    %1396 = vmatpush1.msra.mxu0 0.0
    %1397 = vmatprep.subr.mxu0 0.0
    %1398 = vmatpush1.msra.mxu0 0.0
    %1399 = vmatprep.subr.mxu0 0.0
    %1400 = vmatpush1.msra.mxu0 0.0
    %1401 = vmatprep.subr.mxu0 0.0
    %1402 = vmatpush1.msra.mxu0 0.0
    %1403 = vmatprep.subr.mxu0 0.0
    %1404 = vmatpush1.msra.mxu0 0.0
    %1405 = vmatprep.subr.mxu0 0.0
    %1406 = vmatpush1.msra.mxu0 0.0
    %1407 = vmatprep.subr.mxu0 0.0
    %1408 = vmatpush1.msra.mxu0 0.0
    %1409 = vmatprep.subr.mxu0 0.0
    %1410 = vmatpush1.msra.mxu0 0.0
    %1411 = vmatprep.subr.mxu0 0.0
    %1412 = vmatpush1.msra.mxu0 0.0
    %1413 = vmatprep.subr.mxu0 0.0
    %1414 = vmatpush1.msra.mxu0 0.0
    %1415 = vmatprep.subr.mxu0 0.0
    %1416 = vmatpush1.msra.mxu0 0.0
    %1417 = vmatprep.subr.mxu0 0.0
    %1418 = vmatpush1.msra.mxu0 %v1382
    %1419 = vmatprep.subr.mxu0 0.0
    %1420 = vmatpush2.msra.mxu0 0.0
    %1421 = vmatprep.subr.mxu0 0.0
    %1422 = vmatpush2.msra.mxu0 0.0
    %1423 = vmatprep.subr.mxu0 0.0
    %1424 = vmatpush2.msra.mxu0 0.0
    %1425 = vmatprep.subr.mxu0 0.0
    %1426 = vmatpush2.msra.mxu0 0.0
    %1427 = vmatprep.subr.mxu0 0.0
    %1428 = vmatpush2.msra.mxu0 0.0
    %1429 = vmatprep.subr.mxu0 0.0
    %1430 = vmatpush2.msra.mxu0 0.0
    %1431 = vmatprep.subr.mxu0 0.0
    %1432 = vmatpush2.msra.mxu0 0.0
    %1433 = vmatprep.subr.mxu0 0.0
    %1434 = vmatpush2.msra.mxu0 0.0
    %1435 = vmatprep.subr.mxu0 0.0
    %1436 = vmatpush2.msra.mxu0 0.0
    %1437 = vmatprep.subr.mxu0 0.0
    %1438 = vmatpush2.msra.mxu0 0.0
    %1439 = vmatprep.subr.mxu0 0.0
    %1440 = vmatpush2.msra.mxu0 0.0
    %1441 = vmatprep.subr.mxu0 0.0
    %1442 = vmatpush2.msra.mxu0 0.0
    %1443 = vmatprep.subr.mxu0 0.0
    %1444 = vmatpush2.msra.mxu0 0.0
    %1445 = vmatprep.subr.mxu0 0.0
    %1446 = vmatpush2.msra.mxu0 0.0
    %1447 = vmatprep.subr.mxu0 0.0
    %1448 = vmatpush2.msra.mxu0 0.0
    %1449 = vmatprep.subr.mxu0 0.0
    %1450 = vmatpush2.msra.mxu0 0.0
    %1451 = vmatprep.mubr.f32.mxu0 0.0
    %1452 = vmatmul.mubr.f32.gmra.mxu0 %v1385
    %v1453 = vpop.f32.mrf.mxu0
    %v1454 = vadd.f32 0.0, %v1453
    %v1455 = vpop.f32.mrf.mxu0
    %1456 = vdwg.mxu0
    %1457 = vrot.lane.b32.xlu0 %v380, 112
    %v1458 = vpop.permute.xlu0 %1457
    %v1461 = vsel %vm385, %v1380, 0
    %1463 = vmatprep.subr.mxu0 0.0
    %1464 = vmatpush1.msra.mxu0 0.0
    %1465 = vmatprep.subr.mxu0 0.0
    %1466 = vmatpush1.msra.mxu0 0.0
    %1467 = vmatprep.subr.mxu0 0.0
    %1468 = vmatpush1.msra.mxu0 0.0
    %1469 = vmatprep.subr.mxu0 0.0
    %1470 = vmatpush1.msra.mxu0 0.0
    %1471 = vmatprep.subr.mxu0 0.0
    %1472 = vmatpush1.msra.mxu0 0.0
    %1473 = vmatprep.subr.mxu0 0.0
    %1474 = vmatpush1.msra.mxu0 0.0
    %1475 = vmatprep.subr.mxu0 0.0
    %1476 = vmatpush1.msra.mxu0 0.0
    %1477 = vmatprep.subr.mxu0 0.0
    %1478 = vmatpush1.msra.mxu0 0.0
    %1479 = vmatprep.subr.mxu0 0.0
    %1480 = vmatpush1.msra.mxu0 0.0
    %1481 = vmatprep.subr.mxu0 0.0
    %1482 = vmatpush1.msra.mxu0 0.0
    %1483 = vmatprep.subr.mxu0 0.0
    %1484 = vmatpush1.msra.mxu0 0.0
    %1485 = vmatprep.subr.mxu0 0.0
    %1486 = vmatpush1.msra.mxu0 0.0
    %1487 = vmatprep.subr.mxu0 0.0
    %1488 = vmatpush1.msra.mxu0 0.0
    %1489 = vmatprep.subr.mxu0 0.0
    %1490 = vmatpush1.msra.mxu0 0.0
    %1491 = vmatprep.subr.mxu0 0.0
    %1492 = vmatpush1.msra.mxu0 0.0
    %1493 = vmatprep.subr.mxu0 0.0
    %1494 = vmatpush1.msra.mxu0 %v1458
    %1495 = vmatprep.subr.mxu0 0.0
    %1496 = vmatpush2.msra.mxu0 0.0
    %1497 = vmatprep.subr.mxu0 0.0
    %1498 = vmatpush2.msra.mxu0 0.0
    %1499 = vmatprep.subr.mxu0 0.0
    %1500 = vmatpush2.msra.mxu0 0.0
    %1501 = vmatprep.subr.mxu0 0.0
    %1502 = vmatpush2.msra.mxu0 0.0
    %1503 = vmatprep.subr.mxu0 0.0
    %1504 = vmatpush2.msra.mxu0 0.0
    %1505 = vmatprep.subr.mxu0 0.0
    %1506 = vmatpush2.msra.mxu0 0.0
    %1507 = vmatprep.subr.mxu0 0.0
    %1508 = vmatpush2.msra.mxu0 0.0
    %1509 = vmatprep.subr.mxu0 0.0
    %1510 = vmatpush2.msra.mxu0 0.0
    %1511 = vmatprep.subr.mxu0 0.0
    %1512 = vmatpush2.msra.mxu0 0.0
    %1513 = vmatprep.subr.mxu0 0.0
    %1514 = vmatpush2.msra.mxu0 0.0
    %1515 = vmatprep.subr.mxu0 0.0
    %1516 = vmatpush2.msra.mxu0 0.0
    %1517 = vmatprep.subr.mxu0 0.0
    %1518 = vmatpush2.msra.mxu0 0.0
    %1519 = vmatprep.subr.mxu0 0.0
    %1520 = vmatpush2.msra.mxu0 0.0
    %1521 = vmatprep.subr.mxu0 0.0
    %1522 = vmatpush2.msra.mxu0 0.0
    %1523 = vmatprep.subr.mxu0 0.0
    %1524 = vmatpush2.msra.mxu0 0.0
    %1525 = vmatprep.subr.mxu0 0.0
    %1526 = vmatpush2.msra.mxu0 0.0
    %1527 = vmatprep.mubr.f32.mxu0 0.0
    %1528 = vmatmul.mubr.f32.gmra.mxu0 %v1461
    %v1529 = vpop.f32.mrf.mxu0
    %v1530 = vadd.f32 0.0, %v1529
    %v1531 = vpop.f32.mrf.mxu0
    %1532 = vdwg.mxu0
    %s1533 = scalar_lea.vmem %s9, 16
    %v1534 = vld [vmem:[%s1533] sm:$0xff]
    %v1536 = vsel %vm385, %v1454, 0
    %v1539 = vsel %vm385, %v1530, 0
    %1541 = vmatprep.subr.mxu0 0.0
    %1542 = vmatpush1.msra.mxu0 0.0
    %1543 = vmatprep.subr.mxu0 0.0
    %1544 = vmatpush1.msra.mxu0 0.0
    %1545 = vmatprep.subr.mxu0 0.0
    %1546 = vmatpush1.msra.mxu0 0.0
    %1547 = vmatprep.subr.mxu0 0.0
    %1548 = vmatpush1.msra.mxu0 0.0
    %1549 = vmatprep.subr.mxu0 0.0
    %1550 = vmatpush1.msra.mxu0 0.0
    %1551 = vmatprep.subr.mxu0 0.0
    %1552 = vmatpush1.msra.mxu0 0.0
    %1553 = vmatprep.subr.mxu0 0.0
    %1554 = vmatpush1.msra.mxu0 0.0
    %1555 = vmatprep.subr.mxu0 0.0
    %1556 = vmatpush1.msra.mxu0 0.0
    %1557 = vmatprep.subr.mxu0 0.0
    %1558 = vmatpush1.msra.mxu0 0.0
    %1559 = vmatprep.subr.mxu0 0.0
    %1560 = vmatpush1.msra.mxu0 0.0
    %1561 = vmatprep.subr.mxu0 0.0
    %1562 = vmatpush1.msra.mxu0 0.0
    %1563 = vmatprep.subr.mxu0 0.0
    %1564 = vmatpush1.msra.mxu0 0.0
    %1565 = vmatprep.subr.mxu0 0.0
    %1566 = vmatpush1.msra.mxu0 0.0
    %1567 = vmatprep.subr.mxu0 0.0
    %1568 = vmatpush1.msra.mxu0 0.0
    %1569 = vmatprep.subr.mxu0 0.0
    %1570 = vmatpush1.msra.mxu0 0.0
    %1571 = vmatprep.subr.mxu0 0.0
    %1572 = vmatpush1.msra.mxu0 %v1534
    %1573 = vmatprep.subr.mxu0 0.0
    %1574 = vmatpush2.msra.mxu0 0.0
    %1575 = vmatprep.subr.mxu0 0.0
    %1576 = vmatpush2.msra.mxu0 0.0
    %1577 = vmatprep.subr.mxu0 0.0
    %1578 = vmatpush2.msra.mxu0 0.0
    %1579 = vmatprep.subr.mxu0 0.0
    %1580 = vmatpush2.msra.mxu0 0.0
    %1581 = vmatprep.subr.mxu0 0.0
    %1582 = vmatpush2.msra.mxu0 0.0
    %1583 = vmatprep.subr.mxu0 0.0
    %1584 = vmatpush2.msra.mxu0 0.0
    %1585 = vmatprep.subr.mxu0 0.0
    %1586 = vmatpush2.msra.mxu0 0.0
    %1587 = vmatprep.subr.mxu0 0.0
    %1588 = vmatpush2.msra.mxu0 0.0
    %1589 = vmatprep.subr.mxu0 0.0
    %1590 = vmatpush2.msra.mxu0 0.0
    %1591 = vmatprep.subr.mxu0 0.0
    %1592 = vmatpush2.msra.mxu0 0.0
    %1593 = vmatprep.subr.mxu0 0.0
    %1594 = vmatpush2.msra.mxu0 0.0
    %1595 = vmatprep.subr.mxu0 0.0
    %1596 = vmatpush2.msra.mxu0 0.0
    %1597 = vmatprep.subr.mxu0 0.0
    %1598 = vmatpush2.msra.mxu0 0.0
    %1599 = vmatprep.subr.mxu0 0.0
    %1600 = vmatpush2.msra.mxu0 0.0
    %1601 = vmatprep.subr.mxu0 0.0
    %1602 = vmatpush2.msra.mxu0 0.0
    %1603 = vmatprep.subr.mxu0 0.0
    %1604 = vmatpush2.msra.mxu0 0.0
    %1605 = vmatprep.mubr.f32.mxu0 0.0
    %1606 = vmatmul.mubr.f32.gmra.mxu0 %v1536
    %v1607 = vpop.f32.mrf.mxu0
    %v1608 = vadd.f32 0.0, %v1607
    %v1609 = vpop.f32.mrf.mxu0
    %1610 = vmatprep.mubr.f32.mxu0 0.0
    %1611 = vmatmul.mubr.f32.gmra.mxu0 %v1539
    %v1612 = vpop.f32.mrf.mxu0
    %v1613 = vadd.f32 0.0, %v1612
    %v1614 = vpop.f32.mrf.mxu0
    %1615 = vdwg.mxu0
    %v1616 = vadd.f32 %v1195, %v1608
    %v1617 = vadd.f32 %v1200, %v1613
    %1618 = vrot.lane.b32.xlu0 %v383, 104
    %v1619 = vpop.permute.xlu0 %1618
    %1620 = vrot.lane.b32.xlu0 %v289, 104
    %v1621 = vpop.permute.xlu0 %1620
    %v1622 = vsel %vm385, %v1619, 0
    %v1624 = vsel %vm385, %v1621, 0
    %1626 = vmatprep.subr.mxu0 0.0
    %1627 = vmatpush1.xpose.msra.mxu0 0.0
    %1628 = vmatprep.subr.mxu0 0.0
    %1629 = vmatpush1.xpose.msra.mxu0 0.0
    %1630 = vmatprep.subr.mxu0 0.0
    %1631 = vmatpush1.xpose.msra.mxu0 0.0
    %1632 = vmatprep.subr.mxu0 0.0
    %1633 = vmatpush1.xpose.msra.mxu0 0.0
    %1634 = vmatprep.subr.mxu0 0.0
    %1635 = vmatpush1.xpose.msra.mxu0 0.0
    %1636 = vmatprep.subr.mxu0 0.0
    %1637 = vmatpush1.xpose.msra.mxu0 0.0
    %1638 = vmatprep.subr.mxu0 0.0
    %1639 = vmatpush1.xpose.msra.mxu0 0.0
    %1640 = vmatprep.subr.mxu0 0.0
    %1641 = vmatpush1.xpose.msra.mxu0 0.0
    %1642 = vmatprep.subr.mxu0 0.0
    %1643 = vmatpush1.xpose.msra.mxu0 0.0
    %1644 = vmatprep.subr.mxu0 0.0
    %1645 = vmatpush1.xpose.msra.mxu0 0.0
    %1646 = vmatprep.subr.mxu0 0.0
    %1647 = vmatpush1.xpose.msra.mxu0 0.0
    %1648 = vmatprep.subr.mxu0 0.0
    %1649 = vmatpush1.xpose.msra.mxu0 0.0
    %1650 = vmatprep.subr.mxu0 0.0
    %1651 = vmatpush1.xpose.msra.mxu0 0.0
    %1652 = vmatprep.subr.mxu0 0.0
    %1653 = vmatpush1.xpose.msra.mxu0 0.0
    %1654 = vmatprep.subr.mxu0 0.0
    %1655 = vmatpush1.xpose.msra.mxu0 0.0
    %1656 = vmatprep.subr.mxu0 0.0
    %1657 = vmatpush1.xpose.msra.mxu0 %v1624
    %1658 = vmatprep.subr.mxu0 0.0
    %1659 = vmatpush2.xpose.msra.mxu0 0.0
    %1660 = vmatprep.subr.mxu0 0.0
    %1661 = vmatpush2.xpose.msra.mxu0 0.0
    %1662 = vmatprep.subr.mxu0 0.0
    %1663 = vmatpush2.xpose.msra.mxu0 0.0
    %1664 = vmatprep.subr.mxu0 0.0
    %1665 = vmatpush2.xpose.msra.mxu0 0.0
    %1666 = vmatprep.subr.mxu0 0.0
    %1667 = vmatpush2.xpose.msra.mxu0 0.0
    %1668 = vmatprep.subr.mxu0 0.0
    %1669 = vmatpush2.xpose.msra.mxu0 0.0
    %1670 = vmatprep.subr.mxu0 0.0
    %1671 = vmatpush2.xpose.msra.mxu0 0.0
    %1672 = vmatprep.subr.mxu0 0.0
    %1673 = vmatpush2.xpose.msra.mxu0 0.0
    %1674 = vmatprep.subr.mxu0 0.0
    %1675 = vmatpush2.xpose.msra.mxu0 0.0
    %1676 = vmatprep.subr.mxu0 0.0
    %1677 = vmatpush2.xpose.msra.mxu0 0.0
    %1678 = vmatprep.subr.mxu0 0.0
    %1679 = vmatpush2.xpose.msra.mxu0 0.0
    %1680 = vmatprep.subr.mxu0 0.0
    %1681 = vmatpush2.xpose.msra.mxu0 0.0
    %1682 = vmatprep.subr.mxu0 0.0
    %1683 = vmatpush2.xpose.msra.mxu0 0.0
    %1684 = vmatprep.subr.mxu0 0.0
    %1685 = vmatpush2.xpose.msra.mxu0 0.0
    %1686 = vmatprep.subr.mxu0 0.0
    %1687 = vmatpush2.xpose.msra.mxu0 0.0
    %1688 = vmatprep.subr.mxu0 0.0
    %1689 = vmatpush2.xpose.msra.mxu0 0.0
    %1690 = vmatprep.mubr.f32.mxu0 0.0
    %1691 = vmatmul.mubr.f32.gmra.mxu0 %v1622
    %v1692 = vpop.f32.mrf.mxu0
    %v1693 = vadd.f32 0.0, %v1692
    %v1694 = vpop.f32.mrf.mxu0
    %1695 = vdwg.mxu0
    %1696 = vrot.lane.b32.xlu0 %v384, 104
    %v1697 = vpop.permute.xlu0 %1696
    %1698 = vrot.lane.b32.xlu0 %v294, 104
    %v1699 = vpop.permute.xlu0 %1698
    %v1700 = vsel %vm385, %v1697, 0
    %v1702 = vsel %vm385, %v1699, 0
    %1704 = vmatprep.subr.mxu0 0.0
    %1705 = vmatpush1.xpose.msra.mxu0 0.0
    %1706 = vmatprep.subr.mxu0 0.0
    %1707 = vmatpush1.xpose.msra.mxu0 0.0
    %1708 = vmatprep.subr.mxu0 0.0
    %1709 = vmatpush1.xpose.msra.mxu0 0.0
    %1710 = vmatprep.subr.mxu0 0.0
    %1711 = vmatpush1.xpose.msra.mxu0 0.0
    %1712 = vmatprep.subr.mxu0 0.0
    %1713 = vmatpush1.xpose.msra.mxu0 0.0
    %1714 = vmatprep.subr.mxu0 0.0
    %1715 = vmatpush1.xpose.msra.mxu0 0.0
    %1716 = vmatprep.subr.mxu0 0.0
    %1717 = vmatpush1.xpose.msra.mxu0 0.0
    %1718 = vmatprep.subr.mxu0 0.0
    %1719 = vmatpush1.xpose.msra.mxu0 0.0
    %1720 = vmatprep.subr.mxu0 0.0
    %1721 = vmatpush1.xpose.msra.mxu0 0.0
    %1722 = vmatprep.subr.mxu0 0.0
    %1723 = vmatpush1.xpose.msra.mxu0 0.0
    %1724 = vmatprep.subr.mxu0 0.0
    %1725 = vmatpush1.xpose.msra.mxu0 0.0
    %1726 = vmatprep.subr.mxu0 0.0
    %1727 = vmatpush1.xpose.msra.mxu0 0.0
    %1728 = vmatprep.subr.mxu0 0.0
    %1729 = vmatpush1.xpose.msra.mxu0 0.0
    %1730 = vmatprep.subr.mxu0 0.0
    %1731 = vmatpush1.xpose.msra.mxu0 0.0
    %1732 = vmatprep.subr.mxu0 0.0
    %1733 = vmatpush1.xpose.msra.mxu0 0.0
    %1734 = vmatprep.subr.mxu0 0.0
    %1735 = vmatpush1.xpose.msra.mxu0 %v1702
    %1736 = vmatprep.subr.mxu0 0.0
    %1737 = vmatpush2.xpose.msra.mxu0 0.0
    %1738 = vmatprep.subr.mxu0 0.0
    %1739 = vmatpush2.xpose.msra.mxu0 0.0
    %1740 = vmatprep.subr.mxu0 0.0
    %1741 = vmatpush2.xpose.msra.mxu0 0.0
    %1742 = vmatprep.subr.mxu0 0.0
    %1743 = vmatpush2.xpose.msra.mxu0 0.0
    %1744 = vmatprep.subr.mxu0 0.0
    %1745 = vmatpush2.xpose.msra.mxu0 0.0
    %1746 = vmatprep.subr.mxu0 0.0
    %1747 = vmatpush2.xpose.msra.mxu0 0.0
    %1748 = vmatprep.subr.mxu0 0.0
    %1749 = vmatpush2.xpose.msra.mxu0 0.0
    %1750 = vmatprep.subr.mxu0 0.0
    %1751 = vmatpush2.xpose.msra.mxu0 0.0
    %1752 = vmatprep.subr.mxu0 0.0
    %1753 = vmatpush2.xpose.msra.mxu0 0.0
    %1754 = vmatprep.subr.mxu0 0.0
    %1755 = vmatpush2.xpose.msra.mxu0 0.0
    %1756 = vmatprep.subr.mxu0 0.0
    %1757 = vmatpush2.xpose.msra.mxu0 0.0
    %1758 = vmatprep.subr.mxu0 0.0
    %1759 = vmatpush2.xpose.msra.mxu0 0.0
    %1760 = vmatprep.subr.mxu0 0.0
    %1761 = vmatpush2.xpose.msra.mxu0 0.0
    %1762 = vmatprep.subr.mxu0 0.0
    %1763 = vmatpush2.xpose.msra.mxu0 0.0
    %1764 = vmatprep.subr.mxu0 0.0
    %1765 = vmatpush2.xpose.msra.mxu0 0.0
    %1766 = vmatprep.subr.mxu0 0.0
    %1767 = vmatpush2.xpose.msra.mxu0 0.0
    %1768 = vmatprep.mubr.f32.mxu0 0.0
    %1769 = vmatmul.mubr.f32.gmra.mxu0 %v1700
    %v1770 = vpop.f32.mrf.mxu0
    %v1771 = vadd.f32 0.0, %v1770
    %v1772 = vpop.f32.mrf.mxu0
    %1773 = vdwg.mxu0
    %v1774 = vsel %vm385, %v1693, -inf
    %1775 = vmax.xlane.f32.xlu0 %v1774
    %v1776 = vpop.xlane.xlu0 %1775
    %v1777 = vsel %vm385, %v1771, -inf
    %1778 = vmax.xlane.f32.xlu0 %v1777
    %v1779 = vpop.xlane.xlu0 %1778
    %v1780 = vsub.f32 %v1693, %v1776
    %v1781 = vsub.f32 %v1771, %v1779
    %v1782 = vmul.f32 %v1780, 1.442695
    %v1783 = vpow.pop %v1782
    %v1784 = vmul.f32 %v1781, 1.442695
    %v1785 = vpow.pop %v1784
    %v1786 = vsel %vm385, %v1783, 0.0
    %1787 = vadd.xlane.f32.xlu0 %v1786
    %v1788 = vpop.xlane.xlu0 %1787
    %v1789 = vsel %vm385, %v1785, 0.0
    %1790 = vadd.xlane.f32.xlu0 %v1789
    %v1791 = vpop.xlane.xlu0 %1790
    %v1792 = vrcp.pop %v1788
    %v1793 = vrcp.pop %v1791
    %v1794 = vmul.f32 %v1783, %v1792
    %v1795 = vmul.f32 %v1785, %v1793
    %1796 = vrot.lane.b32.xlu0 %v375, 104
    %v1797 = vpop.permute.xlu0 %1796
    %v1800 = vsel %vm385, %v1794, 0
    %1802 = vmatprep.subr.mxu0 0.0
    %1803 = vmatpush1.msra.mxu0 0.0
    %1804 = vmatprep.subr.mxu0 0.0
    %1805 = vmatpush1.msra.mxu0 0.0
    %1806 = vmatprep.subr.mxu0 0.0
    %1807 = vmatpush1.msra.mxu0 0.0
    %1808 = vmatprep.subr.mxu0 0.0
    %1809 = vmatpush1.msra.mxu0 0.0
    %1810 = vmatprep.subr.mxu0 0.0
    %1811 = vmatpush1.msra.mxu0 0.0
    %1812 = vmatprep.subr.mxu0 0.0
    %1813 = vmatpush1.msra.mxu0 0.0
    %1814 = vmatprep.subr.mxu0 0.0
    %1815 = vmatpush1.msra.mxu0 0.0
    %1816 = vmatprep.subr.mxu0 0.0
    %1817 = vmatpush1.msra.mxu0 0.0
    %1818 = vmatprep.subr.mxu0 0.0
    %1819 = vmatpush1.msra.mxu0 0.0
    %1820 = vmatprep.subr.mxu0 0.0
    %1821 = vmatpush1.msra.mxu0 0.0
    %1822 = vmatprep.subr.mxu0 0.0
    %1823 = vmatpush1.msra.mxu0 0.0
    %1824 = vmatprep.subr.mxu0 0.0
    %1825 = vmatpush1.msra.mxu0 0.0
    %1826 = vmatprep.subr.mxu0 0.0
    %1827 = vmatpush1.msra.mxu0 0.0
    %1828 = vmatprep.subr.mxu0 0.0
    %1829 = vmatpush1.msra.mxu0 0.0
    %1830 = vmatprep.subr.mxu0 0.0
    %1831 = vmatpush1.msra.mxu0 0.0
    %1832 = vmatprep.subr.mxu0 0.0
    %1833 = vmatpush1.msra.mxu0 %v1797
    %1834 = vmatprep.subr.mxu0 0.0
    %1835 = vmatpush2.msra.mxu0 0.0
    %1836 = vmatprep.subr.mxu0 0.0
    %1837 = vmatpush2.msra.mxu0 0.0
    %1838 = vmatprep.subr.mxu0 0.0
    %1839 = vmatpush2.msra.mxu0 0.0
    %1840 = vmatprep.subr.mxu0 0.0
    %1841 = vmatpush2.msra.mxu0 0.0
    %1842 = vmatprep.subr.mxu0 0.0
    %1843 = vmatpush2.msra.mxu0 0.0
    %1844 = vmatprep.subr.mxu0 0.0
    %1845 = vmatpush2.msra.mxu0 0.0
    %1846 = vmatprep.subr.mxu0 0.0
    %1847 = vmatpush2.msra.mxu0 0.0
    %1848 = vmatprep.subr.mxu0 0.0
    %1849 = vmatpush2.msra.mxu0 0.0
    %1850 = vmatprep.subr.mxu0 0.0
    %1851 = vmatpush2.msra.mxu0 0.0
    %1852 = vmatprep.subr.mxu0 0.0
    %1853 = vmatpush2.msra.mxu0 0.0
    %1854 = vmatprep.subr.mxu0 0.0
    %1855 = vmatpush2.msra.mxu0 0.0
    %1856 = vmatprep.subr.mxu0 0.0
    %1857 = vmatpush2.msra.mxu0 0.0
    %1858 = vmatprep.subr.mxu0 0.0
    %1859 = vmatpush2.msra.mxu0 0.0
    %1860 = vmatprep.subr.mxu0 0.0
    %1861 = vmatpush2.msra.mxu0 0.0
    %1862 = vmatprep.subr.mxu0 0.0
    %1863 = vmatpush2.msra.mxu0 0.0
    %1864 = vmatprep.subr.mxu0 0.0
    %1865 = vmatpush2.msra.mxu0 0.0
    %1866 = vmatprep.mubr.f32.mxu0 0.0
    %1867 = vmatmul.mubr.f32.gmra.mxu0 %v1800
    %v1868 = vpop.f32.mrf.mxu0
    %v1869 = vadd.f32 0.0, %v1868
    %v1870 = vpop.f32.mrf.mxu0
    %1871 = vdwg.mxu0
    %1872 = vrot.lane.b32.xlu0 %v380, 104
    %v1873 = vpop.permute.xlu0 %1872
    %v1876 = vsel %vm385, %v1795, 0
    %1878 = vmatprep.subr.mxu0 0.0
    %1879 = vmatpush1.msra.mxu0 0.0
    %1880 = vmatprep.subr.mxu0 0.0
    %1881 = vmatpush1.msra.mxu0 0.0
    %1882 = vmatprep.subr.mxu0 0.0
    %1883 = vmatpush1.msra.mxu0 0.0
    %1884 = vmatprep.subr.mxu0 0.0
    %1885 = vmatpush1.msra.mxu0 0.0
    %1886 = vmatprep.subr.mxu0 0.0
    %1887 = vmatpush1.msra.mxu0 0.0
    %1888 = vmatprep.subr.mxu0 0.0
    %1889 = vmatpush1.msra.mxu0 0.0
    %1890 = vmatprep.subr.mxu0 0.0
    %1891 = vmatpush1.msra.mxu0 0.0
    %1892 = vmatprep.subr.mxu0 0.0
    %1893 = vmatpush1.msra.mxu0 0.0
    %1894 = vmatprep.subr.mxu0 0.0
    %1895 = vmatpush1.msra.mxu0 0.0
    %1896 = vmatprep.subr.mxu0 0.0
    %1897 = vmatpush1.msra.mxu0 0.0
    %1898 = vmatprep.subr.mxu0 0.0
    %1899 = vmatpush1.msra.mxu0 0.0
    %1900 = vmatprep.subr.mxu0 0.0
    %1901 = vmatpush1.msra.mxu0 0.0
    %1902 = vmatprep.subr.mxu0 0.0
    %1903 = vmatpush1.msra.mxu0 0.0
    %1904 = vmatprep.subr.mxu0 0.0
    %1905 = vmatpush1.msra.mxu0 0.0
    %1906 = vmatprep.subr.mxu0 0.0
    %1907 = vmatpush1.msra.mxu0 0.0
    %1908 = vmatprep.subr.mxu0 0.0
    %1909 = vmatpush1.msra.mxu0 %v1873
    %1910 = vmatprep.subr.mxu0 0.0
    %1911 = vmatpush2.msra.mxu0 0.0
    %1912 = vmatprep.subr.mxu0 0.0
    %1913 = vmatpush2.msra.mxu0 0.0
    %1914 = vmatprep.subr.mxu0 0.0
    %1915 = vmatpush2.msra.mxu0 0.0
    %1916 = vmatprep.subr.mxu0 0.0
    %1917 = vmatpush2.msra.mxu0 0.0
    %1918 = vmatprep.subr.mxu0 0.0
    %1919 = vmatpush2.msra.mxu0 0.0
    %1920 = vmatprep.subr.mxu0 0.0
    %1921 = vmatpush2.msra.mxu0 0.0
    %1922 = vmatprep.subr.mxu0 0.0
    %1923 = vmatpush2.msra.mxu0 0.0
    %1924 = vmatprep.subr.mxu0 0.0
    %1925 = vmatpush2.msra.mxu0 0.0
    %1926 = vmatprep.subr.mxu0 0.0
    %1927 = vmatpush2.msra.mxu0 0.0
    %1928 = vmatprep.subr.mxu0 0.0
    %1929 = vmatpush2.msra.mxu0 0.0
    %1930 = vmatprep.subr.mxu0 0.0
    %1931 = vmatpush2.msra.mxu0 0.0
    %1932 = vmatprep.subr.mxu0 0.0
    %1933 = vmatpush2.msra.mxu0 0.0
    %1934 = vmatprep.subr.mxu0 0.0
    %1935 = vmatpush2.msra.mxu0 0.0
    %1936 = vmatprep.subr.mxu0 0.0
    %1937 = vmatpush2.msra.mxu0 0.0
    %1938 = vmatprep.subr.mxu0 0.0
    %1939 = vmatpush2.msra.mxu0 0.0
    %1940 = vmatprep.subr.mxu0 0.0
    %1941 = vmatpush2.msra.mxu0 0.0
    %1942 = vmatprep.mubr.f32.mxu0 0.0
    %1943 = vmatmul.mubr.f32.gmra.mxu0 %v1876
    %v1944 = vpop.f32.mrf.mxu0
    %v1945 = vadd.f32 0.0, %v1944
    %v1946 = vpop.f32.mrf.mxu0
    %1947 = vdwg.mxu0
    %s1948 = scalar_lea.vmem %s9, 24
    %v1949 = vld [vmem:[%s1948] sm:$0xff]
    %v1951 = vsel %vm385, %v1869, 0
    %v1954 = vsel %vm385, %v1945, 0
    %1956 = vmatprep.subr.mxu0 0.0
    %1957 = vmatpush1.msra.mxu0 0.0
    %1958 = vmatprep.subr.mxu0 0.0
    %1959 = vmatpush1.msra.mxu0 0.0
    %1960 = vmatprep.subr.mxu0 0.0
    %1961 = vmatpush1.msra.mxu0 0.0
    %1962 = vmatprep.subr.mxu0 0.0
    %1963 = vmatpush1.msra.mxu0 0.0
    %1964 = vmatprep.subr.mxu0 0.0
    %1965 = vmatpush1.msra.mxu0 0.0
    %1966 = vmatprep.subr.mxu0 0.0
    %1967 = vmatpush1.msra.mxu0 0.0
    %1968 = vmatprep.subr.mxu0 0.0
    %1969 = vmatpush1.msra.mxu0 0.0
    %1970 = vmatprep.subr.mxu0 0.0
    %1971 = vmatpush1.msra.mxu0 0.0
    %1972 = vmatprep.subr.mxu0 0.0
    %1973 = vmatpush1.msra.mxu0 0.0
    %1974 = vmatprep.subr.mxu0 0.0
    %1975 = vmatpush1.msra.mxu0 0.0
    %1976 = vmatprep.subr.mxu0 0.0
    %1977 = vmatpush1.msra.mxu0 0.0
    %1978 = vmatprep.subr.mxu0 0.0
    %1979 = vmatpush1.msra.mxu0 0.0
    %1980 = vmatprep.subr.mxu0 0.0
    %1981 = vmatpush1.msra.mxu0 0.0
    %1982 = vmatprep.subr.mxu0 0.0
    %1983 = vmatpush1.msra.mxu0 0.0
    %1984 = vmatprep.subr.mxu0 0.0
    %1985 = vmatpush1.msra.mxu0 0.0
    %1986 = vmatprep.subr.mxu0 0.0
    %1987 = vmatpush1.msra.mxu0 %v1949
    %1988 = vmatprep.subr.mxu0 0.0
    %1989 = vmatpush2.msra.mxu0 0.0
    %1990 = vmatprep.subr.mxu0 0.0
    %1991 = vmatpush2.msra.mxu0 0.0
    %1992 = vmatprep.subr.mxu0 0.0
    %1993 = vmatpush2.msra.mxu0 0.0
    %1994 = vmatprep.subr.mxu0 0.0
    %1995 = vmatpush2.msra.mxu0 0.0
    %1996 = vmatprep.subr.mxu0 0.0
    %1997 = vmatpush2.msra.mxu0 0.0
    %1998 = vmatprep.subr.mxu0 0.0
    %1999 = vmatpush2.msra.mxu0 0.0
    %2000 = vmatprep.subr.mxu0 0.0
    %2001 = vmatpush2.msra.mxu0 0.0
    %2002 = vmatprep.subr.mxu0 0.0
    %2003 = vmatpush2.msra.mxu0 0.0
    %2004 = vmatprep.subr.mxu0 0.0
    %2005 = vmatpush2.msra.mxu0 0.0
    %2006 = vmatprep.subr.mxu0 0.0
    %2007 = vmatpush2.msra.mxu0 0.0
    %2008 = vmatprep.subr.mxu0 0.0
    %2009 = vmatpush2.msra.mxu0 0.0
    %2010 = vmatprep.subr.mxu0 0.0
    %2011 = vmatpush2.msra.mxu0 0.0
    %2012 = vmatprep.subr.mxu0 0.0
    %2013 = vmatpush2.msra.mxu0 0.0
    %2014 = vmatprep.subr.mxu0 0.0
    %2015 = vmatpush2.msra.mxu0 0.0
    %2016 = vmatprep.subr.mxu0 0.0
    %2017 = vmatpush2.msra.mxu0 0.0
    %2018 = vmatprep.subr.mxu0 0.0
    %2019 = vmatpush2.msra.mxu0 0.0
    %2020 = vmatprep.mubr.f32.mxu0 0.0
    %2021 = vmatmul.mubr.f32.gmra.mxu0 %v1951
    %v2022 = vpop.f32.mrf.mxu0
    %v2023 = vadd.f32 0.0, %v2022
    %v2024 = vpop.f32.mrf.mxu0
    %2025 = vmatprep.mubr.f32.mxu0 0.0
    %2026 = vmatmul.mubr.f32.gmra.mxu0 %v1954
    %v2027 = vpop.f32.mrf.mxu0
    %v2028 = vadd.f32 0.0, %v2027
    %v2029 = vpop.f32.mrf.mxu0
    %2030 = vdwg.mxu0
    %v2031 = vadd.f32 %v1616, %v2023
    %v2032 = vadd.f32 %v1617, %v2028
    %v2033 = vld [vmem:[%s10] sm:$0x1]
    %v2035 = vlaneseq
    %v2036 = vshrl.u32 %v2035, 7
    %v2037 = vsub.s32 0, %v2036
    %v2038 = vrot.slane %v2033, %v2037
    %v2040 = vadd.f32 %v2031, %v2038
    %v2041 = vadd.f32 %v2032, %v2038
    %v2042 = vadd.f32 %v71, %v2040
    %v2043 = vadd.f32 %v72, %v2041
    %v2044 = vsel %vm73, %v2042, 0.0
    %2045 = vadd.xlane.f32.xlu0 %v2044
    %v2046 = vpop.xlane.xlu0 %2045
    %v2047 = vsel %vm73, %v2043, 0.0
    %2048 = vadd.xlane.f32.xlu0 %v2047
    %v2049 = vpop.xlane.xlu0 %2048
    %v2050 = vmul.f32 %v2046, %v80
    %v2051 = vmul.f32 %v2049, %v80
    %v2052 = vsub.f32 %v2042, %v2050
    %v2053 = vsub.f32 %v2043, %v2051
    %v2054 = vmul.f32 %v2052, %v2052
    %v2055 = vmul.f32 %v2053, %v2053
    %v2056 = vsel %vm73, %v2054, 0.0
    %2057 = vadd.xlane.f32.xlu0 %v2056
    %v2058 = vpop.xlane.xlu0 %2057
    %v2059 = vsel %vm73, %v2055, 0.0
    %2060 = vadd.xlane.f32.xlu0 %v2059
    %v2061 = vpop.xlane.xlu0 %2060
    %v2062 = vmul.f32 %v2058, %v80
    %v2063 = vmul.f32 %v2061, %v80
    %v2064 = vadd.f32 %v2062, 1e-05
    %v2065 = vadd.f32 %v2063, 1e-05
    %v2066 = vrsqrt.pop %v2064
    %v2067 = vrsqrt.pop %v2065
    %v2068 = vmul.f32 %v2052, %v2066
    %v2069 = vmul.f32 %v2053, %v2067
    %v2070 = vld [vmem:[%s11] sm:$0x1]
    %v2072 = vlaneseq
    %v2073 = vshrl.u32 %v2072, 7
    %v2074 = vsub.s32 0, %v2073
    %v2075 = vrot.slane %v2070, %v2074
    %v2077 = vmul.f32 %v2068, %v2075
    %v2078 = vmul.f32 %v2069, %v2075
    %v2079 = vld [vmem:[%s12] sm:$0x1]
    %v2081 = vlaneseq
    %v2082 = vshrl.u32 %v2081, 7
    %v2083 = vsub.s32 0, %v2082
    %v2084 = vrot.slane %v2079, %v2083
    %v2086 = vadd.f32 %v2077, %v2084
    %v2087 = vadd.f32 %v2078, %v2084
    %v2088 = vld [vmem:[%s13] sm:$0xff]
    %v2089 = vld [vmem:[%s13 + $0x8] sm:$0xff]
    %v2090 = vld [vmem:[%s13 + $0x10] sm:$0xff]
    %v2091 = vld [vmem:[%s13 + $0x18] sm:$0xff]
    %v2092 = vld [vmem:[%s14] sm:$0x1]
    %v2094 = vlaneseq
    %v2095 = vshrl.u32 %v2094, 7
    %v2096 = vsub.s32 0, %v2095
    %v2097 = vrot.slane %v2092, %v2096
    %v2100 = vsel %vm73, %v2086, 0
    %v2103 = vsel %vm73, %v2087, 0
    %2105 = vmatprep.subr.mxu0 0.0
    %2106 = vmatpush1.msra.mxu0 0.0
    %2107 = vmatprep.subr.mxu0 0.0
    %2108 = vmatpush1.msra.mxu0 0.0
    %2109 = vmatprep.subr.mxu0 0.0
    %2110 = vmatpush1.msra.mxu0 0.0
    %2111 = vmatprep.subr.mxu0 0.0
    %2112 = vmatpush1.msra.mxu0 0.0
    %2113 = vmatprep.subr.mxu0 0.0
    %2114 = vmatpush1.msra.mxu0 0.0
    %2115 = vmatprep.subr.mxu0 0.0
    %2116 = vmatpush1.msra.mxu0 0.0
    %2117 = vmatprep.subr.mxu0 0.0
    %2118 = vmatpush1.msra.mxu0 0.0
    %2119 = vmatprep.subr.mxu0 0.0
    %2120 = vmatpush1.msra.mxu0 0.0
    %2121 = vmatprep.subr.mxu0 0.0
    %2122 = vmatpush1.msra.mxu0 0.0
    %2123 = vmatprep.subr.mxu0 0.0
    %2124 = vmatpush1.msra.mxu0 0.0
    %2125 = vmatprep.subr.mxu0 0.0
    %2126 = vmatpush1.msra.mxu0 0.0
    %2127 = vmatprep.subr.mxu0 0.0
    %2128 = vmatpush1.msra.mxu0 0.0
    %2129 = vmatprep.subr.mxu0 0.0
    %2130 = vmatpush1.msra.mxu0 %v2091
    %2131 = vmatprep.subr.mxu0 0.0
    %2132 = vmatpush1.msra.mxu0 %v2090
    %2133 = vmatprep.subr.mxu0 0.0
    %2134 = vmatpush1.msra.mxu0 %v2089
    %2135 = vmatprep.subr.mxu0 0.0
    %2136 = vmatpush1.msra.mxu0 %v2088
    %2137 = vmatprep.subr.mxu0 0.0
    %2138 = vmatpush2.msra.mxu0 0.0
    %2139 = vmatprep.subr.mxu0 0.0
    %2140 = vmatpush2.msra.mxu0 0.0
    %2141 = vmatprep.subr.mxu0 0.0
    %2142 = vmatpush2.msra.mxu0 0.0
    %2143 = vmatprep.subr.mxu0 0.0
    %2144 = vmatpush2.msra.mxu0 0.0
    %2145 = vmatprep.subr.mxu0 0.0
    %2146 = vmatpush2.msra.mxu0 0.0
    %2147 = vmatprep.subr.mxu0 0.0
    %2148 = vmatpush2.msra.mxu0 0.0
    %2149 = vmatprep.subr.mxu0 0.0
    %2150 = vmatpush2.msra.mxu0 0.0
    %2151 = vmatprep.subr.mxu0 0.0
    %2152 = vmatpush2.msra.mxu0 0.0
    %2153 = vmatprep.subr.mxu0 0.0
    %2154 = vmatpush2.msra.mxu0 0.0
    %2155 = vmatprep.subr.mxu0 0.0
    %2156 = vmatpush2.msra.mxu0 0.0
    %2157 = vmatprep.subr.mxu0 0.0
    %2158 = vmatpush2.msra.mxu0 0.0
    %2159 = vmatprep.subr.mxu0 0.0
    %2160 = vmatpush2.msra.mxu0 0.0
    %2161 = vmatprep.subr.mxu0 0.0
    %2162 = vmatpush2.msra.mxu0 0.0
    %2163 = vmatprep.subr.mxu0 0.0
    %2164 = vmatpush2.msra.mxu0 0.0
    %2165 = vmatprep.subr.mxu0 0.0
    %2166 = vmatpush2.msra.mxu0 0.0
    %2167 = vmatprep.subr.mxu0 0.0
    %2168 = vmatpush2.msra.mxu0 0.0
    %2169 = vmatprep.mubr.f32.mxu0 0.0
    %2170 = vmatmul.mubr.f32.gmra.mxu0 %v2100
    %v2171 = vpop.f32.mrf.mxu0
    %v2172 = vadd.f32 %v2097, %v2171
    %v2173 = vpop.f32.mrf.mxu0
    %2174 = vmatprep.mubr.f32.mxu0 0.0
    %2175 = vmatmul.mubr.f32.gmra.mxu0 %v2103
    %v2176 = vpop.f32.mrf.mxu0
    %v2177 = vadd.f32 %v2097, %v2176
    %v2178 = vpop.f32.mrf.mxu0
    %2179 = vdwg.mxu0
    %v2180 = vmul.f32 %v2172, 0.5
    %v2181 = vmul.f32 %v2177, 0.5
    %v2182 = vmul.f32 %v2172, 0.70710677
    %v2183 = vmul.f32 %v2177, 0.70710677
    %v2184 = verf.f32.pop %v2182
    %v2185 = verf.f32.pop %v2183
    %v2186 = vadd.f32 %v2184, 1.0
    %v2187 = vadd.f32 %v2185, 1.0
    %v2188 = vmul.f32 %v2180, %v2186
    %v2189 = vmul.f32 %v2181, %v2187
    %v2190 = vld [vmem:[%s15] sm:$0xff]
    %v2191 = vld [vmem:[%s15 + $0x8] sm:$0xff]
    %v2192 = vld [vmem:[%s15 + $0x10] sm:$0xff]
    %v2193 = vld [vmem:[%s15 + $0x18] sm:$0xff]
    %v2194 = vld [vmem:[%s15 + $0x20] sm:$0xff]
    %v2195 = vld [vmem:[%s15 + $0x28] sm:$0xff]
    %v2196 = vld [vmem:[%s15 + $0x30] sm:$0xff]
    %v2197 = vld [vmem:[%s15 + $0x38] sm:$0xff]
    %v2198 = vld [vmem:[%s15 + $0x40] sm:$0xff]
    %v2199 = vld [vmem:[%s15 + $0x48] sm:$0xff]
    %v2200 = vld [vmem:[%s15 + $0x50] sm:$0xff]
    %v2201 = vld [vmem:[%s15 + $0x58] sm:$0xff]
    %v2202 = vld [vmem:[%s15 + $0x60] sm:$0xff]
    %v2203 = vld [vmem:[%s15 + $0x68] sm:$0xff]
    %v2204 = vld [vmem:[%s15 + $0x70] sm:$0xff]
    %v2205 = vld [vmem:[%s15 + $0x78] sm:$0xff]
    %v2206 = vld [vmem:[%s16] sm:$0x1]
    %v2208 = vlaneseq
    %v2209 = vshrl.u32 %v2208, 7
    %v2210 = vsub.s32 0, %v2209
    %v2211 = vrot.slane %v2206, %v2210
    %2213 = vmatprep.subr.mxu0 0.0
    %2214 = vmatpush1.msra.mxu0 %v2205
    %2215 = vmatprep.subr.mxu0 0.0
    %2216 = vmatpush1.msra.mxu0 %v2204
    %2217 = vmatprep.subr.mxu0 0.0
    %2218 = vmatpush1.msra.mxu0 %v2203
    %2219 = vmatprep.subr.mxu0 0.0
    %2220 = vmatpush1.msra.mxu0 %v2202
    %2221 = vmatprep.subr.mxu0 0.0
    %2222 = vmatpush1.msra.mxu0 %v2201
    %2223 = vmatprep.subr.mxu0 0.0
    %2224 = vmatpush1.msra.mxu0 %v2200
    %2225 = vmatprep.subr.mxu0 0.0
    %2226 = vmatpush1.msra.mxu0 %v2199
    %2227 = vmatprep.subr.mxu0 0.0
    %2228 = vmatpush1.msra.mxu0 %v2198
    %2229 = vmatprep.subr.mxu0 0.0
    %2230 = vmatpush1.msra.mxu0 %v2197
    %2231 = vmatprep.subr.mxu0 0.0
    %2232 = vmatpush1.msra.mxu0 %v2196
    %2233 = vmatprep.subr.mxu0 0.0
    %2234 = vmatpush1.msra.mxu0 %v2195
    %2235 = vmatprep.subr.mxu0 0.0
    %2236 = vmatpush1.msra.mxu0 %v2194
    %2237 = vmatprep.subr.mxu0 0.0
    %2238 = vmatpush1.msra.mxu0 %v2193
    %2239 = vmatprep.subr.mxu0 0.0
    %2240 = vmatpush1.msra.mxu0 %v2192
    %2241 = vmatprep.subr.mxu0 0.0
    %2242 = vmatpush1.msra.mxu0 %v2191
    %2243 = vmatprep.subr.mxu0 0.0
    %2244 = vmatpush1.msra.mxu0 %v2190
    %2245 = vmatprep.subr.mxu0 0.0
    %2246 = vmatpush2.msra.mxu0 0.0
    %2247 = vmatprep.subr.mxu0 0.0
    %2248 = vmatpush2.msra.mxu0 0.0
    %2249 = vmatprep.subr.mxu0 0.0
    %2250 = vmatpush2.msra.mxu0 0.0
    %2251 = vmatprep.subr.mxu0 0.0
    %2252 = vmatpush2.msra.mxu0 0.0
    %2253 = vmatprep.subr.mxu0 0.0
    %2254 = vmatpush2.msra.mxu0 0.0
    %2255 = vmatprep.subr.mxu0 0.0
    %2256 = vmatpush2.msra.mxu0 0.0
    %2257 = vmatprep.subr.mxu0 0.0
    %2258 = vmatpush2.msra.mxu0 0.0
    %2259 = vmatprep.subr.mxu0 0.0
    %2260 = vmatpush2.msra.mxu0 0.0
    %2261 = vmatprep.subr.mxu0 0.0
    %2262 = vmatpush2.msra.mxu0 0.0
    %2263 = vmatprep.subr.mxu0 0.0
    %2264 = vmatpush2.msra.mxu0 0.0
    %2265 = vmatprep.subr.mxu0 0.0
    %2266 = vmatpush2.msra.mxu0 0.0
    %2267 = vmatprep.subr.mxu0 0.0
    %2268 = vmatpush2.msra.mxu0 0.0
    %2269 = vmatprep.subr.mxu0 0.0
    %2270 = vmatpush2.msra.mxu0 0.0
    %2271 = vmatprep.subr.mxu0 0.0
    %2272 = vmatpush2.msra.mxu0 0.0
    %2273 = vmatprep.subr.mxu0 0.0
    %2274 = vmatpush2.msra.mxu0 0.0
    %2275 = vmatprep.subr.mxu0 0.0
    %2276 = vmatpush2.msra.mxu0 0.0
    %2277 = vmatprep.mubr.f32.mxu0 0.0
    %2278 = vmatmul.mubr.f32.gmra.mxu0 %v2188
    %v2279 = vpop.f32.mrf.mxu0
    %v2280 = vadd.f32 %v2211, %v2279
    %v2281 = vpop.f32.mrf.mxu0
    %2282 = vmatprep.mubr.f32.mxu0 0.0
    %2283 = vmatmul.mubr.f32.gmra.mxu0 %v2189
    %v2284 = vpop.f32.mrf.mxu0
    %v2285 = vadd.f32 %v2211, %v2284
    %v2286 = vpop.f32.mrf.mxu0
    %2287 = vdwg.mxu0
    %v2288 = vadd.f32 %v2042, %v2280
    %v2289 = vadd.f32 %v2043, %v2285
    %2290 = vst.msk [vmem:[#allocation5] sm:$0xff] %vm73, %v2288
    %2291 = vst.msk [vmem:[#allocation5 + $0x8] sm:$0xff] %vm73, %v2289
    // Predicated region
    $region74: #{tpu_custom_call.1} parent=1 // pred_check
      _
    $region75: #{tpu_custom_call.1} parent=1 // pred_check_branch
      %2293 = sbr.rel (0) target = $region77
    $region76: #{tpu_custom_call.1} parent=1 // pred_region
      %s2295 = ssub.s32 256, 256
      %2296 = vsyncadd [#allocation4], %s2295
      %s2297 = sshll.u32 [#allocation5], 4
      %s2298 = int_to_ptr.vmem [resolvable:$true] %s2297
      %2303 = dma.vmem_to_hbm [thread:$0]  %s2298, 256, %s17, [#allocation4], 128, 128, 8
    $region77: #{tpu_custom_call.1} parent=1 // pred_fallthru
      _
    // Predicated region
    $region78: #{tpu_custom_call.1} parent=1 // pred_check
      _
    $region79: #{tpu_custom_call.1} parent=1 // pred_check_branch
      %2305 = sbr.rel (0) target = $region81
    $region80: #{tpu_custom_call.1} parent=1 // pred_region
      %2306 = dma.done [#allocation4], 256
    $region81: #{tpu_custom_call.1} parent=1 // pred_fallthru
      _
    %2307 = vsyncpa [#allocation3], 1
    %2308 = vsyncpa [#allocation4], 1

</llo_original>
